<compile_context>
chip_gen: v7x
topology: tpu7x:2x2x1
jax: 0.10.0
libtpu: 0.0.40
codegen_flags: <defaults>
</compile_context>

<pallas_src>
import jax
import jax.numpy as jnp
from jax.experimental import pallas as pl
from jax.experimental.pallas import tpu as pltpu


def _round_up(x, m):
    return (x + m - 1) // m * m


# ----------------------------------------------------------------------------
# Pallas kernel 1: fused Conv2d-as-3-dots + BiLSTM input-gate projection.
# Grid iterates over batch; each step reads one zero-padded (S+2, H) slab and
# writes the forward / backward gate pre-activations (S, 4*hh) for that batch.
# ----------------------------------------------------------------------------
def _conv_gate_proj_kernel(hid_ref, cw_ref, cb_ref, wg_ref, bg_ref,
                           gf_ref, gb_ref):
    S = gf_ref.shape[1]
    G4 = gf_ref.shape[2]

    x = hid_ref[0].astype(jnp.bfloat16)                       # (S+2, H) bf16
    # conv_out[s] = x[s-1]@w0 + x[s]@w1 + x[s+1]@w2 + b   (zero-padded edges)
    conv = jnp.dot(x[0:S], cw_ref[0], preferred_element_type=jnp.float32)
    conv = conv + jnp.dot(x[1:S + 1], cw_ref[1],
                          preferred_element_type=jnp.float32)
    conv = conv + jnp.dot(x[2:S + 2], cw_ref[2],
                          preferred_element_type=jnp.float32)
    conv = conv + cb_ref[...]                                  # (S, Cp) f32

    # fused fwd+bwd input projection: (S, Cp) @ (Cp, 8*hh)
    gates = jnp.dot(conv.astype(jnp.bfloat16), wg_ref[...],
                    preferred_element_type=jnp.float32) + bg_ref[...]
    gf_ref[0] = gates[:, :G4]
    gb_ref[0] = gates[:, G4:]


def conv_gate_proj(hidden, conv_w, conv_b, wih_f, wih_b, bias_f, bias_b, hh):
    """hidden: (B,S,H) f32.  conv_w: (C,1,3,H).  wih_*: (4*hh, C).
    bias_*: (4*hh,) = b_ih + b_hh.  Returns gx_f, gx_b: (B, S, 4*hh) f32."""
    B, S, H = hidden.shape
    C = conv_w.shape[0]
    Cp = _round_up(C, 128)                 # lane-pad conv channels
    G4, G8 = 4 * hh, 8 * hh

    hid_pad = jnp.pad(hidden, ((0, 0), (1, 1), (0, 0)))        # (B, S+2, H)

    cw = jnp.transpose(conv_w[:, 0], (1, 2, 0))                # (3, H, C)
    cw = jnp.pad(cw, ((0, 0), (0, 0), (0, Cp - C))).astype(jnp.bfloat16)
    cb = jnp.pad(conv_b, (0, Cp - C)).reshape(1, Cp).astype(jnp.float32)
    wg = jnp.concatenate([wih_f.T, wih_b.T], axis=1)           # (C, 8*hh)
    wg = jnp.pad(wg, ((0, Cp - C), (0, 0))).astype(jnp.bfloat16)
    bg = jnp.concatenate([bias_f, bias_b]).reshape(1, G8).astype(jnp.float32)

    gx_f, gx_b = pl.pallas_call(
        _conv_gate_proj_kernel,
        out_shape=(jax.ShapeDtypeStruct((B, S, G4), jnp.float32),
                   jax.ShapeDtypeStruct((B, S, G4), jnp.float32)),
        grid_spec=pltpu.PrefetchScalarGridSpec(
            num_scalar_prefetch=0,
            grid=(B,),
            in_specs=[
                pl.BlockSpec((1, S + 2, H), lambda b: (b, 0, 0)),
                pl.BlockSpec((3, H, Cp), lambda b: (0, 0, 0)),
                pl.BlockSpec((1, Cp), lambda b: (0, 0)),
                pl.BlockSpec((Cp, G8), lambda b: (0, 0)),
                pl.BlockSpec((1, G8), lambda b: (0, 0)),
            ],
            out_specs=[
                pl.BlockSpec((1, S, G4), lambda b: (b, 0, 0)),
                pl.BlockSpec((1, S, G4), lambda b: (b, 0, 0)),
            ],
        ),
        compiler_params=pltpu.CompilerParams(
            dimension_semantics=("parallel",),
            vmem_limit_bytes=32 * 1024 * 1024),
    )(hid_pad, cw, cb, wg, bg)
    return gx_f, gx_b


# ----------------------------------------------------------------------------
# Pallas kernel 2: bidirectional LSTM recurrence, chunked over time.
# Each grid step processes T timesteps (forward: chunk c ascending; backward:
# chunk nc-1-c descending).  h/c persist in VMEM scratch across chunks; the
# in-chunk loop is a statically unrolled Python loop (T is static).
# ----------------------------------------------------------------------------
def _bilstm_kernel(gxf_ref, gxb_ref, whf_ref, whb_ref, of_ref, ob_ref,
                   hf, cf, hb, cb):
    T = of_ref.shape[1]
    hh = hf.shape[-1]

    @pl.when(pl.program_id(0) == 0)
    def _():
        hf[...] = jnp.zeros_like(hf)
        cf[...] = jnp.zeros_like(cf)
        hb[...] = jnp.zeros_like(hb)
        cb[...] = jnp.zeros_like(cb)

    whf = whf_ref[...]                                  # (hh, 4*hh) bf16
    whb = whb_ref[...]

    def cell(gx, h, c_state, wh):
        gates = gx + jnp.dot(h.astype(jnp.bfloat16), wh,
                             preferred_element_type=jnp.float32)
        i = jax.nn.sigmoid(gates[:, 0 * hh:1 * hh])
        f = jax.nn.sigmoid(gates[:, 1 * hh:2 * hh])
        g = jnp.tanh(gates[:, 2 * hh:3 * hh])
        o = jax.nn.sigmoid(gates[:, 3 * hh:4 * hh])
        c_new = f * c_state + i * g                      # f32 cell state
        h_new = o * jnp.tanh(c_new)
        return h_new, c_new

    h_f, c_f = hf[...], cf[...]
    h_b, c_b = hb[...], cb[...]
    for tt in range(T):                                  # static unroll
        h_f, c_f = cell(gxf_ref[:, tt, :], h_f, c_f, whf)
        of_ref[:, tt, :] = h_f
        tb = T - 1 - tt                                  # backward direction
        h_b, c_b = cell(gxb_ref[:, tb, :], h_b, c_b, whb)
        ob_ref[:, tb, :] = h_b
    hf[...], cf[...] = h_f, c_f
    hb[...], cb[...] = h_b, c_b


def _pick_time_chunk(S):
    for T in (32, 16, 8):
        if S % T == 0:
            return T
    return S


def bilstm(gx_f, gx_b, whh_f_t, whh_b_t, hh):
    """gx_*: (B, S, 4*hh) f32 batch-major gate pre-activations.
    whh_*_t: (hh, 4*hh) bf16 transposed recurrent weights.
    Returns (out_f, out_b), each (B, S, hh) f32."""
    B, S, G4 = gx_f.shape
    T = _pick_time_chunk(S)
    nc = S // T
    out_f, out_b = pl.pallas_call(
        _bilstm_kernel,
        out_shape=(jax.ShapeDtypeStruct((B, S, hh), jnp.float32),
                   jax.ShapeDtypeStruct((B, S, hh), jnp.float32)),
        grid_spec=pltpu.PrefetchScalarGridSpec(
            num_scalar_prefetch=0,
            grid=(nc,),
            in_specs=[
                pl.BlockSpec((B, T, G4), lambda c: (0, c, 0)),
                pl.BlockSpec((B, T, G4), lambda c: (0, nc - 1 - c, 0)),
                pl.BlockSpec((hh, G4), lambda c: (0, 0)),
                pl.BlockSpec((hh, G4), lambda c: (0, 0)),
            ],
            out_specs=[
                pl.BlockSpec((B, T, hh), lambda c: (0, c, 0)),
                pl.BlockSpec((B, T, hh), lambda c: (0, nc - 1 - c, 0)),
            ],
            scratch_shapes=[
                pltpu.VMEM((B, hh), jnp.float32),
                pltpu.VMEM((B, hh), jnp.float32),
                pltpu.VMEM((B, hh), jnp.float32),
                pltpu.VMEM((B, hh), jnp.float32),
            ],
        ),
        compiler_params=pltpu.CompilerParams(
            dimension_semantics=("arbitrary",),
            vmem_limit_bytes=32 * 1024 * 1024),
    )(gx_f, gx_b, whh_f_t, whh_b_t)
    return out_f, out_b


# ----------------------------------------------------------------------------
# Deterministic stand-in "BERT" encoder (plain JAX glue; frozen / no_grad in
# the original module).
# ----------------------------------------------------------------------------
def _layer_norm(x, g, b, eps=1e-12):
    mu = x.mean(-1, keepdims=True)
    var = ((x - mu) ** 2).mean(-1, keepdims=True)
    return (x - mu) / jnp.sqrt(var + eps) * g + b


def bert_stand_in(input_ids, attention_mask, p, num_heads=4):
    B, S = input_ids.shape
    x = p["tok_emb"][input_ids] + p["pos_emb"][None, :S]
    x = _layer_norm(x, p["ln_emb_g"], p["ln_emb_b"])
    H = x.shape[-1]
    hd = H // num_heads

    q = x @ p["wq"] + p["bq"]
    k = x @ p["wk"] + p["bk"]
    v = x @ p["wv"] + p["bv"]

    def split(t):
        return t.reshape(B, S, num_heads, hd).transpose(0, 2, 1, 3)

    qh, kh, vh = split(q), split(k), split(v)
    scores = jnp.einsum("bhqd,bhkd->bhqk", qh, kh) / jnp.sqrt(float(hd))
    mask = attention_mask[:, None, None, :].astype(jnp.float32)
    scores = scores + (1.0 - mask) * (-1e9)
    attn = jax.nn.softmax(scores, axis=-1)
    ctx = jnp.einsum("bhqk,bhkd->bhqd", attn, vh)
    ctx = ctx.transpose(0, 2, 1, 3).reshape(B, S, H)
    x = _layer_norm(x + ctx @ p["wo"] + p["bo"], p["ln1_g"], p["ln1_b"])
    ff = jax.nn.gelu(x @ p["w1"] + p["b1"]) @ p["w2"] + p["b2"]
    x = _layer_norm(x + ff, p["ln2_g"], p["ln2_b"])
    return x  # (B, S, H) == last_hidden_state


# ----------------------------------------------------------------------------
# Full model forward.
# ----------------------------------------------------------------------------
def forward(params, input_ids, attention_mask):
    hh = params["whh_f"].shape[1]          # lstm_hidden_size

    # ---- frozen BERT (stand-in) ----
    hidden = bert_stand_in(input_ids, attention_mask, params["bert"])  # (B,S,H)

    # ---- fused Conv2d(1,C,(3,H),pad=(1,0)) + BiLSTM input projections ----
    gx_f, gx_b = conv_gate_proj(
        hidden, params["conv_w"], params["conv_b"],
        params["wih_f"], params["wih_b"],
        params["bih_f"] + params["bhh_f"],
        params["bih_b"] + params["bhh_b"], hh)                  # (B,S,4hh) x2

    # ---- BiLSTM recurrence (dropout=0.2 is a no-op: 1 layer / eval) ----
    whf_t = params["whh_f"].T.astype(jnp.bfloat16)              # (hh, 4hh)
    whb_t = params["whh_b"].T.astype(jnp.bfloat16)
    out_f, out_b = bilstm(gx_f, gx_b, whf_t, whb_t, hh)         # (B,S,hh) x2

    # lstm_output[:, -1, :] == [h_fwd(S-1), h_bwd(S-1)]
    last = jnp.concatenate([out_f[:, -1, :], out_b[:, -1, :]], axis=-1)

    # ---- classifier (tiny: plain JAX, no Pallas launch) ----
    logits = last @ params["cls_w"].T + params["cls_b"]          # (B, 3)
    return logits


# ----------------------------------------------------------------------------
# Deterministic parameter construction.
# ----------------------------------------------------------------------------
def init_params(key, vocab=32, max_pos=8, H=32, ffn=64, C=16, hh=32, classes=3):
    ks = jax.random.split(key, 32)
    ki = iter(ks)
    n = lambda shape, s=0.02: (s * jax.random.normal(next(ki), shape)
                               ).astype(jnp.float32)
    bert = dict(
        tok_emb=n((vocab, H)), pos_emb=n((max_pos, H)),
        ln_emb_g=jnp.ones((H,), jnp.float32), ln_emb_b=jnp.zeros((H,), jnp.float32),
        wq=n((H, H)), bq=jnp.zeros((H,), jnp.float32),
        wk=n((H, H)), bk=jnp.zeros((H,), jnp.float32),
        wv=n((H, H)), bv=jnp.zeros((H,), jnp.float32),
        wo=n((H, H)), bo=jnp.zeros((H,), jnp.float32),
        ln1_g=jnp.ones((H,), jnp.float32), ln1_b=jnp.zeros((H,), jnp.float32),
        w1=n((H, ffn)), b1=jnp.zeros((ffn,), jnp.float32),
        w2=n((ffn, H)), b2=jnp.zeros((H,), jnp.float32),
        ln2_g=jnp.ones((H,), jnp.float32), ln2_b=jnp.zeros((H,), jnp.float32),
    )
    params = dict(
        bert=bert,
        conv_w=n((C, 1, 3, H), 0.05),     # nn.Conv2d(1, C, (3, H)) weight
        conv_b=n((C,), 0.05),
        wih_f=n((4 * hh, C), 0.1), whh_f=n((4 * hh, hh), 0.1),
        bih_f=n((4 * hh,), 0.1), bhh_f=n((4 * hh,), 0.1),
        wih_b=n((4 * hh, C), 0.1), whh_b=n((4 * hh, hh), 0.1),
        bih_b=n((4 * hh,), 0.1), bhh_b=n((4 * hh,), 0.1),
        cls_w=n((classes, 2 * hh), 0.1), cls_b=jnp.zeros((classes,), jnp.float32),
    )
    return params


if __name__ == "__main__":
    B, S, VOCAB = 2, 8, 32
    key = jax.random.PRNGKey(0)
    k_param, k_ids = jax.random.split(key)

    params = init_params(k_param, vocab=VOCAB, max_pos=S)
    input_ids = jax.random.randint(k_ids, (B, S), 0, VOCAB, dtype=jnp.int32)
    attention_mask = jnp.ones((B, S), dtype=jnp.int32)
    attention_mask = attention_mask.at[1, -2:].set(0)  # a little padding

    fwd = jax.jit(forward)
    logits = fwd(params, input_ids, attention_mask)
    logits = jax.block_until_ready(logits)
    assert logits.shape == (B, 3) and logits.dtype == jnp.float32
    print("KERNEL_OK")
</pallas_src>

<mosaic_0001>
module attributes {stable_mosaic.version = 11 : i64} {
  func.func @_conv_gate_proj_kernel(%arg0: i32, %arg1: memref<1x10x32xf32, #tpu.memory_space<vmem>>, %arg2: memref<3x32x128xbf16, #tpu.memory_space<vmem>>, %arg3: memref<1x128xf32, #tpu.memory_space<vmem>>, %arg4: memref<128x256xbf16, #tpu.memory_space<vmem>>, %arg5: memref<1x256xf32, #tpu.memory_space<vmem>>, %arg6: memref<1x8x128xf32, #tpu.memory_space<vmem>>, %arg7: memref<1x8x128xf32, #tpu.memory_space<vmem>>) attributes {dimension_semantics = [#tpu.dimension_semantics<parallel>], iteration_bounds = array<i64: 2>, scalar_prefetch = 0 : i64, scratch_operands = 0 : i64, tpu.core_type = #tpu.core_type<tc>, window_params = [{transform_indices = @transform_0, window_bounds = array<i64: 1, 10, 32>}, {pipeline_mode = #tpu.pipeline_mode<synchronous>, transform_indices = @transform_1, window_bounds = array<i64: 3, 32, 128>}, {pipeline_mode = #tpu.pipeline_mode<synchronous>, transform_indices = @transform_2, window_bounds = array<i64: 1, 128>}, {pipeline_mode = #tpu.pipeline_mode<synchronous>, transform_indices = @transform_3, window_bounds = array<i64: 128, 256>}, {pipeline_mode = #tpu.pipeline_mode<synchronous>, transform_indices = @transform_4, window_bounds = array<i64: 1, 256>}, {transform_indices = @transform_5, window_bounds = array<i64: 1, 8, 128>}, {transform_indices = @transform_6, window_bounds = array<i64: 1, 8, 128>}]} {
    %c0 = arith.constant 0 : index
    %c0_0 = arith.constant 0 : index
    %c0_1 = arith.constant 0 : index
    %0 = vector.load %arg1[%c0, %c0_0, %c0_1] : memref<1x10x32xf32, #tpu.memory_space<vmem>>, vector<1x10x32xf32>
    %1 = vector.shape_cast %0 : vector<1x10x32xf32> to vector<10x32xf32>
    %2 = arith.truncf %1 : vector<10x32xf32> to vector<10x32xbf16>
    %3 = vector.extract_strided_slice %2 {offsets = [0, 0], sizes = [8, 32], strides = [1, 1]} : vector<10x32xbf16> to vector<8x32xbf16>
    %c0_2 = arith.constant 0 : index
    %c0_3 = arith.constant 0 : index
    %c0_4 = arith.constant 0 : index
    %4 = vector.load %arg2[%c0_2, %c0_3, %c0_4] : memref<3x32x128xbf16, #tpu.memory_space<vmem>>, vector<1x32x128xbf16>
    %5 = vector.shape_cast %4 : vector<1x32x128xbf16> to vector<32x128xbf16>
    %cst = arith.constant dense<0.000000e+00> : vector<8x128xf32>
    %6 = tpu.matmul %3, %5, %cst {dimension_numbers = #tpu.dot_dimension_numbers<[1], [0], [0], [1], [0, 0, 1, 1], [], []>} : vector<8x32xbf16>, vector<32x128xbf16>, vector<8x128xf32> -> vector<8x128xf32>
    %7 = vector.extract_strided_slice %2 {offsets = [1, 0], sizes = [8, 32], strides = [1, 1]} : vector<10x32xbf16> to vector<8x32xbf16>
    %c1 = arith.constant 1 : index
    %c0_5 = arith.constant 0 : index
    %c0_6 = arith.constant 0 : index
    %8 = vector.load %arg2[%c1, %c0_5, %c0_6] : memref<3x32x128xbf16, #tpu.memory_space<vmem>>, vector<1x32x128xbf16>
    %9 = vector.shape_cast %8 : vector<1x32x128xbf16> to vector<32x128xbf16>
    %cst_7 = arith.constant dense<0.000000e+00> : vector<8x128xf32>
    %10 = tpu.matmul %7, %9, %cst_7 {dimension_numbers = #tpu.dot_dimension_numbers<[1], [0], [0], [1], [0, 0, 1, 1], [], []>} : vector<8x32xbf16>, vector<32x128xbf16>, vector<8x128xf32> -> vector<8x128xf32>
    %11 = arith.addf %6, %10 : vector<8x128xf32>
    %12 = vector.extract_strided_slice %2 {offsets = [2, 0], sizes = [8, 32], strides = [1, 1]} : vector<10x32xbf16> to vector<8x32xbf16>
    %c2 = arith.constant 2 : index
    %c0_8 = arith.constant 0 : index
    %c0_9 = arith.constant 0 : index
    %13 = vector.load %arg2[%c2, %c0_8, %c0_9] : memref<3x32x128xbf16, #tpu.memory_space<vmem>>, vector<1x32x128xbf16>
    %14 = vector.shape_cast %13 : vector<1x32x128xbf16> to vector<32x128xbf16>
    %cst_10 = arith.constant dense<0.000000e+00> : vector<8x128xf32>
    %15 = tpu.matmul %12, %14, %cst_10 {dimension_numbers = #tpu.dot_dimension_numbers<[1], [0], [0], [1], [0, 0, 1, 1], [], []>} : vector<8x32xbf16>, vector<32x128xbf16>, vector<8x128xf32> -> vector<8x128xf32>
    %16 = arith.addf %11, %15 : vector<8x128xf32>
    %c0_11 = arith.constant 0 : index
    %c0_12 = arith.constant 0 : index
    %17 = vector.load %arg3[%c0_11, %c0_12] : memref<1x128xf32, #tpu.memory_space<vmem>>, vector<1x128xf32>
    %18 = vector.broadcast %17 : vector<1x128xf32> to vector<8x128xf32>
    %19 = arith.addf %16, %18 : vector<8x128xf32>
    %20 = arith.truncf %19 : vector<8x128xf32> to vector<8x128xbf16>
    %c0_13 = arith.constant 0 : index
    %c0_14 = arith.constant 0 : index
    %21 = vector.load %arg4[%c0_13, %c0_14] : memref<128x256xbf16, #tpu.memory_space<vmem>>, vector<128x256xbf16>
    %cst_15 = arith.constant dense<0.000000e+00> : vector<8x256xf32>
    %22 = tpu.matmul %20, %21, %cst_15 {dimension_numbers = #tpu.dot_dimension_numbers<[1], [0], [0], [1], [0, 0, 1, 1], [], []>} : vector<8x128xbf16>, vector<128x256xbf16>, vector<8x256xf32> -> vector<8x256xf32>
    %c0_16 = arith.constant 0 : index
    %c0_17 = arith.constant 0 : index
    %23 = vector.load %arg5[%c0_16, %c0_17] : memref<1x256xf32, #tpu.memory_space<vmem>>, vector<1x256xf32>
    %24 = vector.broadcast %23 : vector<1x256xf32> to vector<8x256xf32>
    %25 = arith.addf %22, %24 : vector<8x256xf32>
    %26 = vector.extract_strided_slice %25 {offsets = [0, 0], sizes = [8, 128], strides = [1, 1]} : vector<8x256xf32> to vector<8x128xf32>
    %c0_18 = arith.constant 0 : index
    %c0_19 = arith.constant 0 : index
    %c0_20 = arith.constant 0 : index
    %27 = vector.load %arg6[%c0_18, %c0_19, %c0_20] : memref<1x8x128xf32, #tpu.memory_space<vmem>>, vector<1x8x128xf32>
    %28 = vector.shape_cast %27 : vector<1x8x128xf32> to vector<8x128xf32>
    %29 = vector.shape_cast %26 : vector<8x128xf32> to vector<1x8x128xf32>
    tpu.vector_store %arg6[%c0_18, %c0_19, %c0_20], %29 {strides = array<i32>} : memref<1x8x128xf32, #tpu.memory_space<vmem>>, vector<1x8x128xf32>,
    %30 = vector.extract_strided_slice %25 {offsets = [0, 128], sizes = [8, 128], strides = [1, 1]} : vector<8x256xf32> to vector<8x128xf32>
    %c0_21 = arith.constant 0 : index
    %c0_22 = arith.constant 0 : index
    %c0_23 = arith.constant 0 : index
    %31 = vector.load %arg7[%c0_21, %c0_22, %c0_23] : memref<1x8x128xf32, #tpu.memory_space<vmem>>, vector<1x8x128xf32>
    %32 = vector.shape_cast %31 : vector<1x8x128xf32> to vector<8x128xf32>
    %33 = vector.shape_cast %30 : vector<8x128xf32> to vector<1x8x128xf32>
    tpu.vector_store %arg7[%c0_21, %c0_22, %c0_23], %33 {strides = array<i32>} : memref<1x8x128xf32, #tpu.memory_space<vmem>>, vector<1x8x128xf32>,
    return
  }
  func.func @transform_0(%arg0: i32) -> (i32, i32, i32) {
    %c0_i32 = arith.constant 0 : i32
    %c0_i32_0 = arith.constant 0 : i32
    %c0_i32_1 = arith.constant 0 : i32
    return %arg0, %c0_i32, %c0_i32_0 : i32, i32, i32
  }
  func.func @transform_1(%arg0: i32) -> (i32, i32, i32) {
    %c0_i32 = arith.constant 0 : i32
    %c0_i32_0 = arith.constant 0 : i32
    %c0_i32_1 = arith.constant 0 : i32
    %c0_i32_2 = arith.constant 0 : i32
    return %c0_i32, %c0_i32_0, %c0_i32_1 : i32, i32, i32
  }
  func.func @transform_2(%arg0: i32) -> (i32, i32) {
    %c0_i32 = arith.constant 0 : i32
    %c0_i32_0 = arith.constant 0 : i32
    %c0_i32_1 = arith.constant 0 : i32
    return %c0_i32, %c0_i32_0 : i32, i32
  }
  func.func @transform_3(%arg0: i32) -> (i32, i32) {
    %c0_i32 = arith.constant 0 : i32
    %c0_i32_0 = arith.constant 0 : i32
    %c0_i32_1 = arith.constant 0 : i32
    return %c0_i32, %c0_i32_0 : i32, i32
  }
  func.func @transform_4(%arg0: i32) -> (i32, i32) {
    %c0_i32 = arith.constant 0 : i32
    %c0_i32_0 = arith.constant 0 : i32
    %c0_i32_1 = arith.constant 0 : i32
    return %c0_i32, %c0_i32_0 : i32, i32
  }
  func.func @transform_5(%arg0: i32) -> (i32, i32, i32) {
    %c0_i32 = arith.constant 0 : i32
    %c0_i32_0 = arith.constant 0 : i32
    %c0_i32_1 = arith.constant 0 : i32
    return %arg0, %c0_i32, %c0_i32_0 : i32, i32, i32
  }
  func.func @transform_6(%arg0: i32) -> (i32, i32, i32) {
    %c0_i32 = arith.constant 0 : i32
    %c0_i32_0 = arith.constant 0 : i32
    %c0_i32_1 = arith.constant 0 : i32
    return %arg0, %c0_i32, %c0_i32_0 : i32, i32, i32
  }
}

module attributes {stable_mosaic.version = 11 : i64} {
  func.func @_bilstm_kernel(%arg0: i32, %arg1: memref<2x8x128xf32, #tpu.memory_space<vmem>>, %arg2: memref<2x8x128xf32, #tpu.memory_space<vmem>>, %arg3: memref<32x128xbf16, #tpu.memory_space<vmem>>, %arg4: memref<32x128xbf16, #tpu.memory_space<vmem>>, %arg5: memref<2x8x32xf32, #tpu.memory_space<vmem>>, %arg6: memref<2x8x32xf32, #tpu.memory_space<vmem>>, %arg7: memref<2x32xf32, #tpu.memory_space<vmem>>, %arg8: memref<2x32xf32, #tpu.memory_space<vmem>>, %arg9: memref<2x32xf32, #tpu.memory_space<vmem>>, %arg10: memref<2x32xf32, #tpu.memory_space<vmem>>) attributes {dimension_semantics = [#tpu.dimension_semantics<arbitrary>], iteration_bounds = array<i64: 1>, scalar_prefetch = 0 : i64, scratch_operands = 4 : i64, tpu.core_type = #tpu.core_type<tc>, window_params = [{transform_indices = @transform_0, window_bounds = array<i64: 2, 8, 128>}, {transform_indices = @transform_1, window_bounds = array<i64: 2, 8, 128>}, {pipeline_mode = #tpu.pipeline_mode<synchronous>, transform_indices = @transform_2, window_bounds = array<i64: 32, 128>}, {pipeline_mode = #tpu.pipeline_mode<synchronous>, transform_indices = @transform_3, window_bounds = array<i64: 32, 128>}, {transform_indices = @transform_4, window_bounds = array<i64: 2, 8, 32>}, {transform_indices = @transform_5, window_bounds = array<i64: 2, 8, 32>}]} {
    %c0_i32 = arith.constant 0 : i32
    %0 = arith.cmpi eq, %arg0, %c0_i32 : i32
    %1 = arith.extui %0 : i1 to i32
    %c0_i32_0 = arith.constant 0 : i32
    %2 = arith.cmpi ne, %1, %c0_i32_0 : i32
    scf.if %2 {
      %cst_172 = arith.constant 0.000000e+00 : f32
      %541 = vector.broadcast %cst_172 : f32 to vector<2x32xf32>
      %c0_173 = arith.constant 0 : index
      %c0_174 = arith.constant 0 : index
      %542 = vector.load %arg7[%c0_173, %c0_174] : memref<2x32xf32, #tpu.memory_space<vmem>>, vector<2x32xf32>
      tpu.vector_store %arg7[%c0_173, %c0_174], %541 {strides = array<i32>} : memref<2x32xf32, #tpu.memory_space<vmem>>, vector<2x32xf32>,
      %cst_175 = arith.constant 0.000000e+00 : f32
      %543 = vector.broadcast %cst_175 : f32 to vector<2x32xf32>
      %c0_176 = arith.constant 0 : index
      %c0_177 = arith.constant 0 : index
      %544 = vector.load %arg8[%c0_176, %c0_177] : memref<2x32xf32, #tpu.memory_space<vmem>>, vector<2x32xf32>
      tpu.vector_store %arg8[%c0_176, %c0_177], %543 {strides = array<i32>} : memref<2x32xf32, #tpu.memory_space<vmem>>, vector<2x32xf32>,
      %cst_178 = arith.constant 0.000000e+00 : f32
      %545 = vector.broadcast %cst_178 : f32 to vector<2x32xf32>
      %c0_179 = arith.constant 0 : index
      %c0_180 = arith.constant 0 : index
      %546 = vector.load %arg9[%c0_179, %c0_180] : memref<2x32xf32, #tpu.memory_space<vmem>>, vector<2x32xf32>
      tpu.vector_store %arg9[%c0_179, %c0_180], %545 {strides = array<i32>} : memref<2x32xf32, #tpu.memory_space<vmem>>, vector<2x32xf32>,
      %cst_181 = arith.constant 0.000000e+00 : f32
      %547 = vector.broadcast %cst_181 : f32 to vector<2x32xf32>
      %c0_182 = arith.constant 0 : index
      %c0_183 = arith.constant 0 : index
      %548 = vector.load %arg10[%c0_182, %c0_183] : memref<2x32xf32, #tpu.memory_space<vmem>>, vector<2x32xf32>
      tpu.vector_store %arg10[%c0_182, %c0_183], %547 {strides = array<i32>} : memref<2x32xf32, #tpu.memory_space<vmem>>, vector<2x32xf32>,
    } else {
    }
    %c0 = arith.constant 0 : index
    %c0_1 = arith.constant 0 : index
    %3 = vector.load %arg3[%c0, %c0_1] : memref<32x128xbf16, #tpu.memory_space<vmem>>, vector<32x128xbf16>
    %c0_2 = arith.constant 0 : index
    %c0_3 = arith.constant 0 : index
    %4 = vector.load %arg4[%c0_2, %c0_3] : memref<32x128xbf16, #tpu.memory_space<vmem>>, vector<32x128xbf16>
    %c0_4 = arith.constant 0 : index
    %c0_5 = arith.constant 0 : index
    %5 = vector.load %arg7[%c0_4, %c0_5] : memref<2x32xf32, #tpu.memory_space<vmem>>, vector<2x32xf32>
    %c0_6 = arith.constant 0 : index
    %c0_7 = arith.constant 0 : index
    %6 = vector.load %arg8[%c0_6, %c0_7] : memref<2x32xf32, #tpu.memory_space<vmem>>, vector<2x32xf32>
    %c0_8 = arith.constant 0 : index
    %c0_9 = arith.constant 0 : index
    %7 = vector.load %arg9[%c0_8, %c0_9] : memref<2x32xf32, #tpu.memory_space<vmem>>, vector<2x32xf32>
    %c0_10 = arith.constant 0 : index
    %c0_11 = arith.constant 0 : index
    %8 = vector.load %arg10[%c0_10, %c0_11] : memref<2x32xf32, #tpu.memory_space<vmem>>, vector<2x32xf32>
    %c0_12 = arith.constant 0 : index
    %c0_13 = arith.constant 0 : index
    %c0_14 = arith.constant 0 : index
    %9 = vector.load %arg1[%c0_12, %c0_13, %c0_14] : memref<2x8x128xf32, #tpu.memory_space<vmem>>, vector<2x1x128xf32>
    %10 = vector.shape_cast %9 : vector<2x1x128xf32> to vector<2x128xf32>
    %11 = arith.truncf %5 : vector<2x32xf32> to vector<2x32xbf16>
    %cst = arith.constant dense<0.000000e+00> : vector<2x128xf32>
    %12 = tpu.matmul %11, %3, %cst {dimension_numbers = #tpu.dot_dimension_numbers<[1], [0], [0], [1], [0, 0, 1, 1], [], []>} : vector<2x32xbf16>, vector<32x128xbf16>, vector<2x128xf32> -> vector<2x128xf32>
    %13 = arith.addf %10, %12 : vector<2x128xf32>
    %14 = vector.extract_strided_slice %13 {offsets = [0, 0], sizes = [2, 32], strides = [1, 1]} : vector<2x128xf32> to vector<2x32xf32>
    %15 = arith.negf %14 : vector<2x32xf32>
    %16 = math.exp %15 : vector<2x32xf32>
    %cst_15 = arith.constant 1.000000e+00 : f32
    %17 = vector.broadcast %cst_15 : f32 to vector<2x32xf32>
    %18 = arith.addf %17, %16 : vector<2x32xf32>
    %19 = arith.divf %17, %18 : vector<2x32xf32>
    %20 = vector.extract_strided_slice %13 {offsets = [0, 32], sizes = [2, 32], strides = [1, 1]} : vector<2x128xf32> to vector<2x32xf32>
    %21 = arith.negf %20 : vector<2x32xf32>
    %22 = math.exp %21 : vector<2x32xf32>
    %cst_16 = arith.constant 1.000000e+00 : f32
    %23 = vector.broadcast %cst_16 : f32 to vector<2x32xf32>
    %24 = arith.addf %23, %22 : vector<2x32xf32>
    %25 = arith.divf %23, %24 : vector<2x32xf32>
    %26 = vector.extract_strided_slice %13 {offsets = [0, 64], sizes = [2, 32], strides = [1, 1]} : vector<2x128xf32> to vector<2x32xf32>
    %27 = math.tanh %26 : vector<2x32xf32>
    %28 = vector.extract_strided_slice %13 {offsets = [0, 96], sizes = [2, 32], strides = [1, 1]} : vector<2x128xf32> to vector<2x32xf32>
    %29 = arith.negf %28 : vector<2x32xf32>
    %30 = math.exp %29 : vector<2x32xf32>
    %cst_17 = arith.constant 1.000000e+00 : f32
    %31 = vector.broadcast %cst_17 : f32 to vector<2x32xf32>
    %32 = arith.addf %31, %30 : vector<2x32xf32>
    %33 = arith.divf %31, %32 : vector<2x32xf32>
    %34 = arith.mulf %25, %6 : vector<2x32xf32>
    %35 = arith.mulf %19, %27 : vector<2x32xf32>
    %36 = arith.addf %34, %35 : vector<2x32xf32>
    %37 = math.tanh %36 : vector<2x32xf32>
    %38 = arith.mulf %33, %37 : vector<2x32xf32>
    %c0_18 = arith.constant 0 : index
    %c0_19 = arith.constant 0 : index
    %c0_20 = arith.constant 0 : index
    %39 = vector.load %arg5[%c0_18, %c0_19, %c0_20] : memref<2x8x32xf32, #tpu.memory_space<vmem>>, vector<2x1x32xf32>
    %40 = vector.shape_cast %39 : vector<2x1x32xf32> to vector<2x32xf32>
    %41 = vector.shape_cast %38 : vector<2x32xf32> to vector<2x1x32xf32>
    tpu.vector_store %arg5[%c0_18, %c0_19, %c0_20], %41 {strides = array<i32>} : memref<2x8x32xf32, #tpu.memory_space<vmem>>, vector<2x1x32xf32>,
    %c0_21 = arith.constant 0 : index
    %c7 = arith.constant 7 : index
    %c0_22 = arith.constant 0 : index
    %42 = vector.load %arg2[%c0_21, %c7, %c0_22] : memref<2x8x128xf32, #tpu.memory_space<vmem>>, vector<2x1x128xf32>
    %43 = vector.shape_cast %42 : vector<2x1x128xf32> to vector<2x128xf32>
    %44 = arith.truncf %7 : vector<2x32xf32> to vector<2x32xbf16>
    %cst_23 = arith.constant dense<0.000000e+00> : vector<2x128xf32>
    %45 = tpu.matmul %44, %4, %cst_23 {dimension_numbers = #tpu.dot_dimension_numbers<[1], [0], [0], [1], [0, 0, 1, 1], [], []>} : vector<2x32xbf16>, vector<32x128xbf16>, vector<2x128xf32> -> vector<2x128xf32>
    %46 = arith.addf %43, %45 : vector<2x128xf32>
    %47 = vector.extract_strided_slice %46 {offsets = [0, 0], sizes = [2, 32], strides = [1, 1]} : vector<2x128xf32> to vector<2x32xf32>
    %48 = arith.negf %47 : vector<2x32xf32>
    %49 = math.exp %48 : vector<2x32xf32>
    %cst_24 = arith.constant 1.000000e+00 : f32
    %50 = vector.broadcast %cst_24 : f32 to vector<2x32xf32>
    %51 = arith.addf %50, %49 : vector<2x32xf32>
    %52 = arith.divf %50, %51 : vector<2x32xf32>
    %53 = vector.extract_strided_slice %46 {offsets = [0, 32], sizes = [2, 32], strides = [1, 1]} : vector<2x128xf32> to vector<2x32xf32>
    %54 = arith.negf %53 : vector<2x32xf32>
    %55 = math.exp %54 : vector<2x32xf32>
    %cst_25 = arith.constant 1.000000e+00 : f32
    %56 = vector.broadcast %cst_25 : f32 to vector<2x32xf32>
    %57 = arith.addf %56, %55 : vector<2x32xf32>
    %58 = arith.divf %56, %57 : vector<2x32xf32>
    %59 = vector.extract_strided_slice %46 {offsets = [0, 64], sizes = [2, 32], strides = [1, 1]} : vector<2x128xf32> to vector<2x32xf32>
    %60 = math.tanh %59 : vector<2x32xf32>
    %61 = vector.extract_strided_slice %46 {offsets = [0, 96], sizes = [2, 32], strides = [1, 1]} : vector<2x128xf32> to vector<2x32xf32>
    %62 = arith.negf %61 : vector<2x32xf32>
    %63 = math.exp %62 : vector<2x32xf32>
    %cst_26 = arith.constant 1.000000e+00 : f32
    %64 = vector.broadcast %cst_26 : f32 to vector<2x32xf32>
    %65 = arith.addf %64, %63 : vector<2x32xf32>
    %66 = arith.divf %64, %65 : vector<2x32xf32>
    %67 = arith.mulf %58, %8 : vector<2x32xf32>
    %68 = arith.mulf %52, %60 : vector<2x32xf32>
    %69 = arith.addf %67, %68 : vector<2x32xf32>
    %70 = math.tanh %69 : vector<2x32xf32>
    %71 = arith.mulf %66, %70 : vector<2x32xf32>
    %c0_27 = arith.constant 0 : index
    %c7_28 = arith.constant 7 : index
    %c0_29 = arith.constant 0 : index
    %72 = vector.load %arg6[%c0_27, %c7_28, %c0_29] : memref<2x8x32xf32, #tpu.memory_space<vmem>>, vector<2x1x32xf32>
    %73 = vector.shape_cast %72 : vector<2x1x32xf32> to vector<2x32xf32>
    %74 = vector.shape_cast %71 : vector<2x32xf32> to vector<2x1x32xf32>
    tpu.vector_store %arg6[%c0_27, %c7_28, %c0_29], %74 {strides = array<i32>} : memref<2x8x32xf32, #tpu.memory_space<vmem>>, vector<2x1x32xf32>,
    %c0_30 = arith.constant 0 : index
    %c1 = arith.constant 1 : index
    %c0_31 = arith.constant 0 : index
    %75 = vector.load %arg1[%c0_30, %c1, %c0_31] : memref<2x8x128xf32, #tpu.memory_space<vmem>>, vector<2x1x128xf32>
    %76 = vector.shape_cast %75 : vector<2x1x128xf32> to vector<2x128xf32>
    %77 = arith.truncf %38 : vector<2x32xf32> to vector<2x32xbf16>
    %cst_32 = arith.constant dense<0.000000e+00> : vector<2x128xf32>
    %78 = tpu.matmul %77, %3, %cst_32 {dimension_numbers = #tpu.dot_dimension_numbers<[1], [0], [0], [1], [0, 0, 1, 1], [], []>} : vector<2x32xbf16>, vector<32x128xbf16>, vector<2x128xf32> -> vector<2x128xf32>
    %79 = arith.addf %76, %78 : vector<2x128xf32>
    %80 = vector.extract_strided_slice %79 {offsets = [0, 0], sizes = [2, 32], strides = [1, 1]} : vector<2x128xf32> to vector<2x32xf32>
    %81 = arith.negf %80 : vector<2x32xf32>
    %82 = math.exp %81 : vector<2x32xf32>
    %cst_33 = arith.constant 1.000000e+00 : f32
    %83 = vector.broadcast %cst_33 : f32 to vector<2x32xf32>
    %84 = arith.addf %83, %82 : vector<2x32xf32>
    %85 = arith.divf %83, %84 : vector<2x32xf32>
    %86 = vector.extract_strided_slice %79 {offsets = [0, 32], sizes = [2, 32], strides = [1, 1]} : vector<2x128xf32> to vector<2x32xf32>
    %87 = arith.negf %86 : vector<2x32xf32>
    %88 = math.exp %87 : vector<2x32xf32>
    %cst_34 = arith.constant 1.000000e+00 : f32
    %89 = vector.broadcast %cst_34 : f32 to vector<2x32xf32>
    %90 = arith.addf %89, %88 : vector<2x32xf32>
    %91 = arith.divf %89, %90 : vector<2x32xf32>
    %92 = vector.extract_strided_slice %79 {offsets = [0, 64], sizes = [2, 32], strides = [1, 1]} : vector<2x128xf32> to vector<2x32xf32>
    %93 = math.tanh %92 : vector<2x32xf32>
    %94 = vector.extract_strided_slice %79 {offsets = [0, 96], sizes = [2, 32], strides = [1, 1]} : vector<2x128xf32> to vector<2x32xf32>
    %95 = arith.negf %94 : vector<2x32xf32>
    %96 = math.exp %95 : vector<2x32xf32>
    %cst_35 = arith.constant 1.000000e+00 : f32
    %97 = vector.broadcast %cst_35 : f32 to vector<2x32xf32>
    %98 = arith.addf %97, %96 : vector<2x32xf32>
    %99 = arith.divf %97, %98 : vector<2x32xf32>
    %100 = arith.mulf %91, %36 : vector<2x32xf32>
    %101 = arith.mulf %85, %93 : vector<2x32xf32>
    %102 = arith.addf %100, %101 : vector<2x32xf32>
    %103 = math.tanh %102 : vector<2x32xf32>
    %104 = arith.mulf %99, %103 : vector<2x32xf32>
    %c0_36 = arith.constant 0 : index
    %c1_37 = arith.constant 1 : index
    %c0_38 = arith.constant 0 : index
    %105 = vector.load %arg5[%c0_36, %c1_37, %c0_38] : memref<2x8x32xf32, #tpu.memory_space<vmem>>, vector<2x1x32xf32>
    %106 = vector.shape_cast %105 : vector<2x1x32xf32> to vector<2x32xf32>
    %107 = vector.shape_cast %104 : vector<2x32xf32> to vector<2x1x32xf32>
    tpu.vector_store %arg5[%c0_36, %c1_37, %c0_38], %107 {strides = array<i32>} : memref<2x8x32xf32, #tpu.memory_space<vmem>>, vector<2x1x32xf32>,
    %c0_39 = arith.constant 0 : index
    %c6 = arith.constant 6 : index
    %c0_40 = arith.constant 0 : index
    %108 = vector.load %arg2[%c0_39, %c6, %c0_40] : memref<2x8x128xf32, #tpu.memory_space<vmem>>, vector<2x1x128xf32>
    %109 = vector.shape_cast %108 : vector<2x1x128xf32> to vector<2x128xf32>
    %110 = arith.truncf %71 : vector<2x32xf32> to vector<2x32xbf16>
    %cst_41 = arith.constant dense<0.000000e+00> : vector<2x128xf32>
    %111 = tpu.matmul %110, %4, %cst_41 {dimension_numbers = #tpu.dot_dimension_numbers<[1], [0], [0], [1], [0, 0, 1, 1], [], []>} : vector<2x32xbf16>, vector<32x128xbf16>, vector<2x128xf32> -> vector<2x128xf32>
    %112 = arith.addf %109, %111 : vector<2x128xf32>
    %113 = vector.extract_strided_slice %112 {offsets = [0, 0], sizes = [2, 32], strides = [1, 1]} : vector<2x128xf32> to vector<2x32xf32>
    %114 = arith.negf %113 : vector<2x32xf32>
    %115 = math.exp %114 : vector<2x32xf32>
    %cst_42 = arith.constant 1.000000e+00 : f32
    %116 = vector.broadcast %cst_42 : f32 to vector<2x32xf32>
    %117 = arith.addf %116, %115 : vector<2x32xf32>
    %118 = arith.divf %116, %117 : vector<2x32xf32>
    %119 = vector.extract_strided_slice %112 {offsets = [0, 32], sizes = [2, 32], strides = [1, 1]} : vector<2x128xf32> to vector<2x32xf32>
    %120 = arith.negf %119 : vector<2x32xf32>
    %121 = math.exp %120 : vector<2x32xf32>
    %cst_43 = arith.constant 1.000000e+00 : f32
    %122 = vector.broadcast %cst_43 : f32 to vector<2x32xf32>
    %123 = arith.addf %122, %121 : vector<2x32xf32>
    %124 = arith.divf %122, %123 : vector<2x32xf32>
    %125 = vector.extract_strided_slice %112 {offsets = [0, 64], sizes = [2, 32], strides = [1, 1]} : vector<2x128xf32> to vector<2x32xf32>
    %126 = math.tanh %125 : vector<2x32xf32>
    %127 = vector.extract_strided_slice %112 {offsets = [0, 96], sizes = [2, 32], strides = [1, 1]} : vector<2x128xf32> to vector<2x32xf32>
    %128 = arith.negf %127 : vector<2x32xf32>
    %129 = math.exp %128 : vector<2x32xf32>
    %cst_44 = arith.constant 1.000000e+00 : f32
    %130 = vector.broadcast %cst_44 : f32 to vector<2x32xf32>
    %131 = arith.addf %130, %129 : vector<2x32xf32>
    %132 = arith.divf %130, %131 : vector<2x32xf32>
    %133 = arith.mulf %124, %69 : vector<2x32xf32>
    %134 = arith.mulf %118, %126 : vector<2x32xf32>
    %135 = arith.addf %133, %134 : vector<2x32xf32>
    %136 = math.tanh %135 : vector<2x32xf32>
    %137 = arith.mulf %132, %136 : vector<2x32xf32>
    %c0_45 = arith.constant 0 : index
    %c6_46 = arith.constant 6 : index
    %c0_47 = arith.constant 0 : index
    %138 = vector.load %arg6[%c0_45, %c6_46, %c0_47] : memref<2x8x32xf32, #tpu.memory_space<vmem>>, vector<2x1x32xf32>
    %139 = vector.shape_cast %138 : vector<2x1x32xf32> to vector<2x32xf32>
    %140 = vector.shape_cast %137 : vector<2x32xf32> to vector<2x1x32xf32>
    tpu.vector_store %arg6[%c0_45, %c6_46, %c0_47], %140 {strides = array<i32>} : memref<2x8x32xf32, #tpu.memory_space<vmem>>, vector<2x1x32xf32>,
    %c0_48 = arith.constant 0 : index
    %c2 = arith.constant 2 : index
    %c0_49 = arith.constant 0 : index
    %141 = vector.load %arg1[%c0_48, %c2, %c0_49] : memref<2x8x128xf32, #tpu.memory_space<vmem>>, vector<2x1x128xf32>
    %142 = vector.shape_cast %141 : vector<2x1x128xf32> to vector<2x128xf32>
    %143 = arith.truncf %104 : vector<2x32xf32> to vector<2x32xbf16>
    %cst_50 = arith.constant dense<0.000000e+00> : vector<2x128xf32>
    %144 = tpu.matmul %143, %3, %cst_50 {dimension_numbers = #tpu.dot_dimension_numbers<[1], [0], [0], [1], [0, 0, 1, 1], [], []>} : vector<2x32xbf16>, vector<32x128xbf16>, vector<2x128xf32> -> vector<2x128xf32>
    %145 = arith.addf %142, %144 : vector<2x128xf32>
    %146 = vector.extract_strided_slice %145 {offsets = [0, 0], sizes = [2, 32], strides = [1, 1]} : vector<2x128xf32> to vector<2x32xf32>
    %147 = arith.negf %146 : vector<2x32xf32>
    %148 = math.exp %147 : vector<2x32xf32>
    %cst_51 = arith.constant 1.000000e+00 : f32
    %149 = vector.broadcast %cst_51 : f32 to vector<2x32xf32>
    %150 = arith.addf %149, %148 : vector<2x32xf32>
    %151 = arith.divf %149, %150 : vector<2x32xf32>
    %152 = vector.extract_strided_slice %145 {offsets = [0, 32], sizes = [2, 32], strides = [1, 1]} : vector<2x128xf32> to vector<2x32xf32>
    %153 = arith.negf %152 : vector<2x32xf32>
    %154 = math.exp %153 : vector<2x32xf32>
    %cst_52 = arith.constant 1.000000e+00 : f32
    %155 = vector.broadcast %cst_52 : f32 to vector<2x32xf32>
    %156 = arith.addf %155, %154 : vector<2x32xf32>
    %157 = arith.divf %155, %156 : vector<2x32xf32>
    %158 = vector.extract_strided_slice %145 {offsets = [0, 64], sizes = [2, 32], strides = [1, 1]} : vector<2x128xf32> to vector<2x32xf32>
    %159 = math.tanh %158 : vector<2x32xf32>
    %160 = vector.extract_strided_slice %145 {offsets = [0, 96], sizes = [2, 32], strides = [1, 1]} : vector<2x128xf32> to vector<2x32xf32>
    %161 = arith.negf %160 : vector<2x32xf32>
    %162 = math.exp %161 : vector<2x32xf32>
    %cst_53 = arith.constant 1.000000e+00 : f32
    %163 = vector.broadcast %cst_53 : f32 to vector<2x32xf32>
    %164 = arith.addf %163, %162 : vector<2x32xf32>
    %165 = arith.divf %163, %164 : vector<2x32xf32>
    %166 = arith.mulf %157, %102 : vector<2x32xf32>
    %167 = arith.mulf %151, %159 : vector<2x32xf32>
    %168 = arith.addf %166, %167 : vector<2x32xf32>
    %169 = math.tanh %168 : vector<2x32xf32>
    %170 = arith.mulf %165, %169 : vector<2x32xf32>
    %c0_54 = arith.constant 0 : index
    %c2_55 = arith.constant 2 : index
    %c0_56 = arith.constant 0 : index
    %171 = vector.load %arg5[%c0_54, %c2_55, %c0_56] : memref<2x8x32xf32, #tpu.memory_space<vmem>>, vector<2x1x32xf32>
    %172 = vector.shape_cast %171 : vector<2x1x32xf32> to vector<2x32xf32>
    %173 = vector.shape_cast %170 : vector<2x32xf32> to vector<2x1x32xf32>
    tpu.vector_store %arg5[%c0_54, %c2_55, %c0_56], %173 {strides = array<i32>} : memref<2x8x32xf32, #tpu.memory_space<vmem>>, vector<2x1x32xf32>,
    %c0_57 = arith.constant 0 : index
    %c5 = arith.constant 5 : index
    %c0_58 = arith.constant 0 : index
    %174 = vector.load %arg2[%c0_57, %c5, %c0_58] : memref<2x8x128xf32, #tpu.memory_space<vmem>>, vector<2x1x128xf32>
    %175 = vector.shape_cast %174 : vector<2x1x128xf32> to vector<2x128xf32>
    %176 = arith.truncf %137 : vector<2x32xf32> to vector<2x32xbf16>
    %cst_59 = arith.constant dense<0.000000e+00> : vector<2x128xf32>
    %177 = tpu.matmul %176, %4, %cst_59 {dimension_numbers = #tpu.dot_dimension_numbers<[1], [0], [0], [1], [0, 0, 1, 1], [], []>} : vector<2x32xbf16>, vector<32x128xbf16>, vector<2x128xf32> -> vector<2x128xf32>
    %178 = arith.addf %175, %177 : vector<2x128xf32>
    %179 = vector.extract_strided_slice %178 {offsets = [0, 0], sizes = [2, 32], strides = [1, 1]} : vector<2x128xf32> to vector<2x32xf32>
    %180 = arith.negf %179 : vector<2x32xf32>
    %181 = math.exp %180 : vector<2x32xf32>
    %cst_60 = arith.constant 1.000000e+00 : f32
    %182 = vector.broadcast %cst_60 : f32 to vector<2x32xf32>
    %183 = arith.addf %182, %181 : vector<2x32xf32>
    %184 = arith.divf %182, %183 : vector<2x32xf32>
    %185 = vector.extract_strided_slice %178 {offsets = [0, 32], sizes = [2, 32], strides = [1, 1]} : vector<2x128xf32> to vector<2x32xf32>
    %186 = arith.negf %185 : vector<2x32xf32>
    %187 = math.exp %186 : vector<2x32xf32>
    %cst_61 = arith.constant 1.000000e+00 : f32
    %188 = vector.broadcast %cst_61 : f32 to vector<2x32xf32>
    %189 = arith.addf %188, %187 : vector<2x32xf32>
    %190 = arith.divf %188, %189 : vector<2x32xf32>
    %191 = vector.extract_strided_slice %178 {offsets = [0, 64], sizes = [2, 32], strides = [1, 1]} : vector<2x128xf32> to vector<2x32xf32>
    %192 = math.tanh %191 : vector<2x32xf32>
    %193 = vector.extract_strided_slice %178 {offsets = [0, 96], sizes = [2, 32], strides = [1, 1]} : vector<2x128xf32> to vector<2x32xf32>
    %194 = arith.negf %193 : vector<2x32xf32>
    %195 = math.exp %194 : vector<2x32xf32>
    %cst_62 = arith.constant 1.000000e+00 : f32
    %196 = vector.broadcast %cst_62 : f32 to vector<2x32xf32>
    %197 = arith.addf %196, %195 : vector<2x32xf32>
    %198 = arith.divf %196, %197 : vector<2x32xf32>
    %199 = arith.mulf %190, %135 : vector<2x32xf32>
    %200 = arith.mulf %184, %192 : vector<2x32xf32>
    %201 = arith.addf %199, %200 : vector<2x32xf32>
    %202 = math.tanh %201 : vector<2x32xf32>
    %203 = arith.mulf %198, %202 : vector<2x32xf32>
    %c0_63 = arith.constant 0 : index
    %c5_64 = arith.constant 5 : index
    %c0_65 = arith.constant 0 : index
    %204 = vector.load %arg6[%c0_63, %c5_64, %c0_65] : memref<2x8x32xf32, #tpu.memory_space<vmem>>, vector<2x1x32xf32>
    %205 = vector.shape_cast %204 : vector<2x1x32xf32> to vector<2x32xf32>
    %206 = vector.shape_cast %203 : vector<2x32xf32> to vector<2x1x32xf32>
    tpu.vector_store %arg6[%c0_63, %c5_64, %c0_65], %206 {strides = array<i32>} : memref<2x8x32xf32, #tpu.memory_space<vmem>>, vector<2x1x32xf32>,
    %c0_66 = arith.constant 0 : index
    %c3 = arith.constant 3 : index
    %c0_67 = arith.constant 0 : index
    %207 = vector.load %arg1[%c0_66, %c3, %c0_67] : memref<2x8x128xf32, #tpu.memory_space<vmem>>, vector<2x1x128xf32>
    %208 = vector.shape_cast %207 : vector<2x1x128xf32> to vector<2x128xf32>
    %209 = arith.truncf %170 : vector<2x32xf32> to vector<2x32xbf16>
    %cst_68 = arith.constant dense<0.000000e+00> : vector<2x128xf32>
    %210 = tpu.matmul %209, %3, %cst_68 {dimension_numbers = #tpu.dot_dimension_numbers<[1], [0], [0], [1], [0, 0, 1, 1], [], []>} : vector<2x32xbf16>, vector<32x128xbf16>, vector<2x128xf32> -> vector<2x128xf32>
    %211 = arith.addf %208, %210 : vector<2x128xf32>
    %212 = vector.extract_strided_slice %211 {offsets = [0, 0], sizes = [2, 32], strides = [1, 1]} : vector<2x128xf32> to vector<2x32xf32>
    %213 = arith.negf %212 : vector<2x32xf32>
    %214 = math.exp %213 : vector<2x32xf32>
    %cst_69 = arith.constant 1.000000e+00 : f32
    %215 = vector.broadcast %cst_69 : f32 to vector<2x32xf32>
    %216 = arith.addf %215, %214 : vector<2x32xf32>
    %217 = arith.divf %215, %216 : vector<2x32xf32>
    %218 = vector.extract_strided_slice %211 {offsets = [0, 32], sizes = [2, 32], strides = [1, 1]} : vector<2x128xf32> to vector<2x32xf32>
    %219 = arith.negf %218 : vector<2x32xf32>
    %220 = math.exp %219 : vector<2x32xf32>
    %cst_70 = arith.constant 1.000000e+00 : f32
    %221 = vector.broadcast %cst_70 : f32 to vector<2x32xf32>
    %222 = arith.addf %221, %220 : vector<2x32xf32>
    %223 = arith.divf %221, %222 : vector<2x32xf32>
    %224 = vector.extract_strided_slice %211 {offsets = [0, 64], sizes = [2, 32], strides = [1, 1]} : vector<2x128xf32> to vector<2x32xf32>
    %225 = math.tanh %224 : vector<2x32xf32>
    %226 = vector.extract_strided_slice %211 {offsets = [0, 96], sizes = [2, 32], strides = [1, 1]} : vector<2x128xf32> to vector<2x32xf32>
    %227 = arith.negf %226 : vector<2x32xf32>
    %228 = math.exp %227 : vector<2x32xf32>
    %cst_71 = arith.constant 1.000000e+00 : f32
    %229 = vector.broadcast %cst_71 : f32 to vector<2x32xf32>
    %230 = arith.addf %229, %228 : vector<2x32xf32>
    %231 = arith.divf %229, %230 : vector<2x32xf32>
    %232 = arith.mulf %223, %168 : vector<2x32xf32>
    %233 = arith.mulf %217, %225 : vector<2x32xf32>
    %234 = arith.addf %232, %233 : vector<2x32xf32>
    %235 = math.tanh %234 : vector<2x32xf32>
    %236 = arith.mulf %231, %235 : vector<2x32xf32>
    %c0_72 = arith.constant 0 : index
    %c3_73 = arith.constant 3 : index
    %c0_74 = arith.constant 0 : index
    %237 = vector.load %arg5[%c0_72, %c3_73, %c0_74] : memref<2x8x32xf32, #tpu.memory_space<vmem>>, vector<2x1x32xf32>
    %238 = vector.shape_cast %237 : vector<2x1x32xf32> to vector<2x32xf32>
    %239 = vector.shape_cast %236 : vector<2x32xf32> to vector<2x1x32xf32>
    tpu.vector_store %arg5[%c0_72, %c3_73, %c0_74], %239 {strides = array<i32>} : memref<2x8x32xf32, #tpu.memory_space<vmem>>, vector<2x1x32xf32>,
    %c0_75 = arith.constant 0 : index
    %c4 = arith.constant 4 : index
    %c0_76 = arith.constant 0 : index
    %240 = vector.load %arg2[%c0_75, %c4, %c0_76] : memref<2x8x128xf32, #tpu.memory_space<vmem>>, vector<2x1x128xf32>
    %241 = vector.shape_cast %240 : vector<2x1x128xf32> to vector<2x128xf32>
    %242 = arith.truncf %203 : vector<2x32xf32> to vector<2x32xbf16>
    %cst_77 = arith.constant dense<0.000000e+00> : vector<2x128xf32>
    %243 = tpu.matmul %242, %4, %cst_77 {dimension_numbers = #tpu.dot_dimension_numbers<[1], [0], [0], [1], [0, 0, 1, 1], [], []>} : vector<2x32xbf16>, vector<32x128xbf16>, vector<2x128xf32> -> vector<2x128xf32>
    %244 = arith.addf %241, %243 : vector<2x128xf32>
    %245 = vector.extract_strided_slice %244 {offsets = [0, 0], sizes = [2, 32], strides = [1, 1]} : vector<2x128xf32> to vector<2x32xf32>
    %246 = arith.negf %245 : vector<2x32xf32>
    %247 = math.exp %246 : vector<2x32xf32>
    %cst_78 = arith.constant 1.000000e+00 : f32
    %248 = vector.broadcast %cst_78 : f32 to vector<2x32xf32>
    %249 = arith.addf %248, %247 : vector<2x32xf32>
    %250 = arith.divf %248, %249 : vector<2x32xf32>
    %251 = vector.extract_strided_slice %244 {offsets = [0, 32], sizes = [2, 32], strides = [1, 1]} : vector<2x128xf32> to vector<2x32xf32>
    %252 = arith.negf %251 : vector<2x32xf32>
    %253 = math.exp %252 : vector<2x32xf32>
    %cst_79 = arith.constant 1.000000e+00 : f32
    %254 = vector.broadcast %cst_79 : f32 to vector<2x32xf32>
    %255 = arith.addf %254, %253 : vector<2x32xf32>
    %256 = arith.divf %254, %255 : vector<2x32xf32>
    %257 = vector.extract_strided_slice %244 {offsets = [0, 64], sizes = [2, 32], strides = [1, 1]} : vector<2x128xf32> to vector<2x32xf32>
    %258 = math.tanh %257 : vector<2x32xf32>
    %259 = vector.extract_strided_slice %244 {offsets = [0, 96], sizes = [2, 32], strides = [1, 1]} : vector<2x128xf32> to vector<2x32xf32>
    %260 = arith.negf %259 : vector<2x32xf32>
    %261 = math.exp %260 : vector<2x32xf32>
    %cst_80 = arith.constant 1.000000e+00 : f32
    %262 = vector.broadcast %cst_80 : f32 to vector<2x32xf32>
    %263 = arith.addf %262, %261 : vector<2x32xf32>
    %264 = arith.divf %262, %263 : vector<2x32xf32>
    %265 = arith.mulf %256, %201 : vector<2x32xf32>
    %266 = arith.mulf %250, %258 : vector<2x32xf32>
    %267 = arith.addf %265, %266 : vector<2x32xf32>
    %268 = math.tanh %267 : vector<2x32xf32>
    %269 = arith.mulf %264, %268 : vector<2x32xf32>
    %c0_81 = arith.constant 0 : index
    %c4_82 = arith.constant 4 : index
    %c0_83 = arith.constant 0 : index
    %270 = vector.load %arg6[%c0_81, %c4_82, %c0_83] : memref<2x8x32xf32, #tpu.memory_space<vmem>>, vector<2x1x32xf32>
    %271 = vector.shape_cast %270 : vector<2x1x32xf32> to vector<2x32xf32>
    %272 = vector.shape_cast %269 : vector<2x32xf32> to vector<2x1x32xf32>
    tpu.vector_store %arg6[%c0_81, %c4_82, %c0_83], %272 {strides = array<i32>} : memref<2x8x32xf32, #tpu.memory_space<vmem>>, vector<2x1x32xf32>,
    %c0_84 = arith.constant 0 : index
    %c4_85 = arith.constant 4 : index
    %c0_86 = arith.constant 0 : index
    %273 = vector.load %arg1[%c0_84, %c4_85, %c0_86] : memref<2x8x128xf32, #tpu.memory_space<vmem>>, vector<2x1x128xf32>
    %274 = vector.shape_cast %273 : vector<2x1x128xf32> to vector<2x128xf32>
    %275 = arith.truncf %236 : vector<2x32xf32> to vector<2x32xbf16>
    %cst_87 = arith.constant dense<0.000000e+00> : vector<2x128xf32>
    %276 = tpu.matmul %275, %3, %cst_87 {dimension_numbers = #tpu.dot_dimension_numbers<[1], [0], [0], [1], [0, 0, 1, 1], [], []>} : vector<2x32xbf16>, vector<32x128xbf16>, vector<2x128xf32> -> vector<2x128xf32>
    %277 = arith.addf %274, %276 : vector<2x128xf32>
    %278 = vector.extract_strided_slice %277 {offsets = [0, 0], sizes = [2, 32], strides = [1, 1]} : vector<2x128xf32> to vector<2x32xf32>
    %279 = arith.negf %278 : vector<2x32xf32>
    %280 = math.exp %279 : vector<2x32xf32>
    %cst_88 = arith.constant 1.000000e+00 : f32
    %281 = vector.broadcast %cst_88 : f32 to vector<2x32xf32>
    %282 = arith.addf %281, %280 : vector<2x32xf32>
    %283 = arith.divf %281, %282 : vector<2x32xf32>
    %284 = vector.extract_strided_slice %277 {offsets = [0, 32], sizes = [2, 32], strides = [1, 1]} : vector<2x128xf32> to vector<2x32xf32>
    %285 = arith.negf %284 : vector<2x32xf32>
    %286 = math.exp %285 : vector<2x32xf32>
    %cst_89 = arith.constant 1.000000e+00 : f32
    %287 = vector.broadcast %cst_89 : f32 to vector<2x32xf32>
    %288 = arith.addf %287, %286 : vector<2x32xf32>
    %289 = arith.divf %287, %288 : vector<2x32xf32>
    %290 = vector.extract_strided_slice %277 {offsets = [0, 64], sizes = [2, 32], strides = [1, 1]} : vector<2x128xf32> to vector<2x32xf32>
    %291 = math.tanh %290 : vector<2x32xf32>
    %292 = vector.extract_strided_slice %277 {offsets = [0, 96], sizes = [2, 32], strides = [1, 1]} : vector<2x128xf32> to vector<2x32xf32>
    %293 = arith.negf %292 : vector<2x32xf32>
    %294 = math.exp %293 : vector<2x32xf32>
    %cst_90 = arith.constant 1.000000e+00 : f32
    %295 = vector.broadcast %cst_90 : f32 to vector<2x32xf32>
    %296 = arith.addf %295, %294 : vector<2x32xf32>
    %297 = arith.divf %295, %296 : vector<2x32xf32>
    %298 = arith.mulf %289, %234 : vector<2x32xf32>
    %299 = arith.mulf %283, %291 : vector<2x32xf32>
    %300 = arith.addf %298, %299 : vector<2x32xf32>
    %301 = math.tanh %300 : vector<2x32xf32>
    %302 = arith.mulf %297, %301 : vector<2x32xf32>
    %c0_91 = arith.constant 0 : index
    %c4_92 = arith.constant 4 : index
    %c0_93 = arith.constant 0 : index
    %303 = vector.load %arg5[%c0_91, %c4_92, %c0_93] : memref<2x8x32xf32, #tpu.memory_space<vmem>>, vector<2x1x32xf32>
    %304 = vector.shape_cast %303 : vector<2x1x32xf32> to vector<2x32xf32>
    %305 = vector.shape_cast %302 : vector<2x32xf32> to vector<2x1x32xf32>
    tpu.vector_store %arg5[%c0_91, %c4_92, %c0_93], %305 {strides = array<i32>} : memref<2x8x32xf32, #tpu.memory_space<vmem>>, vector<2x1x32xf32>,
    %c0_94 = arith.constant 0 : index
    %c3_95 = arith.constant 3 : index
    %c0_96 = arith.constant 0 : index
    %306 = vector.load %arg2[%c0_94, %c3_95, %c0_96] : memref<2x8x128xf32, #tpu.memory_space<vmem>>, vector<2x1x128xf32>
    %307 = vector.shape_cast %306 : vector<2x1x128xf32> to vector<2x128xf32>
    %308 = arith.truncf %269 : vector<2x32xf32> to vector<2x32xbf16>
    %cst_97 = arith.constant dense<0.000000e+00> : vector<2x128xf32>
    %309 = tpu.matmul %308, %4, %cst_97 {dimension_numbers = #tpu.dot_dimension_numbers<[1], [0], [0], [1], [0, 0, 1, 1], [], []>} : vector<2x32xbf16>, vector<32x128xbf16>, vector<2x128xf32> -> vector<2x128xf32>
    %310 = arith.addf %307, %309 : vector<2x128xf32>
    %311 = vector.extract_strided_slice %310 {offsets = [0, 0], sizes = [2, 32], strides = [1, 1]} : vector<2x128xf32> to vector<2x32xf32>
    %312 = arith.negf %311 : vector<2x32xf32>
    %313 = math.exp %312 : vector<2x32xf32>
    %cst_98 = arith.constant 1.000000e+00 : f32
    %314 = vector.broadcast %cst_98 : f32 to vector<2x32xf32>
    %315 = arith.addf %314, %313 : vector<2x32xf32>
    %316 = arith.divf %314, %315 : vector<2x32xf32>
    %317 = vector.extract_strided_slice %310 {offsets = [0, 32], sizes = [2, 32], strides = [1, 1]} : vector<2x128xf32> to vector<2x32xf32>
    %318 = arith.negf %317 : vector<2x32xf32>
    %319 = math.exp %318 : vector<2x32xf32>
    %cst_99 = arith.constant 1.000000e+00 : f32
    %320 = vector.broadcast %cst_99 : f32 to vector<2x32xf32>
    %321 = arith.addf %320, %319 : vector<2x32xf32>
    %322 = arith.divf %320, %321 : vector<2x32xf32>
    %323 = vector.extract_strided_slice %310 {offsets = [0, 64], sizes = [2, 32], strides = [1, 1]} : vector<2x128xf32> to vector<2x32xf32>
    %324 = math.tanh %323 : vector<2x32xf32>
    %325 = vector.extract_strided_slice %310 {offsets = [0, 96], sizes = [2, 32], strides = [1, 1]} : vector<2x128xf32> to vector<2x32xf32>
    %326 = arith.negf %325 : vector<2x32xf32>
    %327 = math.exp %326 : vector<2x32xf32>
    %cst_100 = arith.constant 1.000000e+00 : f32
    %328 = vector.broadcast %cst_100 : f32 to vector<2x32xf32>
    %329 = arith.addf %328, %327 : vector<2x32xf32>
    %330 = arith.divf %328, %329 : vector<2x32xf32>
    %331 = arith.mulf %322, %267 : vector<2x32xf32>
    %332 = arith.mulf %316, %324 : vector<2x32xf32>
    %333 = arith.addf %331, %332 : vector<2x32xf32>
    %334 = math.tanh %333 : vector<2x32xf32>
    %335 = arith.mulf %330, %334 : vector<2x32xf32>
    %c0_101 = arith.constant 0 : index
    %c3_102 = arith.constant 3 : index
    %c0_103 = arith.constant 0 : index
    %336 = vector.load %arg6[%c0_101, %c3_102, %c0_103] : memref<2x8x32xf32, #tpu.memory_space<vmem>>, vector<2x1x32xf32>
    %337 = vector.shape_cast %336 : vector<2x1x32xf32> to vector<2x32xf32>
    %338 = vector.shape_cast %335 : vector<2x32xf32> to vector<2x1x32xf32>
    tpu.vector_store %arg6[%c0_101, %c3_102, %c0_103], %338 {strides = array<i32>} : memref<2x8x32xf32, #tpu.memory_space<vmem>>, vector<2x1x32xf32>,
    %c0_104 = arith.constant 0 : index
    %c5_105 = arith.constant 5 : index
    %c0_106 = arith.constant 0 : index
    %339 = vector.load %arg1[%c0_104, %c5_105, %c0_106] : memref<2x8x128xf32, #tpu.memory_space<vmem>>, vector<2x1x128xf32>
    %340 = vector.shape_cast %339 : vector<2x1x128xf32> to vector<2x128xf32>
    %341 = arith.truncf %302 : vector<2x32xf32> to vector<2x32xbf16>
    %cst_107 = arith.constant dense<0.000000e+00> : vector<2x128xf32>
    %342 = tpu.matmul %341, %3, %cst_107 {dimension_numbers = #tpu.dot_dimension_numbers<[1], [0], [0], [1], [0, 0, 1, 1], [], []>} : vector<2x32xbf16>, vector<32x128xbf16>, vector<2x128xf32> -> vector<2x128xf32>
    %343 = arith.addf %340, %342 : vector<2x128xf32>
    %344 = vector.extract_strided_slice %343 {offsets = [0, 0], sizes = [2, 32], strides = [1, 1]} : vector<2x128xf32> to vector<2x32xf32>
    %345 = arith.negf %344 : vector<2x32xf32>
    %346 = math.exp %345 : vector<2x32xf32>
    %cst_108 = arith.constant 1.000000e+00 : f32
    %347 = vector.broadcast %cst_108 : f32 to vector<2x32xf32>
    %348 = arith.addf %347, %346 : vector<2x32xf32>
    %349 = arith.divf %347, %348 : vector<2x32xf32>
    %350 = vector.extract_strided_slice %343 {offsets = [0, 32], sizes = [2, 32], strides = [1, 1]} : vector<2x128xf32> to vector<2x32xf32>
    %351 = arith.negf %350 : vector<2x32xf32>
    %352 = math.exp %351 : vector<2x32xf32>
    %cst_109 = arith.constant 1.000000e+00 : f32
    %353 = vector.broadcast %cst_109 : f32 to vector<2x32xf32>
    %354 = arith.addf %353, %352 : vector<2x32xf32>
    %355 = arith.divf %353, %354 : vector<2x32xf32>
    %356 = vector.extract_strided_slice %343 {offsets = [0, 64], sizes = [2, 32], strides = [1, 1]} : vector<2x128xf32> to vector<2x32xf32>
    %357 = math.tanh %356 : vector<2x32xf32>
    %358 = vector.extract_strided_slice %343 {offsets = [0, 96], sizes = [2, 32], strides = [1, 1]} : vector<2x128xf32> to vector<2x32xf32>
    %359 = arith.negf %358 : vector<2x32xf32>
    %360 = math.exp %359 : vector<2x32xf32>
    %cst_110 = arith.constant 1.000000e+00 : f32
    %361 = vector.broadcast %cst_110 : f32 to vector<2x32xf32>
    %362 = arith.addf %361, %360 : vector<2x32xf32>
    %363 = arith.divf %361, %362 : vector<2x32xf32>
    %364 = arith.mulf %355, %300 : vector<2x32xf32>
    %365 = arith.mulf %349, %357 : vector<2x32xf32>
    %366 = arith.addf %364, %365 : vector<2x32xf32>
    %367 = math.tanh %366 : vector<2x32xf32>
    %368 = arith.mulf %363, %367 : vector<2x32xf32>
    %c0_111 = arith.constant 0 : index
    %c5_112 = arith.constant 5 : index
    %c0_113 = arith.constant 0 : index
    %369 = vector.load %arg5[%c0_111, %c5_112, %c0_113] : memref<2x8x32xf32, #tpu.memory_space<vmem>>, vector<2x1x32xf32>
    %370 = vector.shape_cast %369 : vector<2x1x32xf32> to vector<2x32xf32>
    %371 = vector.shape_cast %368 : vector<2x32xf32> to vector<2x1x32xf32>
    tpu.vector_store %arg5[%c0_111, %c5_112, %c0_113], %371 {strides = array<i32>} : memref<2x8x32xf32, #tpu.memory_space<vmem>>, vector<2x1x32xf32>,
    %c0_114 = arith.constant 0 : index
    %c2_115 = arith.constant 2 : index
    %c0_116 = arith.constant 0 : index
    %372 = vector.load %arg2[%c0_114, %c2_115, %c0_116] : memref<2x8x128xf32, #tpu.memory_space<vmem>>, vector<2x1x128xf32>
    %373 = vector.shape_cast %372 : vector<2x1x128xf32> to vector<2x128xf32>
    %374 = arith.truncf %335 : vector<2x32xf32> to vector<2x32xbf16>
    %cst_117 = arith.constant dense<0.000000e+00> : vector<2x128xf32>
    %375 = tpu.matmul %374, %4, %cst_117 {dimension_numbers = #tpu.dot_dimension_numbers<[1], [0], [0], [1], [0, 0, 1, 1], [], []>} : vector<2x32xbf16>, vector<32x128xbf16>, vector<2x128xf32> -> vector<2x128xf32>
    %376 = arith.addf %373, %375 : vector<2x128xf32>
    %377 = vector.extract_strided_slice %376 {offsets = [0, 0], sizes = [2, 32], strides = [1, 1]} : vector<2x128xf32> to vector<2x32xf32>
    %378 = arith.negf %377 : vector<2x32xf32>
    %379 = math.exp %378 : vector<2x32xf32>
    %cst_118 = arith.constant 1.000000e+00 : f32
    %380 = vector.broadcast %cst_118 : f32 to vector<2x32xf32>
    %381 = arith.addf %380, %379 : vector<2x32xf32>
    %382 = arith.divf %380, %381 : vector<2x32xf32>
    %383 = vector.extract_strided_slice %376 {offsets = [0, 32], sizes = [2, 32], strides = [1, 1]} : vector<2x128xf32> to vector<2x32xf32>
    %384 = arith.negf %383 : vector<2x32xf32>
    %385 = math.exp %384 : vector<2x32xf32>
    %cst_119 = arith.constant 1.000000e+00 : f32
    %386 = vector.broadcast %cst_119 : f32 to vector<2x32xf32>
    %387 = arith.addf %386, %385 : vector<2x32xf32>
    %388 = arith.divf %386, %387 : vector<2x32xf32>
    %389 = vector.extract_strided_slice %376 {offsets = [0, 64], sizes = [2, 32], strides = [1, 1]} : vector<2x128xf32> to vector<2x32xf32>
    %390 = math.tanh %389 : vector<2x32xf32>
    %391 = vector.extract_strided_slice %376 {offsets = [0, 96], sizes = [2, 32], strides = [1, 1]} : vector<2x128xf32> to vector<2x32xf32>
    %392 = arith.negf %391 : vector<2x32xf32>
    %393 = math.exp %392 : vector<2x32xf32>
    %cst_120 = arith.constant 1.000000e+00 : f32
    %394 = vector.broadcast %cst_120 : f32 to vector<2x32xf32>
    %395 = arith.addf %394, %393 : vector<2x32xf32>
    %396 = arith.divf %394, %395 : vector<2x32xf32>
    %397 = arith.mulf %388, %333 : vector<2x32xf32>
    %398 = arith.mulf %382, %390 : vector<2x32xf32>
    %399 = arith.addf %397, %398 : vector<2x32xf32>
    %400 = math.tanh %399 : vector<2x32xf32>
    %401 = arith.mulf %396, %400 : vector<2x32xf32>
    %c0_121 = arith.constant 0 : index
    %c2_122 = arith.constant 2 : index
    %c0_123 = arith.constant 0 : index
    %402 = vector.load %arg6[%c0_121, %c2_122, %c0_123] : memref<2x8x32xf32, #tpu.memory_space<vmem>>, vector<2x1x32xf32>
    %403 = vector.shape_cast %402 : vector<2x1x32xf32> to vector<2x32xf32>
    %404 = vector.shape_cast %401 : vector<2x32xf32> to vector<2x1x32xf32>
    tpu.vector_store %arg6[%c0_121, %c2_122, %c0_123], %404 {strides = array<i32>} : memref<2x8x32xf32, #tpu.memory_space<vmem>>, vector<2x1x32xf32>,
    %c0_124 = arith.constant 0 : index
    %c6_125 = arith.constant 6 : index
    %c0_126 = arith.constant 0 : index
    %405 = vector.load %arg1[%c0_124, %c6_125, %c0_126] : memref<2x8x128xf32, #tpu.memory_space<vmem>>, vector<2x1x128xf32>
    %406 = vector.shape_cast %405 : vector<2x1x128xf32> to vector<2x128xf32>
    %407 = arith.truncf %368 : vector<2x32xf32> to vector<2x32xbf16>
    %cst_127 = arith.constant dense<0.000000e+00> : vector<2x128xf32>
    %408 = tpu.matmul %407, %3, %cst_127 {dimension_numbers = #tpu.dot_dimension_numbers<[1], [0], [0], [1], [0, 0, 1, 1], [], []>} : vector<2x32xbf16>, vector<32x128xbf16>, vector<2x128xf32> -> vector<2x128xf32>
    %409 = arith.addf %406, %408 : vector<2x128xf32>
    %410 = vector.extract_strided_slice %409 {offsets = [0, 0], sizes = [2, 32], strides = [1, 1]} : vector<2x128xf32> to vector<2x32xf32>
    %411 = arith.negf %410 : vector<2x32xf32>
    %412 = math.exp %411 : vector<2x32xf32>
    %cst_128 = arith.constant 1.000000e+00 : f32
    %413 = vector.broadcast %cst_128 : f32 to vector<2x32xf32>
    %414 = arith.addf %413, %412 : vector<2x32xf32>
    %415 = arith.divf %413, %414 : vector<2x32xf32>
    %416 = vector.extract_strided_slice %409 {offsets = [0, 32], sizes = [2, 32], strides = [1, 1]} : vector<2x128xf32> to vector<2x32xf32>
    %417 = arith.negf %416 : vector<2x32xf32>
    %418 = math.exp %417 : vector<2x32xf32>
    %cst_129 = arith.constant 1.000000e+00 : f32
    %419 = vector.broadcast %cst_129 : f32 to vector<2x32xf32>
    %420 = arith.addf %419, %418 : vector<2x32xf32>
    %421 = arith.divf %419, %420 : vector<2x32xf32>
    %422 = vector.extract_strided_slice %409 {offsets = [0, 64], sizes = [2, 32], strides = [1, 1]} : vector<2x128xf32> to vector<2x32xf32>
    %423 = math.tanh %422 : vector<2x32xf32>
    %424 = vector.extract_strided_slice %409 {offsets = [0, 96], sizes = [2, 32], strides = [1, 1]} : vector<2x128xf32> to vector<2x32xf32>
    %425 = arith.negf %424 : vector<2x32xf32>
    %426 = math.exp %425 : vector<2x32xf32>
    %cst_130 = arith.constant 1.000000e+00 : f32
    %427 = vector.broadcast %cst_130 : f32 to vector<2x32xf32>
    %428 = arith.addf %427, %426 : vector<2x32xf32>
    %429 = arith.divf %427, %428 : vector<2x32xf32>
    %430 = arith.mulf %421, %366 : vector<2x32xf32>
    %431 = arith.mulf %415, %423 : vector<2x32xf32>
    %432 = arith.addf %430, %431 : vector<2x32xf32>
    %433 = math.tanh %432 : vector<2x32xf32>
    %434 = arith.mulf %429, %433 : vector<2x32xf32>
    %c0_131 = arith.constant 0 : index
    %c6_132 = arith.constant 6 : index
    %c0_133 = arith.constant 0 : index
    %435 = vector.load %arg5[%c0_131, %c6_132, %c0_133] : memref<2x8x32xf32, #tpu.memory_space<vmem>>, vector<2x1x32xf32>
    %436 = vector.shape_cast %435 : vector<2x1x32xf32> to vector<2x32xf32>
    %437 = vector.shape_cast %434 : vector<2x32xf32> to vector<2x1x32xf32>
    tpu.vector_store %arg5[%c0_131, %c6_132, %c0_133], %437 {strides = array<i32>} : memref<2x8x32xf32, #tpu.memory_space<vmem>>, vector<2x1x32xf32>,
    %c0_134 = arith.constant 0 : index
    %c1_135 = arith.constant 1 : index
    %c0_136 = arith.constant 0 : index
    %438 = vector.load %arg2[%c0_134, %c1_135, %c0_136] : memref<2x8x128xf32, #tpu.memory_space<vmem>>, vector<2x1x128xf32>
    %439 = vector.shape_cast %438 : vector<2x1x128xf32> to vector<2x128xf32>
    %440 = arith.truncf %401 : vector<2x32xf32> to vector<2x32xbf16>
    %cst_137 = arith.constant dense<0.000000e+00> : vector<2x128xf32>
    %441 = tpu.matmul %440, %4, %cst_137 {dimension_numbers = #tpu.dot_dimension_numbers<[1], [0], [0], [1], [0, 0, 1, 1], [], []>} : vector<2x32xbf16>, vector<32x128xbf16>, vector<2x128xf32> -> vector<2x128xf32>
    %442 = arith.addf %439, %441 : vector<2x128xf32>
    %443 = vector.extract_strided_slice %442 {offsets = [0, 0], sizes = [2, 32], strides = [1, 1]} : vector<2x128xf32> to vector<2x32xf32>
    %444 = arith.negf %443 : vector<2x32xf32>
    %445 = math.exp %444 : vector<2x32xf32>
    %cst_138 = arith.constant 1.000000e+00 : f32
    %446 = vector.broadcast %cst_138 : f32 to vector<2x32xf32>
    %447 = arith.addf %446, %445 : vector<2x32xf32>
    %448 = arith.divf %446, %447 : vector<2x32xf32>
    %449 = vector.extract_strided_slice %442 {offsets = [0, 32], sizes = [2, 32], strides = [1, 1]} : vector<2x128xf32> to vector<2x32xf32>
    %450 = arith.negf %449 : vector<2x32xf32>
    %451 = math.exp %450 : vector<2x32xf32>
    %cst_139 = arith.constant 1.000000e+00 : f32
    %452 = vector.broadcast %cst_139 : f32 to vector<2x32xf32>
    %453 = arith.addf %452, %451 : vector<2x32xf32>
    %454 = arith.divf %452, %453 : vector<2x32xf32>
    %455 = vector.extract_strided_slice %442 {offsets = [0, 64], sizes = [2, 32], strides = [1, 1]} : vector<2x128xf32> to vector<2x32xf32>
    %456 = math.tanh %455 : vector<2x32xf32>
    %457 = vector.extract_strided_slice %442 {offsets = [0, 96], sizes = [2, 32], strides = [1, 1]} : vector<2x128xf32> to vector<2x32xf32>
    %458 = arith.negf %457 : vector<2x32xf32>
    %459 = math.exp %458 : vector<2x32xf32>
    %cst_140 = arith.constant 1.000000e+00 : f32
    %460 = vector.broadcast %cst_140 : f32 to vector<2x32xf32>
    %461 = arith.addf %460, %459 : vector<2x32xf32>
    %462 = arith.divf %460, %461 : vector<2x32xf32>
    %463 = arith.mulf %454, %399 : vector<2x32xf32>
    %464 = arith.mulf %448, %456 : vector<2x32xf32>
    %465 = arith.addf %463, %464 : vector<2x32xf32>
    %466 = math.tanh %465 : vector<2x32xf32>
    %467 = arith.mulf %462, %466 : vector<2x32xf32>
    %c0_141 = arith.constant 0 : index
    %c1_142 = arith.constant 1 : index
    %c0_143 = arith.constant 0 : index
    %468 = vector.load %arg6[%c0_141, %c1_142, %c0_143] : memref<2x8x32xf32, #tpu.memory_space<vmem>>, vector<2x1x32xf32>
    %469 = vector.shape_cast %468 : vector<2x1x32xf32> to vector<2x32xf32>
    %470 = vector.shape_cast %467 : vector<2x32xf32> to vector<2x1x32xf32>
    tpu.vector_store %arg6[%c0_141, %c1_142, %c0_143], %470 {strides = array<i32>} : memref<2x8x32xf32, #tpu.memory_space<vmem>>, vector<2x1x32xf32>,
    %c0_144 = arith.constant 0 : index
    %c7_145 = arith.constant 7 : index
    %c0_146 = arith.constant 0 : index
    %471 = vector.load %arg1[%c0_144, %c7_145, %c0_146] : memref<2x8x128xf32, #tpu.memory_space<vmem>>, vector<2x1x128xf32>
    %472 = vector.shape_cast %471 : vector<2x1x128xf32> to vector<2x128xf32>
    %473 = arith.truncf %434 : vector<2x32xf32> to vector<2x32xbf16>
    %cst_147 = arith.constant dense<0.000000e+00> : vector<2x128xf32>
    %474 = tpu.matmul %473, %3, %cst_147 {dimension_numbers = #tpu.dot_dimension_numbers<[1], [0], [0], [1], [0, 0, 1, 1], [], []>} : vector<2x32xbf16>, vector<32x128xbf16>, vector<2x128xf32> -> vector<2x128xf32>
    %475 = arith.addf %472, %474 : vector<2x128xf32>
    %476 = vector.extract_strided_slice %475 {offsets = [0, 0], sizes = [2, 32], strides = [1, 1]} : vector<2x128xf32> to vector<2x32xf32>
    %477 = arith.negf %476 : vector<2x32xf32>
    %478 = math.exp %477 : vector<2x32xf32>
    %cst_148 = arith.constant 1.000000e+00 : f32
    %479 = vector.broadcast %cst_148 : f32 to vector<2x32xf32>
    %480 = arith.addf %479, %478 : vector<2x32xf32>
    %481 = arith.divf %479, %480 : vector<2x32xf32>
    %482 = vector.extract_strided_slice %475 {offsets = [0, 32], sizes = [2, 32], strides = [1, 1]} : vector<2x128xf32> to vector<2x32xf32>
    %483 = arith.negf %482 : vector<2x32xf32>
    %484 = math.exp %483 : vector<2x32xf32>
    %cst_149 = arith.constant 1.000000e+00 : f32
    %485 = vector.broadcast %cst_149 : f32 to vector<2x32xf32>
    %486 = arith.addf %485, %484 : vector<2x32xf32>
    %487 = arith.divf %485, %486 : vector<2x32xf32>
    %488 = vector.extract_strided_slice %475 {offsets = [0, 64], sizes = [2, 32], strides = [1, 1]} : vector<2x128xf32> to vector<2x32xf32>
    %489 = math.tanh %488 : vector<2x32xf32>
    %490 = vector.extract_strided_slice %475 {offsets = [0, 96], sizes = [2, 32], strides = [1, 1]} : vector<2x128xf32> to vector<2x32xf32>
    %491 = arith.negf %490 : vector<2x32xf32>
    %492 = math.exp %491 : vector<2x32xf32>
    %cst_150 = arith.constant 1.000000e+00 : f32
    %493 = vector.broadcast %cst_150 : f32 to vector<2x32xf32>
    %494 = arith.addf %493, %492 : vector<2x32xf32>
    %495 = arith.divf %493, %494 : vector<2x32xf32>
    %496 = arith.mulf %487, %432 : vector<2x32xf32>
    %497 = arith.mulf %481, %489 : vector<2x32xf32>
    %498 = arith.addf %496, %497 : vector<2x32xf32>
    %499 = math.tanh %498 : vector<2x32xf32>
    %500 = arith.mulf %495, %499 : vector<2x32xf32>
    %c0_151 = arith.constant 0 : index
    %c7_152 = arith.constant 7 : index
    %c0_153 = arith.constant 0 : index
    %501 = vector.load %arg5[%c0_151, %c7_152, %c0_153] : memref<2x8x32xf32, #tpu.memory_space<vmem>>, vector<2x1x32xf32>
    %502 = vector.shape_cast %501 : vector<2x1x32xf32> to vector<2x32xf32>
    %503 = vector.shape_cast %500 : vector<2x32xf32> to vector<2x1x32xf32>
    tpu.vector_store %arg5[%c0_151, %c7_152, %c0_153], %503 {strides = array<i32>} : memref<2x8x32xf32, #tpu.memory_space<vmem>>, vector<2x1x32xf32>,
    %c0_154 = arith.constant 0 : index
    %c0_155 = arith.constant 0 : index
    %c0_156 = arith.constant 0 : index
    %504 = vector.load %arg2[%c0_154, %c0_155, %c0_156] : memref<2x8x128xf32, #tpu.memory_space<vmem>>, vector<2x1x128xf32>
    %505 = vector.shape_cast %504 : vector<2x1x128xf32> to vector<2x128xf32>
    %506 = arith.truncf %467 : vector<2x32xf32> to vector<2x32xbf16>
    %cst_157 = arith.constant dense<0.000000e+00> : vector<2x128xf32>
    %507 = tpu.matmul %506, %4, %cst_157 {dimension_numbers = #tpu.dot_dimension_numbers<[1], [0], [0], [1], [0, 0, 1, 1], [], []>} : vector<2x32xbf16>, vector<32x128xbf16>, vector<2x128xf32> -> vector<2x128xf32>
    %508 = arith.addf %505, %507 : vector<2x128xf32>
    %509 = vector.extract_strided_slice %508 {offsets = [0, 0], sizes = [2, 32], strides = [1, 1]} : vector<2x128xf32> to vector<2x32xf32>
    %510 = arith.negf %509 : vector<2x32xf32>
    %511 = math.exp %510 : vector<2x32xf32>
    %cst_158 = arith.constant 1.000000e+00 : f32
    %512 = vector.broadcast %cst_158 : f32 to vector<2x32xf32>
    %513 = arith.addf %512, %511 : vector<2x32xf32>
    %514 = arith.divf %512, %513 : vector<2x32xf32>
    %515 = vector.extract_strided_slice %508 {offsets = [0, 32], sizes = [2, 32], strides = [1, 1]} : vector<2x128xf32> to vector<2x32xf32>
    %516 = arith.negf %515 : vector<2x32xf32>
    %517 = math.exp %516 : vector<2x32xf32>
    %cst_159 = arith.constant 1.000000e+00 : f32
    %518 = vector.broadcast %cst_159 : f32 to vector<2x32xf32>
    %519 = arith.addf %518, %517 : vector<2x32xf32>
    %520 = arith.divf %518, %519 : vector<2x32xf32>
    %521 = vector.extract_strided_slice %508 {offsets = [0, 64], sizes = [2, 32], strides = [1, 1]} : vector<2x128xf32> to vector<2x32xf32>
    %522 = math.tanh %521 : vector<2x32xf32>
    %523 = vector.extract_strided_slice %508 {offsets = [0, 96], sizes = [2, 32], strides = [1, 1]} : vector<2x128xf32> to vector<2x32xf32>
    %524 = arith.negf %523 : vector<2x32xf32>
    %525 = math.exp %524 : vector<2x32xf32>
    %cst_160 = arith.constant 1.000000e+00 : f32
    %526 = vector.broadcast %cst_160 : f32 to vector<2x32xf32>
    %527 = arith.addf %526, %525 : vector<2x32xf32>
    %528 = arith.divf %526, %527 : vector<2x32xf32>
    %529 = arith.mulf %520, %465 : vector<2x32xf32>
    %530 = arith.mulf %514, %522 : vector<2x32xf32>
    %531 = arith.addf %529, %530 : vector<2x32xf32>
    %532 = math.tanh %531 : vector<2x32xf32>
    %533 = arith.mulf %528, %532 : vector<2x32xf32>
    %c0_161 = arith.constant 0 : index
    %c0_162 = arith.constant 0 : index
    %c0_163 = arith.constant 0 : index
    %534 = vector.load %arg6[%c0_161, %c0_162, %c0_163] : memref<2x8x32xf32, #tpu.memory_space<vmem>>, vector<2x1x32xf32>
    %535 = vector.shape_cast %534 : vector<2x1x32xf32> to vector<2x32xf32>
    %536 = vector.shape_cast %533 : vector<2x32xf32> to vector<2x1x32xf32>
    tpu.vector_store %arg6[%c0_161, %c0_162, %c0_163], %536 {strides = array<i32>} : memref<2x8x32xf32, #tpu.memory_space<vmem>>, vector<2x1x32xf32>,
    %c0_164 = arith.constant 0 : index
    %c0_165 = arith.constant 0 : index
    %537 = vector.load %arg7[%c0_164, %c0_165] : memref<2x32xf32, #tpu.memory_space<vmem>>, vector<2x32xf32>
    tpu.vector_store %arg7[%c0_164, %c0_165], %500 {strides = array<i32>} : memref<2x32xf32, #tpu.memory_space<vmem>>, vector<2x32xf32>,
    %c0_166 = arith.constant 0 : index
    %c0_167 = arith.constant 0 : index
    %538 = vector.load %arg8[%c0_166, %c0_167] : memref<2x32xf32, #tpu.memory_space<vmem>>, vector<2x32xf32>
    tpu.vector_store %arg8[%c0_166, %c0_167], %498 {strides = array<i32>} : memref<2x32xf32, #tpu.memory_space<vmem>>, vector<2x32xf32>,
    %c0_168 = arith.constant 0 : index
    %c0_169 = arith.constant 0 : index
    %539 = vector.load %arg9[%c0_168, %c0_169] : memref<2x32xf32, #tpu.memory_space<vmem>>, vector<2x32xf32>
    tpu.vector_store %arg9[%c0_168, %c0_169], %533 {strides = array<i32>} : memref<2x32xf32, #tpu.memory_space<vmem>>, vector<2x32xf32>,
    %c0_170 = arith.constant 0 : index
    %c0_171 = arith.constant 0 : index
    %540 = vector.load %arg10[%c0_170, %c0_171] : memref<2x32xf32, #tpu.memory_space<vmem>>, vector<2x32xf32>
    tpu.vector_store %arg10[%c0_170, %c0_171], %531 {strides = array<i32>} : memref<2x32xf32, #tpu.memory_space<vmem>>, vector<2x32xf32>,
    return
  }
  func.func @transform_0(%arg0: i32) -> (i32, i32, i32) {
    %c0_i32 = arith.constant 0 : i32
    %c0_i32_0 = arith.constant 0 : i32
    %c0_i32_1 = arith.constant 0 : i32
    return %c0_i32, %arg0, %c0_i32_0 : i32, i32, i32
  }
  func.func @transform_1(%arg0: i32) -> (i32, i32, i32) {
    %c0_i32 = arith.constant 0 : i32
    %0 = arith.subi %c0_i32, %arg0 : i32
    %c0_i32_0 = arith.constant 0 : i32
    %c0_i32_1 = arith.constant 0 : i32
    %c0_i32_2 = arith.constant 0 : i32
    return %c0_i32_0, %0, %c0_i32_1 : i32, i32, i32
  }
  func.func @transform_2(%arg0: i32) -> (i32, i32) {
    %c0_i32 = arith.constant 0 : i32
    %c0_i32_0 = arith.constant 0 : i32
    %c0_i32_1 = arith.constant 0 : i32
    return %c0_i32, %c0_i32_0 : i32, i32
  }
  func.func @transform_3(%arg0: i32) -> (i32, i32) {
    %c0_i32 = arith.constant 0 : i32
    %c0_i32_0 = arith.constant 0 : i32
    %c0_i32_1 = arith.constant 0 : i32
    return %c0_i32, %c0_i32_0 : i32, i32
  }
  func.func @transform_4(%arg0: i32) -> (i32, i32, i32) {
    %c0_i32 = arith.constant 0 : i32
    %c0_i32_0 = arith.constant 0 : i32
    %c0_i32_1 = arith.constant 0 : i32
    return %c0_i32, %arg0, %c0_i32_0 : i32, i32, i32
  }
  func.func @transform_5(%arg0: i32) -> (i32, i32, i32) {
    %c0_i32 = arith.constant 0 : i32
    %0 = arith.subi %c0_i32, %arg0 : i32
    %c0_i32_0 = arith.constant 0 : i32
    %c0_i32_1 = arith.constant 0 : i32
    %c0_i32_2 = arith.constant 0 : i32
    return %c0_i32_0, %0, %c0_i32_1 : i32, i32, i32
  }
}

</mosaic_0001>

<llo_original>
// kernel: forward.2
$region0: #{forward.2}
  #allocation0 [shape = 'u32[]', space=smem, size = 0x4, offset = 0x4, fixed_abs, tag = 'smem constant byte address 0x4 - core index']
  #allocation1 [shape = 'u32[144,128]{1,0:T(1,128)}', space=vmem, size = 0x12000, scoped, tag = 'internal scratch']
  %s0 = inlined_call_operand.vmem [shape: f32[2,10,32], index: 0, kind: input, shape index: {}]
  %s1 = inlined_call_operand.vmem [shape: bf16[3,32,128], index: 1, kind: input, shape index: {}]
  %s2 = inlined_call_operand.vmem [shape: f32[1,128], index: 2, kind: input, shape index: {}]
  %s3 = inlined_call_operand.vmem [shape: bf16[128,256], index: 3, kind: input, shape index: {}]
  %s4 = inlined_call_operand.vmem [shape: f32[1,256], index: 4, kind: input, shape index: {}]
  %s5 = inlined_call_operand.vmem [shape: f32[2,8,128], index: 5, kind: output, shape index: {0}]
  %s6 = inlined_call_operand.vmem [shape: f32[2,8,128], index: 6, kind: output, shape index: {1}]
  %7 = xla_tuple %s5, %s6
  %s8 = sld [smem:[#allocation0]]
  $region61: #{forward.2} parent=0
    _
  %s10 = ssub.s32 1, %s8
  %s11 = scalar_select 0, %s10, %s8
  loop: start=0, step=1, limit=4
  $region2: #{forward.2} parent=0 // loop_pre_header
    _
  $region3: #{forward.2} parent=0 // loop_header
    %s13 = sphi 0, %s17
    %p14 = scmp.ge.s32.totalorder %s13, 4
    %s23 = sphi 0, %s25
    %s26 = sphi 0, %s23
    %s27 = sphi 0, %s26
    %s43 = sphi 0, %s27
    %s47 = sphi 0, %s47
    %s49 = sphi 0, %s47
    %s50 = sphi 0, %s49
    %s64 = sphi 0, %s50
    %s68 = sphi 0, %s68
    %s70 = sphi 0, %s68
    %s71 = sphi 0, %s70
    %s85 = sphi 0, %s71
    %s89 = sphi 0, %s89
    %s91 = sphi 0, %s89
    %s92 = sphi 0, %s91
    %s106 = sphi 0, %s92
    %s110 = sphi 0, %s110
    %s112 = sphi 0, %s110
    %s113 = sphi 0, %s112
    %s127 = sphi 0, %s113
    %s133 = sphi 0, %s135
    %s136 = sphi 0, %s133
    %s137 = sphi 0, %s136
    %s153 = sphi 0, %s137
    %s159 = sphi 0, %s161
    %s162 = sphi 0, %s159
    %s163 = sphi 0, %s162
    %s179 = sphi 0, %s163
  $region4: #{forward.2} parent=0 // loop_header_branch
    %16 = sbr.rel (%p14) target = $region8
  $region5: #{forward.2} parent=0 // loop_body
    %s18 = ssub.s32 %s13, 1
    %s19 = ssub.s32 %s13, 2
    %s20 = sadd.s32 %s13, 1
    %s21 = ssub.s32 %s13, %s20
    %p22 = scmp.eq.s32.totalorder %s21, 0
    %s24 = sadd.s32 %s23, 1
    %s25 = scalar_select %p22, %s23, %s24
    %p28 = pneg %p22
    %p29 = scmp.eq.s32.totalorder %s13, 1
    %p30 = por %p28, %p29
    %p31 = scmp.ne.s32.totalorder %s23, %s26
    %p32 = scmp.eq.s32.totalorder %s13, 0
    %p33 = por %p31, %p32
    %p34 = scmp.ne.s32.totalorder %s23, %s26
    %p35 = scmp.eq.s32.totalorder %s18, 1
    %p36 = por %p34, %p35
    %p37 = scmp.ne.s32.totalorder %s26, %s27
    %p38 = scmp.eq.s32.totalorder %s18, 0
    %p39 = por %p37, %p38
    %p40 = scmp.ne.s32.totalorder %s26, %s27
    %p41 = scmp.eq.s32.totalorder %s19, 1
    %p42 = por %p40, %p41
    %p44 = scmp.ne.s32.totalorder %s27, %s43
    %p45 = scmp.eq.s32.totalorder %s19, 0
    %p46 = por %p44, %p45
    %s48 = sadd.s32 %s47, 1
    %p51 = scmp.eq.s32.totalorder %s13, 1
    %p52 = scmp.ne.s32.totalorder %s47, %s49
    %p53 = scmp.eq.s32.totalorder %s13, 0
    %p54 = por %p52, %p53
    %p55 = scmp.ne.s32.totalorder %s47, %s49
    %p56 = scmp.eq.s32.totalorder %s18, 1
    %p57 = por %p55, %p56
    %p58 = scmp.ne.s32.totalorder %s49, %s50
    %p59 = scmp.eq.s32.totalorder %s18, 0
    %p60 = por %p58, %p59
    %p61 = scmp.ne.s32.totalorder %s49, %s50
    %p62 = scmp.eq.s32.totalorder %s19, 1
    %p63 = por %p61, %p62
    %p65 = scmp.ne.s32.totalorder %s50, %s64
    %p66 = scmp.eq.s32.totalorder %s19, 0
    %p67 = por %p65, %p66
    %s69 = sadd.s32 %s68, 1
    %p72 = scmp.eq.s32.totalorder %s13, 1
    %p73 = scmp.ne.s32.totalorder %s68, %s70
    %p74 = scmp.eq.s32.totalorder %s13, 0
    %p75 = por %p73, %p74
    %p76 = scmp.ne.s32.totalorder %s68, %s70
    %p77 = scmp.eq.s32.totalorder %s18, 1
    %p78 = por %p76, %p77
    %p79 = scmp.ne.s32.totalorder %s70, %s71
    %p80 = scmp.eq.s32.totalorder %s18, 0
    %p81 = por %p79, %p80
    %p82 = scmp.ne.s32.totalorder %s70, %s71
    %p83 = scmp.eq.s32.totalorder %s19, 1
    %p84 = por %p82, %p83
    %p86 = scmp.ne.s32.totalorder %s71, %s85
    %p87 = scmp.eq.s32.totalorder %s19, 0
    %p88 = por %p86, %p87
    %s90 = sadd.s32 %s89, 1
    %p93 = scmp.eq.s32.totalorder %s13, 1
    %p94 = scmp.ne.s32.totalorder %s89, %s91
    %p95 = scmp.eq.s32.totalorder %s13, 0
    %p96 = por %p94, %p95
    %p97 = scmp.ne.s32.totalorder %s89, %s91
    %p98 = scmp.eq.s32.totalorder %s18, 1
    %p99 = por %p97, %p98
    %p100 = scmp.ne.s32.totalorder %s91, %s92
    %p101 = scmp.eq.s32.totalorder %s18, 0
    %p102 = por %p100, %p101
    %p103 = scmp.ne.s32.totalorder %s91, %s92
    %p104 = scmp.eq.s32.totalorder %s19, 1
    %p105 = por %p103, %p104
    %p107 = scmp.ne.s32.totalorder %s92, %s106
    %p108 = scmp.eq.s32.totalorder %s19, 0
    %p109 = por %p107, %p108
    %s111 = sadd.s32 %s110, 1
    %p114 = scmp.eq.s32.totalorder %s13, 1
    %p115 = scmp.ne.s32.totalorder %s110, %s112
    %p116 = scmp.eq.s32.totalorder %s13, 0
    %p117 = por %p115, %p116
    %p118 = scmp.ne.s32.totalorder %s110, %s112
    %p119 = scmp.eq.s32.totalorder %s18, 1
    %p120 = por %p118, %p119
    %p121 = scmp.ne.s32.totalorder %s112, %s113
    %p122 = scmp.eq.s32.totalorder %s18, 0
    %p123 = por %p121, %p122
    %p124 = scmp.ne.s32.totalorder %s112, %s113
    %p125 = scmp.eq.s32.totalorder %s19, 1
    %p126 = por %p124, %p125
    %p128 = scmp.ne.s32.totalorder %s113, %s127
    %p129 = scmp.eq.s32.totalorder %s19, 0
    %p130 = por %p128, %p129
    %s131 = ssub.s32 %s13, %s20
    %p132 = scmp.eq.s32.totalorder %s131, 0
    %s134 = sadd.s32 %s133, 1
    %s135 = scalar_select %p132, %s133, %s134
    %p138 = pneg %p132
    %p139 = scmp.eq.s32.totalorder %s13, 1
    %p140 = por %p138, %p139
    %p141 = scmp.ne.s32.totalorder %s133, %s136
    %p142 = scmp.eq.s32.totalorder %s13, 0
    %p143 = por %p141, %p142
    %p144 = scmp.ne.s32.totalorder %s133, %s136
    %p145 = scmp.eq.s32.totalorder %s18, 1
    %p146 = por %p144, %p145
    %p147 = scmp.ne.s32.totalorder %s136, %s137
    %p148 = scmp.eq.s32.totalorder %s18, 0
    %p149 = por %p147, %p148
    %p150 = scmp.ne.s32.totalorder %s136, %s137
    %p151 = scmp.eq.s32.totalorder %s19, 1
    %p152 = por %p150, %p151
    %p154 = scmp.ne.s32.totalorder %s137, %s153
    %p155 = scmp.eq.s32.totalorder %s19, 0
    %p156 = por %p154, %p155
    %s157 = ssub.s32 %s13, %s20
    %p158 = scmp.eq.s32.totalorder %s157, 0
    %s160 = sadd.s32 %s159, 1
    %s161 = scalar_select %p158, %s159, %s160
    %p164 = pneg %p158
    %p165 = scmp.eq.s32.totalorder %s13, 1
    %p166 = por %p164, %p165
    %p167 = scmp.ne.s32.totalorder %s159, %s162
    %p168 = scmp.eq.s32.totalorder %s13, 0
    %p169 = por %p167, %p168
    %p170 = scmp.ne.s32.totalorder %s159, %s162
    %p171 = scmp.eq.s32.totalorder %s18, 1
    %p172 = por %p170, %p171
    %p173 = scmp.ne.s32.totalorder %s162, %s163
    %p174 = scmp.eq.s32.totalorder %s18, 0
    %p175 = por %p173, %p174
    %p176 = scmp.ne.s32.totalorder %s162, %s163
    %p177 = scmp.eq.s32.totalorder %s19, 1
    %p178 = por %p176, %p177
    %p180 = scmp.ne.s32.totalorder %s163, %s179
    %p181 = scmp.eq.s32.totalorder %s19, 0
    %p182 = por %p180, %p181
    %p183 = scmp.le.s32.totalorder 1, %s13
    %p184 = scmp.lt.s32.totalorder %s13, 3
    %p185 = pnand %p183, %p184
    %p186 = pneg %p185
    // Predicated region
    $region9: #{forward.2} parent=5 // pred_check
      _
    $region10: #{forward.2} parent=5 // pred_check_branch
      %188 = sbr.rel (%p185) target = $region12
    $region11: #{forward.2} parent=5 // pred_region
      %s189 = ssub.s32 %s13, 1
      // Predicated region
      $region13: #{forward.2} parent=11 // pred_check
        %p190 = pneg %p60
      $region14: #{forward.2} parent=11 // pred_check_branch
        %192 = sbr.rel (%p190) target = $region16
      $region15: #{forward.2} parent=11 // pred_region
        _
      $region16: #{forward.2} parent=11 // pred_fallthru
        _
      // Predicated region
      $region17: #{forward.2} parent=11 // pred_check
        %p193 = pneg %p81
      $region18: #{forward.2} parent=11 // pred_check_branch
        %195 = sbr.rel (%p193) target = $region20
      $region19: #{forward.2} parent=11 // pred_region
        _
      $region20: #{forward.2} parent=11 // pred_fallthru
        _
      // Predicated region
      $region21: #{forward.2} parent=11 // pred_check
        %p196 = pneg %p102
      $region22: #{forward.2} parent=11 // pred_check_branch
        %198 = sbr.rel (%p196) target = $region24
      $region23: #{forward.2} parent=11 // pred_region
        _
      $region24: #{forward.2} parent=11 // pred_fallthru
        _
      // Predicated region
      $region25: #{forward.2} parent=11 // pred_check
        %p199 = pneg %p123
      $region26: #{forward.2} parent=11 // pred_check_branch
        %201 = sbr.rel (%p199) target = $region28
      $region27: #{forward.2} parent=11 // pred_region
        _
      $region28: #{forward.2} parent=11 // pred_fallthru
        _
    $region12: #{forward.2} parent=5 // pred_fallthru
      _
    %p202 = scmp.lt.s32.totalorder %s13, 2
    // Predicated region
    $region29: #{forward.2} parent=5 // pred_check
      %p203 = pneg %p202
    $region30: #{forward.2} parent=5 // pred_check_branch
      %205 = sbr.rel (%p203) target = $region32
    $region31: #{forward.2} parent=5 // pred_region
      // Predicated region
      $region33: #{forward.2} parent=31 // pred_check
        %p206 = pneg %p33
      $region34: #{forward.2} parent=31 // pred_check_branch
        %208 = sbr.rel (%p206) target = $region36
      $region35: #{forward.2} parent=31 // pred_region
        %p209 = scmp.lt.s32.totalorder %s13, 1
        %s210 = scalar_select %p209, %s13, 1
        %s211 = smul.addr %s210, 2
        %s212 = smul.addr %s211, 8
        %s213 = scalar_lea.vmem %s0, %s212
      $region36: #{forward.2} parent=31 // pred_fallthru
        _
    $region32: #{forward.2} parent=5 // pred_fallthru
      _
    %p214 = scmp.le.s32.totalorder 1, %s13
    %p215 = scmp.lt.s32.totalorder %s13, 3
    %p216 = pnand %p214, %p215
    %p217 = pneg %p216
    // Predicated region
    $region37: #{forward.2} parent=5 // pred_check
      _
    $region38: #{forward.2} parent=5 // pred_check_branch
      %219 = sbr.rel (%p216) target = $region40
    $region39: #{forward.2} parent=5 // pred_region
      %s220 = ssub.s32 %s13, 1
      %p221 = scmp.lt.s32.totalorder %s18, 1
      %s222 = scalar_select %p221, %s18, 1
      %s223 = smul.addr %s222, 2
      %s224 = smul.addr %s223, 8
      %s225 = scalar_lea.vmem %s0, %s224
      %p226 = pneg %p39
      %p227 = pneg %p36
      %p228 = pneg %p60
      %p229 = pneg %p57
      %p230 = pneg %p81
      %p231 = pneg %p78
      %p232 = pneg %p102
      %p233 = pneg %p99
      %p234 = pneg %p123
      %p235 = pneg %p120
      %p236 = pneg %p149
      %p237 = pneg %p146
      %p238 = scmp.lt.s32.totalorder %s18, 1
      %s239 = scalar_select %p238, %s18, 1
      %s240 = smul.addr %s239, 8
      %s241 = scalar_lea.vmem %s5, %s240
      %p242 = pneg %p175
      %p243 = pneg %p172
      %p244 = scmp.lt.s32.totalorder %s18, 1
      %s245 = scalar_select %p244, %s18, 1
      %s246 = smul.addr %s245, 8
      %s247 = scalar_lea.vmem %s6, %s246
      %p248 = scmp.lt.s32.totalorder %s18, 1
      %s249 = scalar_select %p248, %s18, 1
      %s250 = smul.addr %s249, 2
      %s251 = smul.addr %s250, 8
      %s252 = scalar_lea.vmem %s0, %s251
      %p253 = scmp.lt.s32.totalorder %s18, 1
      %s254 = scalar_select %p253, %s18, 1
      %s255 = smul.addr %s254, 8
      %s256 = scalar_lea.vmem %s5, %s255
      %p257 = scmp.lt.s32.totalorder %s18, 1
      %s258 = scalar_select %p257, %s18, 1
      %s259 = smul.addr %s258, 8
      %s260 = scalar_lea.vmem %s6, %s259
      %v262 = vld [vmem:[%s252] sm:$0xff]
      %v263 = vld [vmem:[%s252 + $0x8] sm:$0x3]
      %v264 = vpack.c.bf16 %v263, %v262
      %v265 = vld [vmem:[%s1] sm:$0xf]
      %v266 = vld [vmem:[%s1 + $0x4] sm:$0xf]
      %v267 = vld [vmem:[%s1 + $0x8] sm:$0xf]
      %v268 = vld [vmem:[%s1 + $0xc] sm:$0xf]
      %s269 = scalar_lea.vmem %s1, 16
      %v270 = vld [vmem:[%s269] sm:$0xf]
      %v271 = vld [vmem:[%s269 + $0x4] sm:$0xf]
      %v272 = vld [vmem:[%s269 + $0x8] sm:$0xf]
      %v273 = vld [vmem:[%s269 + $0xc] sm:$0xf]
      %v275 = vshrl.u32 %v264, 16
      %v277 = vshll.u32 %v264, 16
      %v279 = vrot.slane %v277, 1
      %v280 = vor.u32 %v275, %v279
      %v285 = vunpack.c.l.b16 %v270
      %v286 = vunpack.c.l.b16 %v271
      %v287 = vunpack.c.l.b16 %v272
      %v288 = vunpack.c.l.b16 %v273
      %v289 = vpack.c.b16 %v286, %v285
      %v290 = vpack.c.b16 %v288, %v287
      %vm293 = vcmask 261120
      %v295 = vsel %vm293, %v280, 0
      %297 = vmatprep.subr.bf16.mxu0 0
      %298 = vmatpush1.bf16.msra.mxu0 %v289
      %299 = vmatprep.subr.bf16.mxu0 0
      %300 = vmatpush1.bf16.msra.mxu0 %v290
      %301 = vmatprep.subr.bf16.mxu0 0
      %302 = vmatpush1.bf16.msra.mxu0 0
      %303 = vmatprep.subr.bf16.mxu0 0
      %304 = vmatpush1.bf16.msra.mxu0 0
      %305 = vmatprep.subr.bf16.mxu0 0
      %306 = vmatpush1.bf16.msra.mxu0 0
      %307 = vmatprep.subr.bf16.mxu0 0
      %308 = vmatpush1.bf16.msra.mxu0 0
      %309 = vmatprep.subr.bf16.mxu0 0
      %310 = vmatpush1.bf16.msra.mxu0 0
      %311 = vmatprep.subr.bf16.mxu0 0
      %312 = vmatpush1.bf16.msra.mxu0 0
      %313 = vmatprep.subr.bf16.mxu0 0
      %314 = vmatpush1.bf16.msra.mxu0 0
      %315 = vmatprep.subr.bf16.mxu0 0
      %316 = vmatpush1.bf16.msra.mxu0 0
      %317 = vmatprep.subr.bf16.mxu0 0
      %318 = vmatpush1.bf16.msra.mxu0 0
      %319 = vmatprep.subr.bf16.mxu0 0
      %320 = vmatpush1.bf16.msra.mxu0 0
      %321 = vmatprep.subr.bf16.mxu0 0
      %322 = vmatpush1.bf16.msra.mxu0 0
      %323 = vmatprep.subr.bf16.mxu0 0
      %324 = vmatpush1.bf16.msra.mxu0 0
      %325 = vmatprep.subr.bf16.mxu0 0
      %326 = vmatpush1.bf16.msra.mxu0 0
      %327 = vmatprep.subr.bf16.mxu0 0
      %328 = vmatpush1.bf16.msra.mxu0 0
      %329 = vmatprep.mubr.bf16.mxu0 0
      %330 = vmatmul.mubr.bf16.gmra.mrb[0].mxu0 %v295
      %v331 = vpop.f32.mrb[0].mxu0
      %v332 = vadd.f32 0.0, %v331
      %v333 = vpop.f32.mrb[0].mxu0
      %v334 = vpop.f32.mrb[0].mxu0
      %v335 = vpop.f32.mrb[0].mxu0
      %336 = vdwg.mxu0
      %v341 = vunpack.c.l.b16 %v265
      %v342 = vunpack.c.l.b16 %v266
      %v343 = vunpack.c.l.b16 %v267
      %v344 = vunpack.c.l.b16 %v268
      %v345 = vpack.c.b16 %v342, %v341
      %v346 = vpack.c.b16 %v344, %v343
      %v349 = vsel %vm293, %v264, 0
      %351 = vmatprep.subr.bf16.mxu0 0
      %352 = vmatpush1.bf16.msra.mxu0 %v345
      %353 = vmatprep.subr.bf16.mxu0 0
      %354 = vmatpush1.bf16.msra.mxu0 %v346
      %355 = vmatprep.subr.bf16.mxu0 0
      %356 = vmatpush1.bf16.msra.mxu0 0
      %357 = vmatprep.subr.bf16.mxu0 0
      %358 = vmatpush1.bf16.msra.mxu0 0
      %359 = vmatprep.subr.bf16.mxu0 0
      %360 = vmatpush1.bf16.msra.mxu0 0
      %361 = vmatprep.subr.bf16.mxu0 0
      %362 = vmatpush1.bf16.msra.mxu0 0
      %363 = vmatprep.subr.bf16.mxu0 0
      %364 = vmatpush1.bf16.msra.mxu0 0
      %365 = vmatprep.subr.bf16.mxu0 0
      %366 = vmatpush1.bf16.msra.mxu0 0
      %367 = vmatprep.subr.bf16.mxu0 0
      %368 = vmatpush1.bf16.msra.mxu0 0
      %369 = vmatprep.subr.bf16.mxu0 0
      %370 = vmatpush1.bf16.msra.mxu0 0
      %371 = vmatprep.subr.bf16.mxu0 0
      %372 = vmatpush1.bf16.msra.mxu0 0
      %373 = vmatprep.subr.bf16.mxu0 0
      %374 = vmatpush1.bf16.msra.mxu0 0
      %375 = vmatprep.subr.bf16.mxu0 0
      %376 = vmatpush1.bf16.msra.mxu0 0
      %377 = vmatprep.subr.bf16.mxu0 0
      %378 = vmatpush1.bf16.msra.mxu0 0
      %379 = vmatprep.subr.bf16.mxu0 0
      %380 = vmatpush1.bf16.msra.mxu0 0
      %381 = vmatprep.subr.bf16.mxu0 0
      %382 = vmatpush1.bf16.msra.mxu0 0
      %383 = vmatprep.mubr.bf16.mxu0 0
      %384 = vmatmul.mubr.bf16.gmra.mrb[0].mxu0 %v349
      %v385 = vpop.f32.mrb[0].mxu0
      %v386 = vadd.f32 %v332, %v385
      %v387 = vpop.f32.mrb[0].mxu0
      %v388 = vpop.f32.mrb[0].mxu0
      %v389 = vpop.f32.mrb[0].mxu0
      %390 = vdwg.mxu0
      %s391 = scalar_lea.vmem %s1, 32
      %v392 = vld [vmem:[%s391] sm:$0xf]
      %v393 = vld [vmem:[%s391 + $0x4] sm:$0xf]
      %v394 = vld [vmem:[%s391 + $0x8] sm:$0xf]
      %v395 = vld [vmem:[%s391 + $0xc] sm:$0xf]
      %v397 = vrot.slane %v264, 1
      %v402 = vunpack.c.l.b16 %v392
      %v403 = vunpack.c.l.b16 %v393
      %v404 = vunpack.c.l.b16 %v394
      %v405 = vunpack.c.l.b16 %v395
      %v406 = vpack.c.b16 %v403, %v402
      %v407 = vpack.c.b16 %v405, %v404
      %v411 = vsel %vm293, %v397, 0
      %413 = vmatprep.subr.bf16.mxu0 0
      %414 = vmatpush1.bf16.msra.mxu0 %v406
      %415 = vmatprep.subr.bf16.mxu0 0
      %416 = vmatpush1.bf16.msra.mxu0 %v407
      %417 = vmatprep.subr.bf16.mxu0 0
      %418 = vmatpush1.bf16.msra.mxu0 0
      %419 = vmatprep.subr.bf16.mxu0 0
      %420 = vmatpush1.bf16.msra.mxu0 0
      %421 = vmatprep.subr.bf16.mxu0 0
      %422 = vmatpush1.bf16.msra.mxu0 0
      %423 = vmatprep.subr.bf16.mxu0 0
      %424 = vmatpush1.bf16.msra.mxu0 0
      %425 = vmatprep.subr.bf16.mxu0 0
      %426 = vmatpush1.bf16.msra.mxu0 0
      %427 = vmatprep.subr.bf16.mxu0 0
      %428 = vmatpush1.bf16.msra.mxu0 0
      %429 = vmatprep.subr.bf16.mxu0 0
      %430 = vmatpush1.bf16.msra.mxu0 0
      %431 = vmatprep.subr.bf16.mxu0 0
      %432 = vmatpush1.bf16.msra.mxu0 0
      %433 = vmatprep.subr.bf16.mxu0 0
      %434 = vmatpush1.bf16.msra.mxu0 0
      %435 = vmatprep.subr.bf16.mxu0 0
      %436 = vmatpush1.bf16.msra.mxu0 0
      %437 = vmatprep.subr.bf16.mxu0 0
      %438 = vmatpush1.bf16.msra.mxu0 0
      %439 = vmatprep.subr.bf16.mxu0 0
      %440 = vmatpush1.bf16.msra.mxu0 0
      %441 = vmatprep.subr.bf16.mxu0 0
      %442 = vmatpush1.bf16.msra.mxu0 0
      %443 = vmatprep.subr.bf16.mxu0 0
      %444 = vmatpush1.bf16.msra.mxu0 0
      %445 = vmatprep.mubr.bf16.mxu0 0
      %446 = vmatmul.mubr.bf16.gmra.mrb[0].mxu0 %v411
      %v447 = vpop.f32.mrb[0].mxu0
      %v448 = vadd.f32 0.0, %v447
      %v449 = vpop.f32.mrb[0].mxu0
      %v450 = vpop.f32.mrb[0].mxu0
      %v451 = vpop.f32.mrb[0].mxu0
      %452 = vdwg.mxu0
      %v453 = vadd.f32 %v386, %v448
      %v454 = vld [vmem:[%s2] sm:$0x1]
      %v456 = vlaneseq
      %v457 = vshrl.u32 %v456, 7
      %v458 = vsub.s32 0, %v457
      %v459 = vrot.slane %v454, %v458
      %v461 = vadd.f32 %v453, %v459
      %v462 = vpack.c.bf16 %v461, %v461
      %v463 = vld [vmem:[%s3] sm:$0xff]
      %v464 = vld [vmem:[%s3 + $0x8] sm:$0xff]
      %v465 = vld [vmem:[%s3 + $0x10] sm:$0xff]
      %v466 = vld [vmem:[%s3 + $0x18] sm:$0xff]
      %v467 = vld [vmem:[%s3 + $0x20] sm:$0xff]
      %v468 = vld [vmem:[%s3 + $0x28] sm:$0xff]
      %v469 = vld [vmem:[%s3 + $0x30] sm:$0xff]
      %v470 = vld [vmem:[%s3 + $0x38] sm:$0xff]
      %v471 = vld [vmem:[%s3 + $0x40] sm:$0xff]
      %v472 = vld [vmem:[%s3 + $0x48] sm:$0xff]
      %v473 = vld [vmem:[%s3 + $0x50] sm:$0xff]
      %v474 = vld [vmem:[%s3 + $0x58] sm:$0xff]
      %v475 = vld [vmem:[%s3 + $0x60] sm:$0xff]
      %v476 = vld [vmem:[%s3 + $0x68] sm:$0xff]
      %v477 = vld [vmem:[%s3 + $0x70] sm:$0xff]
      %v478 = vld [vmem:[%s3 + $0x78] sm:$0xff]
      %v479 = vld [vmem:[%s4] sm:$0x3]
      %v481 = vlaneseq
      %v482 = vshrl.u32 %v481, 7
      %v483 = vsub.s32 0, %v482
      %v484 = vrot.slane %v479, %v483
      %v485 = vlaneseq
      %v486 = vshrl.u32 %v485, 7
      %v487 = vsub.s32 1, %v486
      %v488 = vrot.slane %v479, %v487
      %v507 = vunpack.c.l.b16 %v463
      %v508 = vunpack.c.h.b16 %v463
      %v509 = vunpack.c.l.b16 %v464
      %v510 = vunpack.c.h.b16 %v464
      %v511 = vunpack.c.l.b16 %v465
      %v512 = vunpack.c.h.b16 %v465
      %v513 = vunpack.c.l.b16 %v466
      %v514 = vunpack.c.h.b16 %v466
      %v515 = vunpack.c.l.b16 %v467
      %v516 = vunpack.c.h.b16 %v467
      %v517 = vunpack.c.l.b16 %v468
      %v518 = vunpack.c.h.b16 %v468
      %v519 = vunpack.c.l.b16 %v469
      %v520 = vunpack.c.h.b16 %v469
      %v521 = vunpack.c.l.b16 %v470
      %v522 = vunpack.c.h.b16 %v470
      %v523 = vunpack.c.l.b16 %v471
      %v524 = vunpack.c.h.b16 %v471
      %v525 = vunpack.c.l.b16 %v472
      %v526 = vunpack.c.h.b16 %v472
      %v527 = vunpack.c.l.b16 %v473
      %v528 = vunpack.c.h.b16 %v473
      %v529 = vunpack.c.l.b16 %v474
      %v530 = vunpack.c.h.b16 %v474
      %v531 = vunpack.c.l.b16 %v475
      %v532 = vunpack.c.h.b16 %v475
      %v533 = vunpack.c.l.b16 %v476
      %v534 = vunpack.c.h.b16 %v476
      %v535 = vunpack.c.l.b16 %v477
      %v536 = vunpack.c.h.b16 %v477
      %v537 = vunpack.c.l.b16 %v478
      %v538 = vunpack.c.h.b16 %v478
      %v539 = vpack.c.b16 %v509, %v507
      %v540 = vpack.c.b16 %v510, %v508
      %v541 = vpack.c.b16 %v513, %v511
      %v542 = vpack.c.b16 %v514, %v512
      %v543 = vpack.c.b16 %v517, %v515
      %v544 = vpack.c.b16 %v518, %v516
      %v545 = vpack.c.b16 %v521, %v519
      %v546 = vpack.c.b16 %v522, %v520
      %v547 = vpack.c.b16 %v525, %v523
      %v548 = vpack.c.b16 %v526, %v524
      %v549 = vpack.c.b16 %v529, %v527
      %v550 = vpack.c.b16 %v530, %v528
      %v551 = vpack.c.b16 %v533, %v531
      %v552 = vpack.c.b16 %v534, %v532
      %v553 = vpack.c.b16 %v537, %v535
      %v554 = vpack.c.b16 %v538, %v536
      %571 = vmatprep.subr.bf16.mxu0 %v540
      %572 = vmatpush1.bf16.msra.mxu0 %v539
      %573 = vmatprep.subr.bf16.mxu0 %v542
      %574 = vmatpush1.bf16.msra.mxu0 %v541
      %575 = vmatprep.subr.bf16.mxu0 %v544
      %576 = vmatpush1.bf16.msra.mxu0 %v543
      %577 = vmatprep.subr.bf16.mxu0 %v546
      %578 = vmatpush1.bf16.msra.mxu0 %v545
      %579 = vmatprep.subr.bf16.mxu0 %v548
      %580 = vmatpush1.bf16.msra.mxu0 %v547
      %581 = vmatprep.subr.bf16.mxu0 %v550
      %582 = vmatpush1.bf16.msra.mxu0 %v549
      %583 = vmatprep.subr.bf16.mxu0 %v552
      %584 = vmatpush1.bf16.msra.mxu0 %v551
      %585 = vmatprep.subr.bf16.mxu0 %v554
      %586 = vmatpush1.bf16.msra.mxu0 %v553
      %587 = vmatprep.subr.bf16.mxu0 0
      %588 = vmatpush1.bf16.msra.mxu0 0
      %589 = vmatprep.subr.bf16.mxu0 0
      %590 = vmatpush1.bf16.msra.mxu0 0
      %591 = vmatprep.subr.bf16.mxu0 0
      %592 = vmatpush1.bf16.msra.mxu0 0
      %593 = vmatprep.subr.bf16.mxu0 0
      %594 = vmatpush1.bf16.msra.mxu0 0
      %595 = vmatprep.subr.bf16.mxu0 0
      %596 = vmatpush1.bf16.msra.mxu0 0
      %597 = vmatprep.subr.bf16.mxu0 0
      %598 = vmatpush1.bf16.msra.mxu0 0
      %599 = vmatprep.subr.bf16.mxu0 0
      %600 = vmatpush1.bf16.msra.mxu0 0
      %601 = vmatprep.subr.bf16.mxu0 0
      %602 = vmatpush1.bf16.msra.mxu0 0
      %603 = vmatprep.mubr.bf16.mxu0 0
      %604 = vmatmul.mubr.bf16.gmra.mrb[0].mxu0 %v462
      %v605 = vpop.f32.mrb[0].mxu0
      %v606 = vadd.f32 %v484, %v605
      %v607 = vpop.f32.mrb[0].mxu0
      %v608 = vadd.f32 %v488, %v607
      %v609 = vpop.f32.mrb[0].mxu0
      %v610 = vpop.f32.mrb[0].mxu0
      %611 = vdwg.mxu0
      %612 = vst [vmem:[%s256] sm:$0xff] %v606
      %613 = vst [vmem:[%s260] sm:$0xff] %v608
      %p614 = scmp.lt.s32.totalorder %s18, 1
      %s615 = scalar_select %p614, %s18, 1
      %s616 = smul.addr %s615, 8
      %s617 = scalar_lea.vmem %s5, %s616
      %p618 = scmp.lt.s32.totalorder %s18, 1
      %s619 = scalar_select %p618, %s18, 1
      %s620 = smul.addr %s619, 8
      %s621 = scalar_lea.vmem %s6, %s620
      // Predicated region
      $region41: #{forward.2} parent=39 // pred_check
        %p622 = pneg %p146
      $region42: #{forward.2} parent=39 // pred_check_branch
        %624 = sbr.rel (%p622) target = $region44
      $region43: #{forward.2} parent=39 // pred_region
        _
      $region44: #{forward.2} parent=39 // pred_fallthru
        _
      // Predicated region
      $region45: #{forward.2} parent=39 // pred_check
        %p625 = pneg %p172
      $region46: #{forward.2} parent=39 // pred_check_branch
        %627 = sbr.rel (%p625) target = $region48
      $region47: #{forward.2} parent=39 // pred_region
        _
      $region48: #{forward.2} parent=39 // pred_fallthru
        _
    $region40: #{forward.2} parent=5 // pred_fallthru
      _
    %p628 = scmp.le.s32.totalorder 2, %s13
    // Predicated region
    $region49: #{forward.2} parent=5 // pred_check
      %p629 = pneg %p628
    $region50: #{forward.2} parent=5 // pred_check_branch
      %631 = sbr.rel (%p629) target = $region52
    $region51: #{forward.2} parent=5 // pred_region
      %s632 = ssub.s32 %s13, 2
      // Predicated region
      $region53: #{forward.2} parent=51 // pred_check
        %p633 = pneg %p152
      $region54: #{forward.2} parent=51 // pred_check_branch
        %635 = sbr.rel (%p633) target = $region56
      $region55: #{forward.2} parent=51 // pred_region
        %p636 = scmp.lt.s32.totalorder %s19, 1
        %s637 = scalar_select %p636, %s19, 1
        %s638 = smul.addr %s637, 8
        %s639 = scalar_lea.vmem %s5, %s638
      $region56: #{forward.2} parent=51 // pred_fallthru
        _
      // Predicated region
      $region57: #{forward.2} parent=51 // pred_check
        %p640 = pneg %p178
      $region58: #{forward.2} parent=51 // pred_check_branch
        %642 = sbr.rel (%p640) target = $region60
      $region59: #{forward.2} parent=51 // pred_region
        %p643 = scmp.lt.s32.totalorder %s19, 1
        %s644 = scalar_select %p643, %s19, 1
        %s645 = smul.addr %s644, 8
        %s646 = scalar_lea.vmem %s6, %s645
      $region60: #{forward.2} parent=51 // pred_fallthru
        _
    $region52: #{forward.2} parent=5 // pred_fallthru
      _
  $region6: #{forward.2} parent=0 // loop_footer
    %s17 = sadd.s32 1, %s13
  $region7: #{forward.2} parent=0 // loop_footer_branch
    %12 = sbr.rel target = $region3
  $region8: #{forward.2} parent=0 // loop_exit
    _

// kernel: forward.3
$region0: #{forward.3}
  #allocation0 [shape = 'u32[]', space=smem, size = 0x4, offset = 0x4, fixed_abs, tag = 'smem constant byte address 0x4 - core index']
  #allocation1 [shape = 'u32[144,128]{1,0:T(1,128)}', space=vmem, size = 0x12000, scoped, tag = 'internal scratch']
  #allocation2 [shape = 'f32[2,32]{1,0:T(2,128)}', space=vmem, size = 0x400, scoped, tag = 'scratch operand']
  #allocation3 [shape = 'f32[2,32]{1,0:T(2,128)}', space=vmem, size = 0x400, scoped, tag = 'scratch operand']
  #allocation4 [shape = 'f32[2,32]{1,0:T(2,128)}', space=vmem, size = 0x400, scoped, tag = 'scratch operand']
  #allocation5 [shape = 'f32[2,32]{1,0:T(2,128)}', space=vmem, size = 0x400, scoped, tag = 'scratch operand']
  %s0 = inlined_call_operand.vmem [shape: f32[2,8,128], index: 0, kind: input, shape index: {}]
  %s1 = inlined_call_operand.vmem [shape: f32[2,8,128], index: 1, kind: input, shape index: {}]
  %s2 = inlined_call_operand.vmem [shape: bf16[32,128], index: 2, kind: input, shape index: {}]
  %s3 = inlined_call_operand.vmem [shape: bf16[32,128], index: 3, kind: input, shape index: {}]
  %s4 = inlined_call_operand.vmem [shape: f32[2,8,32], index: 4, kind: output, shape index: {0}]
  %s5 = inlined_call_operand.vmem [shape: f32[2,8,32], index: 5, kind: output, shape index: {1}]
  %6 = xla_tuple %s4, %s5
  %s7 = sld [smem:[#allocation0]]
  $region38: #{forward.3} parent=0
    _
  %s9 = ssub.s32 1, %s7
  %s10 = scalar_select 0, %s9, %s7
  // Predicated region
  $region2: #{forward.3} parent=0 // pred_check
    _
  $region3: #{forward.3} parent=0 // pred_check_branch
    %12 = sbr.rel (0) target = $region5
  $region4: #{forward.3} parent=0 // pred_region
    _
  $region5: #{forward.3} parent=0 // pred_fallthru
    _
  // Predicated region
  $region6: #{forward.3} parent=0 // pred_check
    _
  $region7: #{forward.3} parent=0 // pred_check_branch
    %14 = sbr.rel (0) target = $region9
  $region8: #{forward.3} parent=0 // pred_region
    %s15 = ssub.s32 0, 0
    %p16 = scmp.lt.s32.totalorder %s15, 0
    %s17 = scalar_select %p16, %s15, 0
    %s18 = smul.addr %s17, 8
    %s19 = scalar_lea.vmem %s1, %s18
    %s20 = ssub.s32 0, 0
  $region9: #{forward.3} parent=0 // pred_fallthru
    _
  // Predicated region
  $region10: #{forward.3} parent=0 // pred_check
    _
  $region11: #{forward.3} parent=0 // pred_check_branch
    %22 = sbr.rel (0) target = $region13
  $region12: #{forward.3} parent=0 // pred_region
    _
  $region13: #{forward.3} parent=0 // pred_fallthru
    _
  // Predicated region
  $region14: #{forward.3} parent=0 // pred_check
    _
  $region15: #{forward.3} parent=0 // pred_check_branch
    %24 = sbr.rel (0) target = $region17
  $region16: #{forward.3} parent=0 // pred_region
    _
  $region17: #{forward.3} parent=0 // pred_fallthru
    _
  %s25 = ssub.s32 0, 0
  %p26 = scmp.lt.s32.totalorder %s25, 0
  %s27 = scalar_select %p26, %s25, 0
  %s28 = smul.addr %s27, 8
  %s29 = scalar_lea.vmem %s1, %s28
  %s30 = ssub.s32 0, 0
  %p31 = scmp.lt.s32.totalorder %s30, 0
  %s32 = scalar_select %p31, %s30, 0
  %s33 = smul.addr %s32, 8
  %s34 = scalar_lea.vmem %s5, %s33
  %s35 = ssub.s32 0, 0
  %p36 = scmp.lt.s32.totalorder %s35, 0
  %s37 = scalar_select %p36, %s35, 0
  %s38 = smul.addr %s37, 8
  %s39 = scalar_lea.vmem %s1, %s38
  %s40 = ssub.s32 0, 0
  %s41 = ssub.s32 0, 0
  %p42 = scmp.lt.s32.totalorder %s41, 0
  %s43 = scalar_select %p42, %s41, 0
  %s44 = smul.addr %s43, 8
  %s45 = scalar_lea.vmem %s5, %s44
  %s46 = ssub.s32 0, 0
  %p48 = scmp.eq.s32.totalorder 0, 0
  // Predicated region
  $region18: #{forward.3} parent=0 // pred_check
    %p49 = pneg %p48
  $region19: #{forward.3} parent=0 // pred_check_branch
    %51 = sbr.rel (%p49) target = $region21
  $region20: #{forward.3} parent=0 // pred_region
    %vm52 = vcmask 254976
    %53 = vst.msk [vmem:[#allocation2] sm:$0x3] %vm52, 0.0
    %54 = vst.msk [vmem:[#allocation3] sm:$0x3] %vm52, 0.0
    %55 = vst.msk [vmem:[#allocation4] sm:$0x3] %vm52, 0.0
    %56 = vst.msk [vmem:[#allocation5] sm:$0x3] %vm52, 0.0
  $region21: #{forward.3} parent=0 // pred_fallthru
    _
  %v57 = vld [vmem:[%s2] sm:$0xf]
  %v58 = vld [vmem:[%s2 + $0x4] sm:$0xf]
  %v59 = vld [vmem:[%s2 + $0x8] sm:$0xf]
  %v60 = vld [vmem:[%s2 + $0xc] sm:$0xf]
  %v61 = vld [vmem:[%s3] sm:$0xf]
  %v62 = vld [vmem:[%s3 + $0x4] sm:$0xf]
  %v63 = vld [vmem:[%s3 + $0x8] sm:$0xf]
  %v64 = vld [vmem:[%s3 + $0xc] sm:$0xf]
  %v65 = vld [vmem:[#allocation2] sm:$0x3]
  %v66 = vld [vmem:[#allocation3] sm:$0x3]
  %v67 = vld [vmem:[#allocation4] sm:$0x3]
  %v68 = vld [vmem:[#allocation5] sm:$0x3]
  %v69 = vld [vmem:[%s0] sm:$0x1]
  %v70 = vld [vmem:[%s0 + $0x8] sm:$0x1]
  %v71 = vpack.c.bf16 %v65, %v65
  %v76 = vunpack.c.l.b16 %v57
  %v77 = vunpack.c.l.b16 %v58
  %v78 = vunpack.c.l.b16 %v59
  %v79 = vunpack.c.l.b16 %v60
  %v80 = vpack.c.b16 %v77, %v76
  %v81 = vpack.c.b16 %v79, %v78
  %vm84 = vcmask 261120
  %v86 = vsel %vm84, %v71, 0
  %88 = vmatprep.subr.bf16.mxu0 0
  %89 = vmatpush1.bf16.msra.mxu0 %v80
  %90 = vmatprep.subr.bf16.mxu0 0
  %91 = vmatpush1.bf16.msra.mxu0 %v81
  %92 = vmatprep.subr.bf16.mxu0 0
  %93 = vmatpush1.bf16.msra.mxu0 0
  %94 = vmatprep.subr.bf16.mxu0 0
  %95 = vmatpush1.bf16.msra.mxu0 0
  %96 = vmatprep.subr.bf16.mxu0 0
  %97 = vmatpush1.bf16.msra.mxu0 0
  %98 = vmatprep.subr.bf16.mxu0 0
  %99 = vmatpush1.bf16.msra.mxu0 0
  %100 = vmatprep.subr.bf16.mxu0 0
  %101 = vmatpush1.bf16.msra.mxu0 0
  %102 = vmatprep.subr.bf16.mxu0 0
  %103 = vmatpush1.bf16.msra.mxu0 0
  %104 = vmatprep.subr.bf16.mxu0 0
  %105 = vmatpush1.bf16.msra.mxu0 0
  %106 = vmatprep.subr.bf16.mxu0 0
  %107 = vmatpush1.bf16.msra.mxu0 0
  %108 = vmatprep.subr.bf16.mxu0 0
  %109 = vmatpush1.bf16.msra.mxu0 0
  %110 = vmatprep.subr.bf16.mxu0 0
  %111 = vmatpush1.bf16.msra.mxu0 0
  %112 = vmatprep.subr.bf16.mxu0 0
  %113 = vmatpush1.bf16.msra.mxu0 0
  %114 = vmatprep.subr.bf16.mxu0 0
  %115 = vmatpush1.bf16.msra.mxu0 0
  %116 = vmatprep.subr.bf16.mxu0 0
  %117 = vmatpush1.bf16.msra.mxu0 0
  %118 = vmatprep.subr.bf16.mxu0 0
  %119 = vmatpush1.bf16.msra.mxu0 0
  %120 = vmatprep.mubr.bf16.mxu0 0
  %121 = vmatmul.mubr.bf16.gmra.mrb[0].mxu0 %v86
  %v122 = vpop.f32.mrb[0].mxu0
  %v123 = vadd.f32 0.0, %v122
  %v124 = vpop.f32.mrb[0].mxu0
  %v125 = vpop.f32.mrb[0].mxu0
  %v126 = vpop.f32.mrb[0].mxu0
  %127 = vdwg.mxu0
  %v129 = vrot.slane %v123, 1
  %v132 = vadd.f32 %v69, %v123
  %v133 = vadd.f32 %v70, %v129
  %v134 = vxor.u32 %v132, 2147483648
  %v135 = vxor.u32 %v133, 2147483648
  %v136 = vmul.f32 %v134, 1.442695
  %v137 = vpow.pop %v136
  %v138 = vmul.f32 %v135, 1.442695
  %v139 = vpow.pop %v138
  %v140 = vadd.f32 %v137, 1.0
  %v141 = vadd.f32 %v139, 1.0
  %v142 = vrcp.pop %v140
  %v143 = vmul.f32 1.0, %v142
  %v144 = vrcp.pop %v141
  %v145 = vmul.f32 1.0, %v144
  %v146 = vtanh.pop %v132
  %v147 = vtanh.pop %v133
  %v149 = vrot.slane %v66, 1
  %150 = vrot.lane.b32.xlu0 %v66, 32
  %v151 = vpop.permute.xlu0 %150
  %152 = vrot.lane.b32.xlu0 %v149, 32
  %v153 = vpop.permute.xlu0 %152
  %v156 = vmul.f32 %v143, %v151
  %v157 = vmul.f32 %v145, %v153
  %160 = vrot.lane.b32.xlu0 %v146, 64
  %v161 = vpop.permute.xlu0 %160
  %162 = vrot.lane.b32.xlu0 %v147, 64
  %v163 = vpop.permute.xlu0 %162
  %v166 = vmul.f32 %v143, %v161
  %v167 = vmul.f32 %v145, %v163
  %170 = vrot.lane.b32.xlu0 %v166, 32
  %v171 = vpop.permute.xlu0 %170
  %172 = vrot.lane.b32.xlu0 %v167, 32
  %v173 = vpop.permute.xlu0 %172
  %v176 = vadd.f32 %v156, %v171
  %v177 = vadd.f32 %v157, %v173
  %v178 = vtanh.pop %v176
  %v179 = vtanh.pop %v177
  %182 = vrot.lane.b32.xlu0 %v178, 64
  %v183 = vpop.permute.xlu0 %182
  %184 = vrot.lane.b32.xlu0 %v179, 64
  %v185 = vpop.permute.xlu0 %184
  %v188 = vmul.f32 %v143, %v183
  %v189 = vmul.f32 %v145, %v185
  %192 = vrot.lane.b32.xlu0 %v188, 32
  %v193 = vpop.permute.xlu0 %192
  %194 = vrot.lane.b32.xlu0 %v189, 32
  %v195 = vpop.permute.xlu0 %194
  %vm198 = vcmask 253952
  %199 = vst.msk [vmem:[%s4] sm:$0x1] %vm198, %v193
  %200 = vst.msk [vmem:[%s4 + $0x8] sm:$0x1] %vm198, %v195
  %v201 = vld [vmem:[%s39 + $0x7] sm:$0x1]
  %v202 = vld [vmem:[%s39 + $0xf] sm:$0x1]
  %v203 = vpack.c.bf16 %v67, %v67
  %v208 = vunpack.c.l.b16 %v61
  %v209 = vunpack.c.l.b16 %v62
  %v210 = vunpack.c.l.b16 %v63
  %v211 = vunpack.c.l.b16 %v64
  %v212 = vpack.c.b16 %v209, %v208
  %v213 = vpack.c.b16 %v211, %v210
  %v217 = vsel %vm84, %v203, 0
  %219 = vmatprep.subr.bf16.mxu0 0
  %220 = vmatpush1.bf16.msra.mxu0 %v212
  %221 = vmatprep.subr.bf16.mxu0 0
  %222 = vmatpush1.bf16.msra.mxu0 %v213
  %223 = vmatprep.subr.bf16.mxu0 0
  %224 = vmatpush1.bf16.msra.mxu0 0
  %225 = vmatprep.subr.bf16.mxu0 0
  %226 = vmatpush1.bf16.msra.mxu0 0
  %227 = vmatprep.subr.bf16.mxu0 0
  %228 = vmatpush1.bf16.msra.mxu0 0
  %229 = vmatprep.subr.bf16.mxu0 0
  %230 = vmatpush1.bf16.msra.mxu0 0
  %231 = vmatprep.subr.bf16.mxu0 0
  %232 = vmatpush1.bf16.msra.mxu0 0
  %233 = vmatprep.subr.bf16.mxu0 0
  %234 = vmatpush1.bf16.msra.mxu0 0
  %235 = vmatprep.subr.bf16.mxu0 0
  %236 = vmatpush1.bf16.msra.mxu0 0
  %237 = vmatprep.subr.bf16.mxu0 0
  %238 = vmatpush1.bf16.msra.mxu0 0
  %239 = vmatprep.subr.bf16.mxu0 0
  %240 = vmatpush1.bf16.msra.mxu0 0
  %241 = vmatprep.subr.bf16.mxu0 0
  %242 = vmatpush1.bf16.msra.mxu0 0
  %243 = vmatprep.subr.bf16.mxu0 0
  %244 = vmatpush1.bf16.msra.mxu0 0
  %245 = vmatprep.subr.bf16.mxu0 0
  %246 = vmatpush1.bf16.msra.mxu0 0
  %247 = vmatprep.subr.bf16.mxu0 0
  %248 = vmatpush1.bf16.msra.mxu0 0
  %249 = vmatprep.subr.bf16.mxu0 0
  %250 = vmatpush1.bf16.msra.mxu0 0
  %251 = vmatprep.mubr.bf16.mxu0 0
  %252 = vmatmul.mubr.bf16.gmra.mrb[0].mxu0 %v217
  %v253 = vpop.f32.mrb[0].mxu0
  %v254 = vadd.f32 0.0, %v253
  %v255 = vpop.f32.mrb[0].mxu0
  %v256 = vpop.f32.mrb[0].mxu0
  %v257 = vpop.f32.mrb[0].mxu0
  %258 = vdwg.mxu0
  %v260 = vrot.slane %v254, 1
  %v263 = vadd.f32 %v201, %v254
  %v264 = vadd.f32 %v202, %v260
  %v265 = vxor.u32 %v263, 2147483648
  %v266 = vxor.u32 %v264, 2147483648
  %v267 = vmul.f32 %v265, 1.442695
  %v268 = vpow.pop %v267
  %v269 = vmul.f32 %v266, 1.442695
  %v270 = vpow.pop %v269
  %v271 = vadd.f32 %v268, 1.0
  %v272 = vadd.f32 %v270, 1.0
  %v273 = vrcp.pop %v271
  %v274 = vmul.f32 1.0, %v273
  %v275 = vrcp.pop %v272
  %v276 = vmul.f32 1.0, %v275
  %v277 = vtanh.pop %v263
  %v278 = vtanh.pop %v264
  %v280 = vrot.slane %v68, 1
  %281 = vrot.lane.b32.xlu0 %v68, 32
  %v282 = vpop.permute.xlu0 %281
  %283 = vrot.lane.b32.xlu0 %v280, 32
  %v284 = vpop.permute.xlu0 %283
  %v287 = vmul.f32 %v274, %v282
  %v288 = vmul.f32 %v276, %v284
  %291 = vrot.lane.b32.xlu0 %v277, 64
  %v292 = vpop.permute.xlu0 %291
  %293 = vrot.lane.b32.xlu0 %v278, 64
  %v294 = vpop.permute.xlu0 %293
  %v297 = vmul.f32 %v274, %v292
  %v298 = vmul.f32 %v276, %v294
  %301 = vrot.lane.b32.xlu0 %v297, 32
  %v302 = vpop.permute.xlu0 %301
  %303 = vrot.lane.b32.xlu0 %v298, 32
  %v304 = vpop.permute.xlu0 %303
  %v307 = vadd.f32 %v287, %v302
  %v308 = vadd.f32 %v288, %v304
  %v309 = vtanh.pop %v307
  %v310 = vtanh.pop %v308
  %313 = vrot.lane.b32.xlu0 %v309, 64
  %v314 = vpop.permute.xlu0 %313
  %315 = vrot.lane.b32.xlu0 %v310, 64
  %v316 = vpop.permute.xlu0 %315
  %v319 = vmul.f32 %v274, %v314
  %v320 = vmul.f32 %v276, %v316
  %323 = vrot.lane.b32.xlu0 %v319, 32
  %v324 = vpop.permute.xlu0 %323
  %325 = vrot.lane.b32.xlu0 %v320, 32
  %v326 = vpop.permute.xlu0 %325
  %329 = vst.msk [vmem:[%s45 + $0x7] sm:$0x1] %vm198, %v324
  %330 = vst.msk [vmem:[%s45 + $0xf] sm:$0x1] %vm198, %v326
  %v331 = vld [vmem:[%s0 + $0x1] sm:$0x1]
  %v332 = vld [vmem:[%s0 + $0x9] sm:$0x1]
  %v333 = vpack.c.bf16 %v188, %v188
  %v334 = vpack.c.bf16 %v189, %v189
  %v337 = vunpack.c.l.b16 %v333
  %v338 = vunpack.c.l.b16 %v334
  %v339 = vrot.slane %v338, 7
  %vm340 = vcmask 1041409
  %v341 = vsel %vm340, %v339, %v337
  %v342 = vpack.c.b16 %v341, %v341
  %343 = vrot.lane.b32.xlu0 %v342, 32
  %v344 = vpop.permute.xlu0 %343
  %v346 = vsel %vm84, %v344, 0
  %348 = vmatprep.subr.bf16.mxu0 0
  %349 = vmatpush1.bf16.msra.mxu0 %v80
  %350 = vmatprep.subr.bf16.mxu0 0
  %351 = vmatpush1.bf16.msra.mxu0 %v81
  %352 = vmatprep.subr.bf16.mxu0 0
  %353 = vmatpush1.bf16.msra.mxu0 0
  %354 = vmatprep.subr.bf16.mxu0 0
  %355 = vmatpush1.bf16.msra.mxu0 0
  %356 = vmatprep.subr.bf16.mxu0 0
  %357 = vmatpush1.bf16.msra.mxu0 0
  %358 = vmatprep.subr.bf16.mxu0 0
  %359 = vmatpush1.bf16.msra.mxu0 0
  %360 = vmatprep.subr.bf16.mxu0 0
  %361 = vmatpush1.bf16.msra.mxu0 0
  %362 = vmatprep.subr.bf16.mxu0 0
  %363 = vmatpush1.bf16.msra.mxu0 0
  %364 = vmatprep.subr.bf16.mxu0 0
  %365 = vmatpush1.bf16.msra.mxu0 0
  %366 = vmatprep.subr.bf16.mxu0 0
  %367 = vmatpush1.bf16.msra.mxu0 0
  %368 = vmatprep.subr.bf16.mxu0 0
  %369 = vmatpush1.bf16.msra.mxu0 0
  %370 = vmatprep.subr.bf16.mxu0 0
  %371 = vmatpush1.bf16.msra.mxu0 0
  %372 = vmatprep.subr.bf16.mxu0 0
  %373 = vmatpush1.bf16.msra.mxu0 0
  %374 = vmatprep.subr.bf16.mxu0 0
  %375 = vmatpush1.bf16.msra.mxu0 0
  %376 = vmatprep.subr.bf16.mxu0 0
  %377 = vmatpush1.bf16.msra.mxu0 0
  %378 = vmatprep.subr.bf16.mxu0 0
  %379 = vmatpush1.bf16.msra.mxu0 0
  %380 = vmatprep.mubr.bf16.mxu0 0
  %381 = vmatmul.mubr.bf16.gmra.mrb[0].mxu0 %v346
  %v382 = vpop.f32.mrb[0].mxu0
  %v383 = vadd.f32 0.0, %v382
  %v384 = vpop.f32.mrb[0].mxu0
  %v385 = vpop.f32.mrb[0].mxu0
  %v386 = vpop.f32.mrb[0].mxu0
  %387 = vdwg.mxu0
  %v389 = vrot.slane %v383, 1
  %v392 = vadd.f32 %v331, %v383
  %v393 = vadd.f32 %v332, %v389
  %v394 = vxor.u32 %v392, 2147483648
  %v395 = vxor.u32 %v393, 2147483648
  %v396 = vmul.f32 %v394, 1.442695
  %v397 = vpow.pop %v396
  %v398 = vmul.f32 %v395, 1.442695
  %v399 = vpow.pop %v398
  %v400 = vadd.f32 %v397, 1.0
  %v401 = vadd.f32 %v399, 1.0
  %v402 = vrcp.pop %v400
  %v403 = vmul.f32 1.0, %v402
  %v404 = vrcp.pop %v401
  %v405 = vmul.f32 1.0, %v404
  %v406 = vtanh.pop %v392
  %v407 = vtanh.pop %v393
  %v408 = vmul.f32 %v403, %v176
  %v409 = vmul.f32 %v405, %v177
  %412 = vrot.lane.b32.xlu0 %v406, 64
  %v413 = vpop.permute.xlu0 %412
  %414 = vrot.lane.b32.xlu0 %v407, 64
  %v415 = vpop.permute.xlu0 %414
  %v418 = vmul.f32 %v403, %v413
  %v419 = vmul.f32 %v405, %v415
  %422 = vrot.lane.b32.xlu0 %v418, 32
  %v423 = vpop.permute.xlu0 %422
  %424 = vrot.lane.b32.xlu0 %v419, 32
  %v425 = vpop.permute.xlu0 %424
  %v428 = vadd.f32 %v408, %v423
  %v429 = vadd.f32 %v409, %v425
  %v430 = vtanh.pop %v428
  %v431 = vtanh.pop %v429
  %434 = vrot.lane.b32.xlu0 %v430, 64
  %v435 = vpop.permute.xlu0 %434
  %436 = vrot.lane.b32.xlu0 %v431, 64
  %v437 = vpop.permute.xlu0 %436
  %v440 = vmul.f32 %v403, %v435
  %v441 = vmul.f32 %v405, %v437
  %444 = vrot.lane.b32.xlu0 %v440, 32
  %v445 = vpop.permute.xlu0 %444
  %446 = vrot.lane.b32.xlu0 %v441, 32
  %v447 = vpop.permute.xlu0 %446
  %450 = vst.msk [vmem:[%s4 + $0x1] sm:$0x1] %vm198, %v445
  %451 = vst.msk [vmem:[%s4 + $0x9] sm:$0x1] %vm198, %v447
  %v452 = vld [vmem:[%s39 + $0x6] sm:$0x1]
  %v453 = vld [vmem:[%s39 + $0xe] sm:$0x1]
  %v454 = vpack.c.bf16 %v319, %v319
  %v455 = vpack.c.bf16 %v320, %v320
  %v458 = vunpack.c.l.b16 %v454
  %v459 = vunpack.c.l.b16 %v455
  %v460 = vrot.slane %v459, 7
  %v461 = vsel %vm340, %v460, %v458
  %v462 = vpack.c.b16 %v461, %v461
  %463 = vrot.lane.b32.xlu0 %v462, 32
  %v464 = vpop.permute.xlu0 %463
  %v466 = vsel %vm84, %v464, 0
  %468 = vmatprep.subr.bf16.mxu0 0
  %469 = vmatpush1.bf16.msra.mxu0 %v212
  %470 = vmatprep.subr.bf16.mxu0 0
  %471 = vmatpush1.bf16.msra.mxu0 %v213
  %472 = vmatprep.subr.bf16.mxu0 0
  %473 = vmatpush1.bf16.msra.mxu0 0
  %474 = vmatprep.subr.bf16.mxu0 0
  %475 = vmatpush1.bf16.msra.mxu0 0
  %476 = vmatprep.subr.bf16.mxu0 0
  %477 = vmatpush1.bf16.msra.mxu0 0
  %478 = vmatprep.subr.bf16.mxu0 0
  %479 = vmatpush1.bf16.msra.mxu0 0
  %480 = vmatprep.subr.bf16.mxu0 0
  %481 = vmatpush1.bf16.msra.mxu0 0
  %482 = vmatprep.subr.bf16.mxu0 0
  %483 = vmatpush1.bf16.msra.mxu0 0
  %484 = vmatprep.subr.bf16.mxu0 0
  %485 = vmatpush1.bf16.msra.mxu0 0
  %486 = vmatprep.subr.bf16.mxu0 0
  %487 = vmatpush1.bf16.msra.mxu0 0
  %488 = vmatprep.subr.bf16.mxu0 0
  %489 = vmatpush1.bf16.msra.mxu0 0
  %490 = vmatprep.subr.bf16.mxu0 0
  %491 = vmatpush1.bf16.msra.mxu0 0
  %492 = vmatprep.subr.bf16.mxu0 0
  %493 = vmatpush1.bf16.msra.mxu0 0
  %494 = vmatprep.subr.bf16.mxu0 0
  %495 = vmatpush1.bf16.msra.mxu0 0
  %496 = vmatprep.subr.bf16.mxu0 0
  %497 = vmatpush1.bf16.msra.mxu0 0
  %498 = vmatprep.subr.bf16.mxu0 0
  %499 = vmatpush1.bf16.msra.mxu0 0
  %500 = vmatprep.mubr.bf16.mxu0 0
  %501 = vmatmul.mubr.bf16.gmra.mrb[0].mxu0 %v466
  %v502 = vpop.f32.mrb[0].mxu0
  %v503 = vadd.f32 0.0, %v502
  %v504 = vpop.f32.mrb[0].mxu0
  %v505 = vpop.f32.mrb[0].mxu0
  %v506 = vpop.f32.mrb[0].mxu0
  %507 = vdwg.mxu0
  %v509 = vrot.slane %v503, 1
  %v512 = vadd.f32 %v452, %v503
  %v513 = vadd.f32 %v453, %v509
  %v514 = vxor.u32 %v512, 2147483648
  %v515 = vxor.u32 %v513, 2147483648
  %v516 = vmul.f32 %v514, 1.442695
  %v517 = vpow.pop %v516
  %v518 = vmul.f32 %v515, 1.442695
  %v519 = vpow.pop %v518
  %v520 = vadd.f32 %v517, 1.0
  %v521 = vadd.f32 %v519, 1.0
  %v522 = vrcp.pop %v520
  %v523 = vmul.f32 1.0, %v522
  %v524 = vrcp.pop %v521
  %v525 = vmul.f32 1.0, %v524
  %v526 = vtanh.pop %v512
  %v527 = vtanh.pop %v513
  %v528 = vmul.f32 %v523, %v307
  %v529 = vmul.f32 %v525, %v308
  %532 = vrot.lane.b32.xlu0 %v526, 64
  %v533 = vpop.permute.xlu0 %532
  %534 = vrot.lane.b32.xlu0 %v527, 64
  %v535 = vpop.permute.xlu0 %534
  %v538 = vmul.f32 %v523, %v533
  %v539 = vmul.f32 %v525, %v535
  %542 = vrot.lane.b32.xlu0 %v538, 32
  %v543 = vpop.permute.xlu0 %542
  %544 = vrot.lane.b32.xlu0 %v539, 32
  %v545 = vpop.permute.xlu0 %544
  %v548 = vadd.f32 %v528, %v543
  %v549 = vadd.f32 %v529, %v545
  %v550 = vtanh.pop %v548
  %v551 = vtanh.pop %v549
  %554 = vrot.lane.b32.xlu0 %v550, 64
  %v555 = vpop.permute.xlu0 %554
  %556 = vrot.lane.b32.xlu0 %v551, 64
  %v557 = vpop.permute.xlu0 %556
  %v560 = vmul.f32 %v523, %v555
  %v561 = vmul.f32 %v525, %v557
  %564 = vrot.lane.b32.xlu0 %v560, 32
  %v565 = vpop.permute.xlu0 %564
  %566 = vrot.lane.b32.xlu0 %v561, 32
  %v567 = vpop.permute.xlu0 %566
  %570 = vst.msk [vmem:[%s45 + $0x6] sm:$0x1] %vm198, %v565
  %571 = vst.msk [vmem:[%s45 + $0xe] sm:$0x1] %vm198, %v567
  %v572 = vld [vmem:[%s0 + $0x2] sm:$0x1]
  %v573 = vld [vmem:[%s0 + $0xa] sm:$0x1]
  %v574 = vpack.c.bf16 %v440, %v440
  %v575 = vpack.c.bf16 %v441, %v441
  %v578 = vunpack.c.l.b16 %v574
  %v579 = vunpack.c.l.b16 %v575
  %v580 = vrot.slane %v579, 7
  %v581 = vsel %vm340, %v580, %v578
  %v582 = vpack.c.b16 %v581, %v581
  %583 = vrot.lane.b32.xlu0 %v582, 32
  %v584 = vpop.permute.xlu0 %583
  %v586 = vsel %vm84, %v584, 0
  %588 = vmatprep.subr.bf16.mxu0 0
  %589 = vmatpush1.bf16.msra.mxu0 %v80
  %590 = vmatprep.subr.bf16.mxu0 0
  %591 = vmatpush1.bf16.msra.mxu0 %v81
  %592 = vmatprep.subr.bf16.mxu0 0
  %593 = vmatpush1.bf16.msra.mxu0 0
  %594 = vmatprep.subr.bf16.mxu0 0
  %595 = vmatpush1.bf16.msra.mxu0 0
  %596 = vmatprep.subr.bf16.mxu0 0
  %597 = vmatpush1.bf16.msra.mxu0 0
  %598 = vmatprep.subr.bf16.mxu0 0
  %599 = vmatpush1.bf16.msra.mxu0 0
  %600 = vmatprep.subr.bf16.mxu0 0
  %601 = vmatpush1.bf16.msra.mxu0 0
  %602 = vmatprep.subr.bf16.mxu0 0
  %603 = vmatpush1.bf16.msra.mxu0 0
  %604 = vmatprep.subr.bf16.mxu0 0
  %605 = vmatpush1.bf16.msra.mxu0 0
  %606 = vmatprep.subr.bf16.mxu0 0
  %607 = vmatpush1.bf16.msra.mxu0 0
  %608 = vmatprep.subr.bf16.mxu0 0
  %609 = vmatpush1.bf16.msra.mxu0 0
  %610 = vmatprep.subr.bf16.mxu0 0
  %611 = vmatpush1.bf16.msra.mxu0 0
  %612 = vmatprep.subr.bf16.mxu0 0
  %613 = vmatpush1.bf16.msra.mxu0 0
  %614 = vmatprep.subr.bf16.mxu0 0
  %615 = vmatpush1.bf16.msra.mxu0 0
  %616 = vmatprep.subr.bf16.mxu0 0
  %617 = vmatpush1.bf16.msra.mxu0 0
  %618 = vmatprep.subr.bf16.mxu0 0
  %619 = vmatpush1.bf16.msra.mxu0 0
  %620 = vmatprep.mubr.bf16.mxu0 0
  %621 = vmatmul.mubr.bf16.gmra.mrb[0].mxu0 %v586
  %v622 = vpop.f32.mrb[0].mxu0
  %v623 = vadd.f32 0.0, %v622
  %v624 = vpop.f32.mrb[0].mxu0
  %v625 = vpop.f32.mrb[0].mxu0
  %v626 = vpop.f32.mrb[0].mxu0
  %627 = vdwg.mxu0
  %v629 = vrot.slane %v623, 1
  %v632 = vadd.f32 %v572, %v623
  %v633 = vadd.f32 %v573, %v629
  %v634 = vxor.u32 %v632, 2147483648
  %v635 = vxor.u32 %v633, 2147483648
  %v636 = vmul.f32 %v634, 1.442695
  %v637 = vpow.pop %v636
  %v638 = vmul.f32 %v635, 1.442695
  %v639 = vpow.pop %v638
  %v640 = vadd.f32 %v637, 1.0
  %v641 = vadd.f32 %v639, 1.0
  %v642 = vrcp.pop %v640
  %v643 = vmul.f32 1.0, %v642
  %v644 = vrcp.pop %v641
  %v645 = vmul.f32 1.0, %v644
  %v646 = vtanh.pop %v632
  %v647 = vtanh.pop %v633
  %v648 = vmul.f32 %v643, %v428
  %v649 = vmul.f32 %v645, %v429
  %652 = vrot.lane.b32.xlu0 %v646, 64
  %v653 = vpop.permute.xlu0 %652
  %654 = vrot.lane.b32.xlu0 %v647, 64
  %v655 = vpop.permute.xlu0 %654
  %v658 = vmul.f32 %v643, %v653
  %v659 = vmul.f32 %v645, %v655
  %662 = vrot.lane.b32.xlu0 %v658, 32
  %v663 = vpop.permute.xlu0 %662
  %664 = vrot.lane.b32.xlu0 %v659, 32
  %v665 = vpop.permute.xlu0 %664
  %v668 = vadd.f32 %v648, %v663
  %v669 = vadd.f32 %v649, %v665
  %v670 = vtanh.pop %v668
  %v671 = vtanh.pop %v669
  %674 = vrot.lane.b32.xlu0 %v670, 64
  %v675 = vpop.permute.xlu0 %674
  %676 = vrot.lane.b32.xlu0 %v671, 64
  %v677 = vpop.permute.xlu0 %676
  %v680 = vmul.f32 %v643, %v675
  %v681 = vmul.f32 %v645, %v677
  %684 = vrot.lane.b32.xlu0 %v680, 32
  %v685 = vpop.permute.xlu0 %684
  %686 = vrot.lane.b32.xlu0 %v681, 32
  %v687 = vpop.permute.xlu0 %686
  %690 = vst.msk [vmem:[%s4 + $0x2] sm:$0x1] %vm198, %v685
  %691 = vst.msk [vmem:[%s4 + $0xa] sm:$0x1] %vm198, %v687
  %v692 = vld [vmem:[%s39 + $0x5] sm:$0x1]
  %v693 = vld [vmem:[%s39 + $0xd] sm:$0x1]
  %v694 = vpack.c.bf16 %v560, %v560
  %v695 = vpack.c.bf16 %v561, %v561
  %v698 = vunpack.c.l.b16 %v694
  %v699 = vunpack.c.l.b16 %v695
  %v700 = vrot.slane %v699, 7
  %v701 = vsel %vm340, %v700, %v698
  %v702 = vpack.c.b16 %v701, %v701
  %703 = vrot.lane.b32.xlu0 %v702, 32
  %v704 = vpop.permute.xlu0 %703
  %v706 = vsel %vm84, %v704, 0
  %708 = vmatprep.subr.bf16.mxu0 0
  %709 = vmatpush1.bf16.msra.mxu0 %v212
  %710 = vmatprep.subr.bf16.mxu0 0
  %711 = vmatpush1.bf16.msra.mxu0 %v213
  %712 = vmatprep.subr.bf16.mxu0 0
  %713 = vmatpush1.bf16.msra.mxu0 0
  %714 = vmatprep.subr.bf16.mxu0 0
  %715 = vmatpush1.bf16.msra.mxu0 0
  %716 = vmatprep.subr.bf16.mxu0 0
  %717 = vmatpush1.bf16.msra.mxu0 0
  %718 = vmatprep.subr.bf16.mxu0 0
  %719 = vmatpush1.bf16.msra.mxu0 0
  %720 = vmatprep.subr.bf16.mxu0 0
  %721 = vmatpush1.bf16.msra.mxu0 0
  %722 = vmatprep.subr.bf16.mxu0 0
  %723 = vmatpush1.bf16.msra.mxu0 0
  %724 = vmatprep.subr.bf16.mxu0 0
  %725 = vmatpush1.bf16.msra.mxu0 0
  %726 = vmatprep.subr.bf16.mxu0 0
  %727 = vmatpush1.bf16.msra.mxu0 0
  %728 = vmatprep.subr.bf16.mxu0 0
  %729 = vmatpush1.bf16.msra.mxu0 0
  %730 = vmatprep.subr.bf16.mxu0 0
  %731 = vmatpush1.bf16.msra.mxu0 0
  %732 = vmatprep.subr.bf16.mxu0 0
  %733 = vmatpush1.bf16.msra.mxu0 0
  %734 = vmatprep.subr.bf16.mxu0 0
  %735 = vmatpush1.bf16.msra.mxu0 0
  %736 = vmatprep.subr.bf16.mxu0 0
  %737 = vmatpush1.bf16.msra.mxu0 0
  %738 = vmatprep.subr.bf16.mxu0 0
  %739 = vmatpush1.bf16.msra.mxu0 0
  %740 = vmatprep.mubr.bf16.mxu0 0
  %741 = vmatmul.mubr.bf16.gmra.mrb[0].mxu0 %v706
  %v742 = vpop.f32.mrb[0].mxu0
  %v743 = vadd.f32 0.0, %v742
  %v744 = vpop.f32.mrb[0].mxu0
  %v745 = vpop.f32.mrb[0].mxu0
  %v746 = vpop.f32.mrb[0].mxu0
  %747 = vdwg.mxu0
  %v749 = vrot.slane %v743, 1
  %v752 = vadd.f32 %v692, %v743
  %v753 = vadd.f32 %v693, %v749
  %v754 = vxor.u32 %v752, 2147483648
  %v755 = vxor.u32 %v753, 2147483648
  %v756 = vmul.f32 %v754, 1.442695
  %v757 = vpow.pop %v756
  %v758 = vmul.f32 %v755, 1.442695
  %v759 = vpow.pop %v758
  %v760 = vadd.f32 %v757, 1.0
  %v761 = vadd.f32 %v759, 1.0
  %v762 = vrcp.pop %v760
  %v763 = vmul.f32 1.0, %v762
  %v764 = vrcp.pop %v761
  %v765 = vmul.f32 1.0, %v764
  %v766 = vtanh.pop %v752
  %v767 = vtanh.pop %v753
  %v768 = vmul.f32 %v763, %v548
  %v769 = vmul.f32 %v765, %v549
  %772 = vrot.lane.b32.xlu0 %v766, 64
  %v773 = vpop.permute.xlu0 %772
  %774 = vrot.lane.b32.xlu0 %v767, 64
  %v775 = vpop.permute.xlu0 %774
  %v778 = vmul.f32 %v763, %v773
  %v779 = vmul.f32 %v765, %v775
  %782 = vrot.lane.b32.xlu0 %v778, 32
  %v783 = vpop.permute.xlu0 %782
  %784 = vrot.lane.b32.xlu0 %v779, 32
  %v785 = vpop.permute.xlu0 %784
  %v788 = vadd.f32 %v768, %v783
  %v789 = vadd.f32 %v769, %v785
  %v790 = vtanh.pop %v788
  %v791 = vtanh.pop %v789
  %794 = vrot.lane.b32.xlu0 %v790, 64
  %v795 = vpop.permute.xlu0 %794
  %796 = vrot.lane.b32.xlu0 %v791, 64
  %v797 = vpop.permute.xlu0 %796
  %v800 = vmul.f32 %v763, %v795
  %v801 = vmul.f32 %v765, %v797
  %804 = vrot.lane.b32.xlu0 %v800, 32
  %v805 = vpop.permute.xlu0 %804
  %806 = vrot.lane.b32.xlu0 %v801, 32
  %v807 = vpop.permute.xlu0 %806
  %810 = vst.msk [vmem:[%s45 + $0x5] sm:$0x1] %vm198, %v805
  %811 = vst.msk [vmem:[%s45 + $0xd] sm:$0x1] %vm198, %v807
  %v812 = vld [vmem:[%s0 + $0x3] sm:$0x1]
  %v813 = vld [vmem:[%s0 + $0xb] sm:$0x1]
  %v814 = vpack.c.bf16 %v680, %v680
  %v815 = vpack.c.bf16 %v681, %v681
  %v818 = vunpack.c.l.b16 %v814
  %v819 = vunpack.c.l.b16 %v815
  %v820 = vrot.slane %v819, 7
  %v821 = vsel %vm340, %v820, %v818
  %v822 = vpack.c.b16 %v821, %v821
  %823 = vrot.lane.b32.xlu0 %v822, 32
  %v824 = vpop.permute.xlu0 %823
  %v826 = vsel %vm84, %v824, 0
  %828 = vmatprep.subr.bf16.mxu0 0
  %829 = vmatpush1.bf16.msra.mxu0 %v80
  %830 = vmatprep.subr.bf16.mxu0 0
  %831 = vmatpush1.bf16.msra.mxu0 %v81
  %832 = vmatprep.subr.bf16.mxu0 0
  %833 = vmatpush1.bf16.msra.mxu0 0
  %834 = vmatprep.subr.bf16.mxu0 0
  %835 = vmatpush1.bf16.msra.mxu0 0
  %836 = vmatprep.subr.bf16.mxu0 0
  %837 = vmatpush1.bf16.msra.mxu0 0
  %838 = vmatprep.subr.bf16.mxu0 0
  %839 = vmatpush1.bf16.msra.mxu0 0
  %840 = vmatprep.subr.bf16.mxu0 0
  %841 = vmatpush1.bf16.msra.mxu0 0
  %842 = vmatprep.subr.bf16.mxu0 0
  %843 = vmatpush1.bf16.msra.mxu0 0
  %844 = vmatprep.subr.bf16.mxu0 0
  %845 = vmatpush1.bf16.msra.mxu0 0
  %846 = vmatprep.subr.bf16.mxu0 0
  %847 = vmatpush1.bf16.msra.mxu0 0
  %848 = vmatprep.subr.bf16.mxu0 0
  %849 = vmatpush1.bf16.msra.mxu0 0
  %850 = vmatprep.subr.bf16.mxu0 0
  %851 = vmatpush1.bf16.msra.mxu0 0
  %852 = vmatprep.subr.bf16.mxu0 0
  %853 = vmatpush1.bf16.msra.mxu0 0
  %854 = vmatprep.subr.bf16.mxu0 0
  %855 = vmatpush1.bf16.msra.mxu0 0
  %856 = vmatprep.subr.bf16.mxu0 0
  %857 = vmatpush1.bf16.msra.mxu0 0
  %858 = vmatprep.subr.bf16.mxu0 0
  %859 = vmatpush1.bf16.msra.mxu0 0
  %860 = vmatprep.mubr.bf16.mxu0 0
  %861 = vmatmul.mubr.bf16.gmra.mrb[0].mxu0 %v826
  %v862 = vpop.f32.mrb[0].mxu0
  %v863 = vadd.f32 0.0, %v862
  %v864 = vpop.f32.mrb[0].mxu0
  %v865 = vpop.f32.mrb[0].mxu0
  %v866 = vpop.f32.mrb[0].mxu0
  %867 = vdwg.mxu0
  %v869 = vrot.slane %v863, 1
  %v872 = vadd.f32 %v812, %v863
  %v873 = vadd.f32 %v813, %v869
  %v874 = vxor.u32 %v872, 2147483648
  %v875 = vxor.u32 %v873, 2147483648
  %v876 = vmul.f32 %v874, 1.442695
  %v877 = vpow.pop %v876
  %v878 = vmul.f32 %v875, 1.442695
  %v879 = vpow.pop %v878
  %v880 = vadd.f32 %v877, 1.0
  %v881 = vadd.f32 %v879, 1.0
  %v882 = vrcp.pop %v880
  %v883 = vmul.f32 1.0, %v882
  %v884 = vrcp.pop %v881
  %v885 = vmul.f32 1.0, %v884
  %v886 = vtanh.pop %v872
  %v887 = vtanh.pop %v873
  %v888 = vmul.f32 %v883, %v668
  %v889 = vmul.f32 %v885, %v669
  %892 = vrot.lane.b32.xlu0 %v886, 64
  %v893 = vpop.permute.xlu0 %892
  %894 = vrot.lane.b32.xlu0 %v887, 64
  %v895 = vpop.permute.xlu0 %894
  %v898 = vmul.f32 %v883, %v893
  %v899 = vmul.f32 %v885, %v895
  %902 = vrot.lane.b32.xlu0 %v898, 32
  %v903 = vpop.permute.xlu0 %902
  %904 = vrot.lane.b32.xlu0 %v899, 32
  %v905 = vpop.permute.xlu0 %904
  %v908 = vadd.f32 %v888, %v903
  %v909 = vadd.f32 %v889, %v905
  %v910 = vtanh.pop %v908
  %v911 = vtanh.pop %v909
  %914 = vrot.lane.b32.xlu0 %v910, 64
  %v915 = vpop.permute.xlu0 %914
  %916 = vrot.lane.b32.xlu0 %v911, 64
  %v917 = vpop.permute.xlu0 %916
  %v920 = vmul.f32 %v883, %v915
  %v921 = vmul.f32 %v885, %v917
  %924 = vrot.lane.b32.xlu0 %v920, 32
  %v925 = vpop.permute.xlu0 %924
  %926 = vrot.lane.b32.xlu0 %v921, 32
  %v927 = vpop.permute.xlu0 %926
  %930 = vst.msk [vmem:[%s4 + $0x3] sm:$0x1] %vm198, %v925
  %931 = vst.msk [vmem:[%s4 + $0xb] sm:$0x1] %vm198, %v927
  %v932 = vld [vmem:[%s39 + $0x4] sm:$0x1]
  %v933 = vld [vmem:[%s39 + $0xc] sm:$0x1]
  %v934 = vpack.c.bf16 %v800, %v800
  %v935 = vpack.c.bf16 %v801, %v801
  %v938 = vunpack.c.l.b16 %v934
  %v939 = vunpack.c.l.b16 %v935
  %v940 = vrot.slane %v939, 7
  %v941 = vsel %vm340, %v940, %v938
  %v942 = vpack.c.b16 %v941, %v941
  %943 = vrot.lane.b32.xlu0 %v942, 32
  %v944 = vpop.permute.xlu0 %943
  %v946 = vsel %vm84, %v944, 0
  %948 = vmatprep.subr.bf16.mxu0 0
  %949 = vmatpush1.bf16.msra.mxu0 %v212
  %950 = vmatprep.subr.bf16.mxu0 0
  %951 = vmatpush1.bf16.msra.mxu0 %v213
  %952 = vmatprep.subr.bf16.mxu0 0
  %953 = vmatpush1.bf16.msra.mxu0 0
  %954 = vmatprep.subr.bf16.mxu0 0
  %955 = vmatpush1.bf16.msra.mxu0 0
  %956 = vmatprep.subr.bf16.mxu0 0
  %957 = vmatpush1.bf16.msra.mxu0 0
  %958 = vmatprep.subr.bf16.mxu0 0
  %959 = vmatpush1.bf16.msra.mxu0 0
  %960 = vmatprep.subr.bf16.mxu0 0
  %961 = vmatpush1.bf16.msra.mxu0 0
  %962 = vmatprep.subr.bf16.mxu0 0
  %963 = vmatpush1.bf16.msra.mxu0 0
  %964 = vmatprep.subr.bf16.mxu0 0
  %965 = vmatpush1.bf16.msra.mxu0 0
  %966 = vmatprep.subr.bf16.mxu0 0
  %967 = vmatpush1.bf16.msra.mxu0 0
  %968 = vmatprep.subr.bf16.mxu0 0
  %969 = vmatpush1.bf16.msra.mxu0 0
  %970 = vmatprep.subr.bf16.mxu0 0
  %971 = vmatpush1.bf16.msra.mxu0 0
  %972 = vmatprep.subr.bf16.mxu0 0
  %973 = vmatpush1.bf16.msra.mxu0 0
  %974 = vmatprep.subr.bf16.mxu0 0
  %975 = vmatpush1.bf16.msra.mxu0 0
  %976 = vmatprep.subr.bf16.mxu0 0
  %977 = vmatpush1.bf16.msra.mxu0 0
  %978 = vmatprep.subr.bf16.mxu0 0
  %979 = vmatpush1.bf16.msra.mxu0 0
  %980 = vmatprep.mubr.bf16.mxu0 0
  %981 = vmatmul.mubr.bf16.gmra.mrb[0].mxu0 %v946
  %v982 = vpop.f32.mrb[0].mxu0
  %v983 = vadd.f32 0.0, %v982
  %v984 = vpop.f32.mrb[0].mxu0
  %v985 = vpop.f32.mrb[0].mxu0
  %v986 = vpop.f32.mrb[0].mxu0
  %987 = vdwg.mxu0
  %v989 = vrot.slane %v983, 1
  %v992 = vadd.f32 %v932, %v983
  %v993 = vadd.f32 %v933, %v989
  %v994 = vxor.u32 %v992, 2147483648
  %v995 = vxor.u32 %v993, 2147483648
  %v996 = vmul.f32 %v994, 1.442695
  %v997 = vpow.pop %v996
  %v998 = vmul.f32 %v995, 1.442695
  %v999 = vpow.pop %v998
  %v1000 = vadd.f32 %v997, 1.0
  %v1001 = vadd.f32 %v999, 1.0
  %v1002 = vrcp.pop %v1000
  %v1003 = vmul.f32 1.0, %v1002
  %v1004 = vrcp.pop %v1001
  %v1005 = vmul.f32 1.0, %v1004
  %v1006 = vtanh.pop %v992
  %v1007 = vtanh.pop %v993
  %v1008 = vmul.f32 %v1003, %v788
  %v1009 = vmul.f32 %v1005, %v789
  %1012 = vrot.lane.b32.xlu0 %v1006, 64
  %v1013 = vpop.permute.xlu0 %1012
  %1014 = vrot.lane.b32.xlu0 %v1007, 64
  %v1015 = vpop.permute.xlu0 %1014
  %v1018 = vmul.f32 %v1003, %v1013
  %v1019 = vmul.f32 %v1005, %v1015
  %1022 = vrot.lane.b32.xlu0 %v1018, 32
  %v1023 = vpop.permute.xlu0 %1022
  %1024 = vrot.lane.b32.xlu0 %v1019, 32
  %v1025 = vpop.permute.xlu0 %1024
  %v1028 = vadd.f32 %v1008, %v1023
  %v1029 = vadd.f32 %v1009, %v1025
  %v1030 = vtanh.pop %v1028
  %v1031 = vtanh.pop %v1029
  %1034 = vrot.lane.b32.xlu0 %v1030, 64
  %v1035 = vpop.permute.xlu0 %1034
  %1036 = vrot.lane.b32.xlu0 %v1031, 64
  %v1037 = vpop.permute.xlu0 %1036
  %v1040 = vmul.f32 %v1003, %v1035
  %v1041 = vmul.f32 %v1005, %v1037
  %1044 = vrot.lane.b32.xlu0 %v1040, 32
  %v1045 = vpop.permute.xlu0 %1044
  %1046 = vrot.lane.b32.xlu0 %v1041, 32
  %v1047 = vpop.permute.xlu0 %1046
  %1050 = vst.msk [vmem:[%s45 + $0x4] sm:$0x1] %vm198, %v1045
  %1051 = vst.msk [vmem:[%s45 + $0xc] sm:$0x1] %vm198, %v1047
  %v1052 = vld [vmem:[%s0 + $0x4] sm:$0x1]
  %v1053 = vld [vmem:[%s0 + $0xc] sm:$0x1]
  %v1054 = vpack.c.bf16 %v920, %v920
  %v1055 = vpack.c.bf16 %v921, %v921
  %v1058 = vunpack.c.l.b16 %v1054
  %v1059 = vunpack.c.l.b16 %v1055
  %v1060 = vrot.slane %v1059, 7
  %v1061 = vsel %vm340, %v1060, %v1058
  %v1062 = vpack.c.b16 %v1061, %v1061
  %1063 = vrot.lane.b32.xlu0 %v1062, 32
  %v1064 = vpop.permute.xlu0 %1063
  %v1066 = vsel %vm84, %v1064, 0
  %1068 = vmatprep.subr.bf16.mxu0 0
  %1069 = vmatpush1.bf16.msra.mxu0 %v80
  %1070 = vmatprep.subr.bf16.mxu0 0
  %1071 = vmatpush1.bf16.msra.mxu0 %v81
  %1072 = vmatprep.subr.bf16.mxu0 0
  %1073 = vmatpush1.bf16.msra.mxu0 0
  %1074 = vmatprep.subr.bf16.mxu0 0
  %1075 = vmatpush1.bf16.msra.mxu0 0
  %1076 = vmatprep.subr.bf16.mxu0 0
  %1077 = vmatpush1.bf16.msra.mxu0 0
  %1078 = vmatprep.subr.bf16.mxu0 0
  %1079 = vmatpush1.bf16.msra.mxu0 0
  %1080 = vmatprep.subr.bf16.mxu0 0
  %1081 = vmatpush1.bf16.msra.mxu0 0
  %1082 = vmatprep.subr.bf16.mxu0 0
  %1083 = vmatpush1.bf16.msra.mxu0 0
  %1084 = vmatprep.subr.bf16.mxu0 0
  %1085 = vmatpush1.bf16.msra.mxu0 0
  %1086 = vmatprep.subr.bf16.mxu0 0
  %1087 = vmatpush1.bf16.msra.mxu0 0
  %1088 = vmatprep.subr.bf16.mxu0 0
  %1089 = vmatpush1.bf16.msra.mxu0 0
  %1090 = vmatprep.subr.bf16.mxu0 0
  %1091 = vmatpush1.bf16.msra.mxu0 0
  %1092 = vmatprep.subr.bf16.mxu0 0
  %1093 = vmatpush1.bf16.msra.mxu0 0
  %1094 = vmatprep.subr.bf16.mxu0 0
  %1095 = vmatpush1.bf16.msra.mxu0 0
  %1096 = vmatprep.subr.bf16.mxu0 0
  %1097 = vmatpush1.bf16.msra.mxu0 0
  %1098 = vmatprep.subr.bf16.mxu0 0
  %1099 = vmatpush1.bf16.msra.mxu0 0
  %1100 = vmatprep.mubr.bf16.mxu0 0
  %1101 = vmatmul.mubr.bf16.gmra.mrb[0].mxu0 %v1066
  %v1102 = vpop.f32.mrb[0].mxu0
  %v1103 = vadd.f32 0.0, %v1102
  %v1104 = vpop.f32.mrb[0].mxu0
  %v1105 = vpop.f32.mrb[0].mxu0
  %v1106 = vpop.f32.mrb[0].mxu0
  %1107 = vdwg.mxu0
  %v1109 = vrot.slane %v1103, 1
  %v1112 = vadd.f32 %v1052, %v1103
  %v1113 = vadd.f32 %v1053, %v1109
  %v1114 = vxor.u32 %v1112, 2147483648
  %v1115 = vxor.u32 %v1113, 2147483648
  %v1116 = vmul.f32 %v1114, 1.442695
  %v1117 = vpow.pop %v1116
  %v1118 = vmul.f32 %v1115, 1.442695
  %v1119 = vpow.pop %v1118
  %v1120 = vadd.f32 %v1117, 1.0
  %v1121 = vadd.f32 %v1119, 1.0
  %v1122 = vrcp.pop %v1120
  %v1123 = vmul.f32 1.0, %v1122
  %v1124 = vrcp.pop %v1121
  %v1125 = vmul.f32 1.0, %v1124
  %v1126 = vtanh.pop %v1112
  %v1127 = vtanh.pop %v1113
  %v1128 = vmul.f32 %v1123, %v908
  %v1129 = vmul.f32 %v1125, %v909
  %1132 = vrot.lane.b32.xlu0 %v1126, 64
  %v1133 = vpop.permute.xlu0 %1132
  %1134 = vrot.lane.b32.xlu0 %v1127, 64
  %v1135 = vpop.permute.xlu0 %1134
  %v1138 = vmul.f32 %v1123, %v1133
  %v1139 = vmul.f32 %v1125, %v1135
  %1142 = vrot.lane.b32.xlu0 %v1138, 32
  %v1143 = vpop.permute.xlu0 %1142
  %1144 = vrot.lane.b32.xlu0 %v1139, 32
  %v1145 = vpop.permute.xlu0 %1144
  %v1148 = vadd.f32 %v1128, %v1143
  %v1149 = vadd.f32 %v1129, %v1145
  %v1150 = vtanh.pop %v1148
  %v1151 = vtanh.pop %v1149
  %1154 = vrot.lane.b32.xlu0 %v1150, 64
  %v1155 = vpop.permute.xlu0 %1154
  %1156 = vrot.lane.b32.xlu0 %v1151, 64
  %v1157 = vpop.permute.xlu0 %1156
  %v1160 = vmul.f32 %v1123, %v1155
  %v1161 = vmul.f32 %v1125, %v1157
  %1164 = vrot.lane.b32.xlu0 %v1160, 32
  %v1165 = vpop.permute.xlu0 %1164
  %1166 = vrot.lane.b32.xlu0 %v1161, 32
  %v1167 = vpop.permute.xlu0 %1166
  %1170 = vst.msk [vmem:[%s4 + $0x4] sm:$0x1] %vm198, %v1165
  %1171 = vst.msk [vmem:[%s4 + $0xc] sm:$0x1] %vm198, %v1167
  %v1172 = vld [vmem:[%s39 + $0x3] sm:$0x1]
  %v1173 = vld [vmem:[%s39 + $0xb] sm:$0x1]
  %v1174 = vpack.c.bf16 %v1040, %v1040
  %v1175 = vpack.c.bf16 %v1041, %v1041
  %v1178 = vunpack.c.l.b16 %v1174
  %v1179 = vunpack.c.l.b16 %v1175
  %v1180 = vrot.slane %v1179, 7
  %v1181 = vsel %vm340, %v1180, %v1178
  %v1182 = vpack.c.b16 %v1181, %v1181
  %1183 = vrot.lane.b32.xlu0 %v1182, 32
  %v1184 = vpop.permute.xlu0 %1183
  %v1186 = vsel %vm84, %v1184, 0
  %1188 = vmatprep.subr.bf16.mxu0 0
  %1189 = vmatpush1.bf16.msra.mxu0 %v212
  %1190 = vmatprep.subr.bf16.mxu0 0
  %1191 = vmatpush1.bf16.msra.mxu0 %v213
  %1192 = vmatprep.subr.bf16.mxu0 0
  %1193 = vmatpush1.bf16.msra.mxu0 0
  %1194 = vmatprep.subr.bf16.mxu0 0
  %1195 = vmatpush1.bf16.msra.mxu0 0
  %1196 = vmatprep.subr.bf16.mxu0 0
  %1197 = vmatpush1.bf16.msra.mxu0 0
  %1198 = vmatprep.subr.bf16.mxu0 0
  %1199 = vmatpush1.bf16.msra.mxu0 0
  %1200 = vmatprep.subr.bf16.mxu0 0
  %1201 = vmatpush1.bf16.msra.mxu0 0
  %1202 = vmatprep.subr.bf16.mxu0 0
  %1203 = vmatpush1.bf16.msra.mxu0 0
  %1204 = vmatprep.subr.bf16.mxu0 0
  %1205 = vmatpush1.bf16.msra.mxu0 0
  %1206 = vmatprep.subr.bf16.mxu0 0
  %1207 = vmatpush1.bf16.msra.mxu0 0
  %1208 = vmatprep.subr.bf16.mxu0 0
  %1209 = vmatpush1.bf16.msra.mxu0 0
  %1210 = vmatprep.subr.bf16.mxu0 0
  %1211 = vmatpush1.bf16.msra.mxu0 0
  %1212 = vmatprep.subr.bf16.mxu0 0
  %1213 = vmatpush1.bf16.msra.mxu0 0
  %1214 = vmatprep.subr.bf16.mxu0 0
  %1215 = vmatpush1.bf16.msra.mxu0 0
  %1216 = vmatprep.subr.bf16.mxu0 0
  %1217 = vmatpush1.bf16.msra.mxu0 0
  %1218 = vmatprep.subr.bf16.mxu0 0
  %1219 = vmatpush1.bf16.msra.mxu0 0
  %1220 = vmatprep.mubr.bf16.mxu0 0
  %1221 = vmatmul.mubr.bf16.gmra.mrb[0].mxu0 %v1186
  %v1222 = vpop.f32.mrb[0].mxu0
  %v1223 = vadd.f32 0.0, %v1222
  %v1224 = vpop.f32.mrb[0].mxu0
  %v1225 = vpop.f32.mrb[0].mxu0
  %v1226 = vpop.f32.mrb[0].mxu0
  %1227 = vdwg.mxu0
  %v1229 = vrot.slane %v1223, 1
  %v1232 = vadd.f32 %v1172, %v1223
  %v1233 = vadd.f32 %v1173, %v1229
  %v1234 = vxor.u32 %v1232, 2147483648
  %v1235 = vxor.u32 %v1233, 2147483648
  %v1236 = vmul.f32 %v1234, 1.442695
  %v1237 = vpow.pop %v1236
  %v1238 = vmul.f32 %v1235, 1.442695
  %v1239 = vpow.pop %v1238
  %v1240 = vadd.f32 %v1237, 1.0
  %v1241 = vadd.f32 %v1239, 1.0
  %v1242 = vrcp.pop %v1240
  %v1243 = vmul.f32 1.0, %v1242
  %v1244 = vrcp.pop %v1241
  %v1245 = vmul.f32 1.0, %v1244
  %v1246 = vtanh.pop %v1232
  %v1247 = vtanh.pop %v1233
  %v1248 = vmul.f32 %v1243, %v1028
  %v1249 = vmul.f32 %v1245, %v1029
  %1252 = vrot.lane.b32.xlu0 %v1246, 64
  %v1253 = vpop.permute.xlu0 %1252
  %1254 = vrot.lane.b32.xlu0 %v1247, 64
  %v1255 = vpop.permute.xlu0 %1254
  %v1258 = vmul.f32 %v1243, %v1253
  %v1259 = vmul.f32 %v1245, %v1255
  %1262 = vrot.lane.b32.xlu0 %v1258, 32
  %v1263 = vpop.permute.xlu0 %1262
  %1264 = vrot.lane.b32.xlu0 %v1259, 32
  %v1265 = vpop.permute.xlu0 %1264
  %v1268 = vadd.f32 %v1248, %v1263
  %v1269 = vadd.f32 %v1249, %v1265
  %v1270 = vtanh.pop %v1268
  %v1271 = vtanh.pop %v1269
  %1274 = vrot.lane.b32.xlu0 %v1270, 64
  %v1275 = vpop.permute.xlu0 %1274
  %1276 = vrot.lane.b32.xlu0 %v1271, 64
  %v1277 = vpop.permute.xlu0 %1276
  %v1280 = vmul.f32 %v1243, %v1275
  %v1281 = vmul.f32 %v1245, %v1277
  %1284 = vrot.lane.b32.xlu0 %v1280, 32
  %v1285 = vpop.permute.xlu0 %1284
  %1286 = vrot.lane.b32.xlu0 %v1281, 32
  %v1287 = vpop.permute.xlu0 %1286
  %1290 = vst.msk [vmem:[%s45 + $0x3] sm:$0x1] %vm198, %v1285
  %1291 = vst.msk [vmem:[%s45 + $0xb] sm:$0x1] %vm198, %v1287
  %v1292 = vld [vmem:[%s0 + $0x5] sm:$0x1]
  %v1293 = vld [vmem:[%s0 + $0xd] sm:$0x1]
  %v1294 = vpack.c.bf16 %v1160, %v1160
  %v1295 = vpack.c.bf16 %v1161, %v1161
  %v1298 = vunpack.c.l.b16 %v1294
  %v1299 = vunpack.c.l.b16 %v1295
  %v1300 = vrot.slane %v1299, 7
  %v1301 = vsel %vm340, %v1300, %v1298
  %v1302 = vpack.c.b16 %v1301, %v1301
  %1303 = vrot.lane.b32.xlu0 %v1302, 32
  %v1304 = vpop.permute.xlu0 %1303
  %v1306 = vsel %vm84, %v1304, 0
  %1308 = vmatprep.subr.bf16.mxu0 0
  %1309 = vmatpush1.bf16.msra.mxu0 %v80
  %1310 = vmatprep.subr.bf16.mxu0 0
  %1311 = vmatpush1.bf16.msra.mxu0 %v81
  %1312 = vmatprep.subr.bf16.mxu0 0
  %1313 = vmatpush1.bf16.msra.mxu0 0
  %1314 = vmatprep.subr.bf16.mxu0 0
  %1315 = vmatpush1.bf16.msra.mxu0 0
  %1316 = vmatprep.subr.bf16.mxu0 0
  %1317 = vmatpush1.bf16.msra.mxu0 0
  %1318 = vmatprep.subr.bf16.mxu0 0
  %1319 = vmatpush1.bf16.msra.mxu0 0
  %1320 = vmatprep.subr.bf16.mxu0 0
  %1321 = vmatpush1.bf16.msra.mxu0 0
  %1322 = vmatprep.subr.bf16.mxu0 0
  %1323 = vmatpush1.bf16.msra.mxu0 0
  %1324 = vmatprep.subr.bf16.mxu0 0
  %1325 = vmatpush1.bf16.msra.mxu0 0
  %1326 = vmatprep.subr.bf16.mxu0 0
  %1327 = vmatpush1.bf16.msra.mxu0 0
  %1328 = vmatprep.subr.bf16.mxu0 0
  %1329 = vmatpush1.bf16.msra.mxu0 0
  %1330 = vmatprep.subr.bf16.mxu0 0
  %1331 = vmatpush1.bf16.msra.mxu0 0
  %1332 = vmatprep.subr.bf16.mxu0 0
  %1333 = vmatpush1.bf16.msra.mxu0 0
  %1334 = vmatprep.subr.bf16.mxu0 0
  %1335 = vmatpush1.bf16.msra.mxu0 0
  %1336 = vmatprep.subr.bf16.mxu0 0
  %1337 = vmatpush1.bf16.msra.mxu0 0
  %1338 = vmatprep.subr.bf16.mxu0 0
  %1339 = vmatpush1.bf16.msra.mxu0 0
  %1340 = vmatprep.mubr.bf16.mxu0 0
  %1341 = vmatmul.mubr.bf16.gmra.mrb[0].mxu0 %v1306
  %v1342 = vpop.f32.mrb[0].mxu0
  %v1343 = vadd.f32 0.0, %v1342
  %v1344 = vpop.f32.mrb[0].mxu0
  %v1345 = vpop.f32.mrb[0].mxu0
  %v1346 = vpop.f32.mrb[0].mxu0
  %1347 = vdwg.mxu0
  %v1349 = vrot.slane %v1343, 1
  %v1352 = vadd.f32 %v1292, %v1343
  %v1353 = vadd.f32 %v1293, %v1349
  %v1354 = vxor.u32 %v1352, 2147483648
  %v1355 = vxor.u32 %v1353, 2147483648
  %v1356 = vmul.f32 %v1354, 1.442695
  %v1357 = vpow.pop %v1356
  %v1358 = vmul.f32 %v1355, 1.442695
  %v1359 = vpow.pop %v1358
  %v1360 = vadd.f32 %v1357, 1.0
  %v1361 = vadd.f32 %v1359, 1.0
  %v1362 = vrcp.pop %v1360
  %v1363 = vmul.f32 1.0, %v1362
  %v1364 = vrcp.pop %v1361
  %v1365 = vmul.f32 1.0, %v1364
  %v1366 = vtanh.pop %v1352
  %v1367 = vtanh.pop %v1353
  %v1368 = vmul.f32 %v1363, %v1148
  %v1369 = vmul.f32 %v1365, %v1149
  %1372 = vrot.lane.b32.xlu0 %v1366, 64
  %v1373 = vpop.permute.xlu0 %1372
  %1374 = vrot.lane.b32.xlu0 %v1367, 64
  %v1375 = vpop.permute.xlu0 %1374
  %v1378 = vmul.f32 %v1363, %v1373
  %v1379 = vmul.f32 %v1365, %v1375
  %1382 = vrot.lane.b32.xlu0 %v1378, 32
  %v1383 = vpop.permute.xlu0 %1382
  %1384 = vrot.lane.b32.xlu0 %v1379, 32
  %v1385 = vpop.permute.xlu0 %1384
  %v1388 = vadd.f32 %v1368, %v1383
  %v1389 = vadd.f32 %v1369, %v1385
  %v1390 = vtanh.pop %v1388
  %v1391 = vtanh.pop %v1389
  %1394 = vrot.lane.b32.xlu0 %v1390, 64
  %v1395 = vpop.permute.xlu0 %1394
  %1396 = vrot.lane.b32.xlu0 %v1391, 64
  %v1397 = vpop.permute.xlu0 %1396
  %v1400 = vmul.f32 %v1363, %v1395
  %v1401 = vmul.f32 %v1365, %v1397
  %1404 = vrot.lane.b32.xlu0 %v1400, 32
  %v1405 = vpop.permute.xlu0 %1404
  %1406 = vrot.lane.b32.xlu0 %v1401, 32
  %v1407 = vpop.permute.xlu0 %1406
  %1410 = vst.msk [vmem:[%s4 + $0x5] sm:$0x1] %vm198, %v1405
  %1411 = vst.msk [vmem:[%s4 + $0xd] sm:$0x1] %vm198, %v1407
  %v1412 = vld [vmem:[%s39 + $0x2] sm:$0x1]
  %v1413 = vld [vmem:[%s39 + $0xa] sm:$0x1]
  %v1414 = vpack.c.bf16 %v1280, %v1280
  %v1415 = vpack.c.bf16 %v1281, %v1281
  %v1418 = vunpack.c.l.b16 %v1414
  %v1419 = vunpack.c.l.b16 %v1415
  %v1420 = vrot.slane %v1419, 7
  %v1421 = vsel %vm340, %v1420, %v1418
  %v1422 = vpack.c.b16 %v1421, %v1421
  %1423 = vrot.lane.b32.xlu0 %v1422, 32
  %v1424 = vpop.permute.xlu0 %1423
  %v1426 = vsel %vm84, %v1424, 0
  %1428 = vmatprep.subr.bf16.mxu0 0
  %1429 = vmatpush1.bf16.msra.mxu0 %v212
  %1430 = vmatprep.subr.bf16.mxu0 0
  %1431 = vmatpush1.bf16.msra.mxu0 %v213
  %1432 = vmatprep.subr.bf16.mxu0 0
  %1433 = vmatpush1.bf16.msra.mxu0 0
  %1434 = vmatprep.subr.bf16.mxu0 0
  %1435 = vmatpush1.bf16.msra.mxu0 0
  %1436 = vmatprep.subr.bf16.mxu0 0
  %1437 = vmatpush1.bf16.msra.mxu0 0
  %1438 = vmatprep.subr.bf16.mxu0 0
  %1439 = vmatpush1.bf16.msra.mxu0 0
  %1440 = vmatprep.subr.bf16.mxu0 0
  %1441 = vmatpush1.bf16.msra.mxu0 0
  %1442 = vmatprep.subr.bf16.mxu0 0
  %1443 = vmatpush1.bf16.msra.mxu0 0
  %1444 = vmatprep.subr.bf16.mxu0 0
  %1445 = vmatpush1.bf16.msra.mxu0 0
  %1446 = vmatprep.subr.bf16.mxu0 0
  %1447 = vmatpush1.bf16.msra.mxu0 0
  %1448 = vmatprep.subr.bf16.mxu0 0
  %1449 = vmatpush1.bf16.msra.mxu0 0
  %1450 = vmatprep.subr.bf16.mxu0 0
  %1451 = vmatpush1.bf16.msra.mxu0 0
  %1452 = vmatprep.subr.bf16.mxu0 0
  %1453 = vmatpush1.bf16.msra.mxu0 0
  %1454 = vmatprep.subr.bf16.mxu0 0
  %1455 = vmatpush1.bf16.msra.mxu0 0
  %1456 = vmatprep.subr.bf16.mxu0 0
  %1457 = vmatpush1.bf16.msra.mxu0 0
  %1458 = vmatprep.subr.bf16.mxu0 0
  %1459 = vmatpush1.bf16.msra.mxu0 0
  %1460 = vmatprep.mubr.bf16.mxu0 0
  %1461 = vmatmul.mubr.bf16.gmra.mrb[0].mxu0 %v1426
  %v1462 = vpop.f32.mrb[0].mxu0
  %v1463 = vadd.f32 0.0, %v1462
  %v1464 = vpop.f32.mrb[0].mxu0
  %v1465 = vpop.f32.mrb[0].mxu0
  %v1466 = vpop.f32.mrb[0].mxu0
  %1467 = vdwg.mxu0
  %v1469 = vrot.slane %v1463, 1
  %v1472 = vadd.f32 %v1412, %v1463
  %v1473 = vadd.f32 %v1413, %v1469
  %v1474 = vxor.u32 %v1472, 2147483648
  %v1475 = vxor.u32 %v1473, 2147483648
  %v1476 = vmul.f32 %v1474, 1.442695
  %v1477 = vpow.pop %v1476
  %v1478 = vmul.f32 %v1475, 1.442695
  %v1479 = vpow.pop %v1478
  %v1480 = vadd.f32 %v1477, 1.0
  %v1481 = vadd.f32 %v1479, 1.0
  %v1482 = vrcp.pop %v1480
  %v1483 = vmul.f32 1.0, %v1482
  %v1484 = vrcp.pop %v1481
  %v1485 = vmul.f32 1.0, %v1484
  %v1486 = vtanh.pop %v1472
  %v1487 = vtanh.pop %v1473
  %v1488 = vmul.f32 %v1483, %v1268
  %v1489 = vmul.f32 %v1485, %v1269
  %1492 = vrot.lane.b32.xlu0 %v1486, 64
  %v1493 = vpop.permute.xlu0 %1492
  %1494 = vrot.lane.b32.xlu0 %v1487, 64
  %v1495 = vpop.permute.xlu0 %1494
  %v1498 = vmul.f32 %v1483, %v1493
  %v1499 = vmul.f32 %v1485, %v1495
  %1502 = vrot.lane.b32.xlu0 %v1498, 32
  %v1503 = vpop.permute.xlu0 %1502
  %1504 = vrot.lane.b32.xlu0 %v1499, 32
  %v1505 = vpop.permute.xlu0 %1504
  %v1508 = vadd.f32 %v1488, %v1503
  %v1509 = vadd.f32 %v1489, %v1505
  %v1510 = vtanh.pop %v1508
  %v1511 = vtanh.pop %v1509
  %1514 = vrot.lane.b32.xlu0 %v1510, 64
  %v1515 = vpop.permute.xlu0 %1514
  %1516 = vrot.lane.b32.xlu0 %v1511, 64
  %v1517 = vpop.permute.xlu0 %1516
  %v1520 = vmul.f32 %v1483, %v1515
  %v1521 = vmul.f32 %v1485, %v1517
  %1524 = vrot.lane.b32.xlu0 %v1520, 32
  %v1525 = vpop.permute.xlu0 %1524
  %1526 = vrot.lane.b32.xlu0 %v1521, 32
  %v1527 = vpop.permute.xlu0 %1526
  %1530 = vst.msk [vmem:[%s45 + $0x2] sm:$0x1] %vm198, %v1525
  %1531 = vst.msk [vmem:[%s45 + $0xa] sm:$0x1] %vm198, %v1527
  %v1532 = vld [vmem:[%s0 + $0x6] sm:$0x1]
  %v1533 = vld [vmem:[%s0 + $0xe] sm:$0x1]
  %v1534 = vpack.c.bf16 %v1400, %v1400
  %v1535 = vpack.c.bf16 %v1401, %v1401
  %v1538 = vunpack.c.l.b16 %v1534
  %v1539 = vunpack.c.l.b16 %v1535
  %v1540 = vrot.slane %v1539, 7
  %v1541 = vsel %vm340, %v1540, %v1538
  %v1542 = vpack.c.b16 %v1541, %v1541
  %1543 = vrot.lane.b32.xlu0 %v1542, 32
  %v1544 = vpop.permute.xlu0 %1543
  %v1546 = vsel %vm84, %v1544, 0
  %1548 = vmatprep.subr.bf16.mxu0 0
  %1549 = vmatpush1.bf16.msra.mxu0 %v80
  %1550 = vmatprep.subr.bf16.mxu0 0
  %1551 = vmatpush1.bf16.msra.mxu0 %v81
  %1552 = vmatprep.subr.bf16.mxu0 0
  %1553 = vmatpush1.bf16.msra.mxu0 0
  %1554 = vmatprep.subr.bf16.mxu0 0
  %1555 = vmatpush1.bf16.msra.mxu0 0
  %1556 = vmatprep.subr.bf16.mxu0 0
  %1557 = vmatpush1.bf16.msra.mxu0 0
  %1558 = vmatprep.subr.bf16.mxu0 0
  %1559 = vmatpush1.bf16.msra.mxu0 0
  %1560 = vmatprep.subr.bf16.mxu0 0
  %1561 = vmatpush1.bf16.msra.mxu0 0
  %1562 = vmatprep.subr.bf16.mxu0 0
  %1563 = vmatpush1.bf16.msra.mxu0 0
  %1564 = vmatprep.subr.bf16.mxu0 0
  %1565 = vmatpush1.bf16.msra.mxu0 0
  %1566 = vmatprep.subr.bf16.mxu0 0
  %1567 = vmatpush1.bf16.msra.mxu0 0
  %1568 = vmatprep.subr.bf16.mxu0 0
  %1569 = vmatpush1.bf16.msra.mxu0 0
  %1570 = vmatprep.subr.bf16.mxu0 0
  %1571 = vmatpush1.bf16.msra.mxu0 0
  %1572 = vmatprep.subr.bf16.mxu0 0
  %1573 = vmatpush1.bf16.msra.mxu0 0
  %1574 = vmatprep.subr.bf16.mxu0 0
  %1575 = vmatpush1.bf16.msra.mxu0 0
  %1576 = vmatprep.subr.bf16.mxu0 0
  %1577 = vmatpush1.bf16.msra.mxu0 0
  %1578 = vmatprep.subr.bf16.mxu0 0
  %1579 = vmatpush1.bf16.msra.mxu0 0
  %1580 = vmatprep.mubr.bf16.mxu0 0
  %1581 = vmatmul.mubr.bf16.gmra.mrb[0].mxu0 %v1546
  %v1582 = vpop.f32.mrb[0].mxu0
  %v1583 = vadd.f32 0.0, %v1582
  %v1584 = vpop.f32.mrb[0].mxu0
  %v1585 = vpop.f32.mrb[0].mxu0
  %v1586 = vpop.f32.mrb[0].mxu0
  %1587 = vdwg.mxu0
  %v1589 = vrot.slane %v1583, 1
  %v1592 = vadd.f32 %v1532, %v1583
  %v1593 = vadd.f32 %v1533, %v1589
  %v1594 = vxor.u32 %v1592, 2147483648
  %v1595 = vxor.u32 %v1593, 2147483648
  %v1596 = vmul.f32 %v1594, 1.442695
  %v1597 = vpow.pop %v1596
  %v1598 = vmul.f32 %v1595, 1.442695
  %v1599 = vpow.pop %v1598
  %v1600 = vadd.f32 %v1597, 1.0
  %v1601 = vadd.f32 %v1599, 1.0
  %v1602 = vrcp.pop %v1600
  %v1603 = vmul.f32 1.0, %v1602
  %v1604 = vrcp.pop %v1601
  %v1605 = vmul.f32 1.0, %v1604
  %v1606 = vtanh.pop %v1592
  %v1607 = vtanh.pop %v1593
  %v1608 = vmul.f32 %v1603, %v1388
  %v1609 = vmul.f32 %v1605, %v1389
  %1612 = vrot.lane.b32.xlu0 %v1606, 64
  %v1613 = vpop.permute.xlu0 %1612
  %1614 = vrot.lane.b32.xlu0 %v1607, 64
  %v1615 = vpop.permute.xlu0 %1614
  %v1618 = vmul.f32 %v1603, %v1613
  %v1619 = vmul.f32 %v1605, %v1615
  %1622 = vrot.lane.b32.xlu0 %v1618, 32
  %v1623 = vpop.permute.xlu0 %1622
  %1624 = vrot.lane.b32.xlu0 %v1619, 32
  %v1625 = vpop.permute.xlu0 %1624
  %v1628 = vadd.f32 %v1608, %v1623
  %v1629 = vadd.f32 %v1609, %v1625
  %v1630 = vtanh.pop %v1628
  %v1631 = vtanh.pop %v1629
  %1634 = vrot.lane.b32.xlu0 %v1630, 64
  %v1635 = vpop.permute.xlu0 %1634
  %1636 = vrot.lane.b32.xlu0 %v1631, 64
  %v1637 = vpop.permute.xlu0 %1636
  %v1640 = vmul.f32 %v1603, %v1635
  %v1641 = vmul.f32 %v1605, %v1637
  %1644 = vrot.lane.b32.xlu0 %v1640, 32
  %v1645 = vpop.permute.xlu0 %1644
  %1646 = vrot.lane.b32.xlu0 %v1641, 32
  %v1647 = vpop.permute.xlu0 %1646
  %1650 = vst.msk [vmem:[%s4 + $0x6] sm:$0x1] %vm198, %v1645
  %1651 = vst.msk [vmem:[%s4 + $0xe] sm:$0x1] %vm198, %v1647
  %v1652 = vld [vmem:[%s39 + $0x1] sm:$0x1]
  %v1653 = vld [vmem:[%s39 + $0x9] sm:$0x1]
  %v1654 = vpack.c.bf16 %v1520, %v1520
  %v1655 = vpack.c.bf16 %v1521, %v1521
  %v1658 = vunpack.c.l.b16 %v1654
  %v1659 = vunpack.c.l.b16 %v1655
  %v1660 = vrot.slane %v1659, 7
  %v1661 = vsel %vm340, %v1660, %v1658
  %v1662 = vpack.c.b16 %v1661, %v1661
  %1663 = vrot.lane.b32.xlu0 %v1662, 32
  %v1664 = vpop.permute.xlu0 %1663
  %v1666 = vsel %vm84, %v1664, 0
  %1668 = vmatprep.subr.bf16.mxu0 0
  %1669 = vmatpush1.bf16.msra.mxu0 %v212
  %1670 = vmatprep.subr.bf16.mxu0 0
  %1671 = vmatpush1.bf16.msra.mxu0 %v213
  %1672 = vmatprep.subr.bf16.mxu0 0
  %1673 = vmatpush1.bf16.msra.mxu0 0
  %1674 = vmatprep.subr.bf16.mxu0 0
  %1675 = vmatpush1.bf16.msra.mxu0 0
  %1676 = vmatprep.subr.bf16.mxu0 0
  %1677 = vmatpush1.bf16.msra.mxu0 0
  %1678 = vmatprep.subr.bf16.mxu0 0
  %1679 = vmatpush1.bf16.msra.mxu0 0
  %1680 = vmatprep.subr.bf16.mxu0 0
  %1681 = vmatpush1.bf16.msra.mxu0 0
  %1682 = vmatprep.subr.bf16.mxu0 0
  %1683 = vmatpush1.bf16.msra.mxu0 0
  %1684 = vmatprep.subr.bf16.mxu0 0
  %1685 = vmatpush1.bf16.msra.mxu0 0
  %1686 = vmatprep.subr.bf16.mxu0 0
  %1687 = vmatpush1.bf16.msra.mxu0 0
  %1688 = vmatprep.subr.bf16.mxu0 0
  %1689 = vmatpush1.bf16.msra.mxu0 0
  %1690 = vmatprep.subr.bf16.mxu0 0
  %1691 = vmatpush1.bf16.msra.mxu0 0
  %1692 = vmatprep.subr.bf16.mxu0 0
  %1693 = vmatpush1.bf16.msra.mxu0 0
  %1694 = vmatprep.subr.bf16.mxu0 0
  %1695 = vmatpush1.bf16.msra.mxu0 0
  %1696 = vmatprep.subr.bf16.mxu0 0
  %1697 = vmatpush1.bf16.msra.mxu0 0
  %1698 = vmatprep.subr.bf16.mxu0 0
  %1699 = vmatpush1.bf16.msra.mxu0 0
  %1700 = vmatprep.mubr.bf16.mxu0 0
  %1701 = vmatmul.mubr.bf16.gmra.mrb[0].mxu0 %v1666
  %v1702 = vpop.f32.mrb[0].mxu0
  %v1703 = vadd.f32 0.0, %v1702
  %v1704 = vpop.f32.mrb[0].mxu0
  %v1705 = vpop.f32.mrb[0].mxu0
  %v1706 = vpop.f32.mrb[0].mxu0
  %1707 = vdwg.mxu0
  %v1709 = vrot.slane %v1703, 1
  %v1712 = vadd.f32 %v1652, %v1703
  %v1713 = vadd.f32 %v1653, %v1709
  %v1714 = vxor.u32 %v1712, 2147483648
  %v1715 = vxor.u32 %v1713, 2147483648
  %v1716 = vmul.f32 %v1714, 1.442695
  %v1717 = vpow.pop %v1716
  %v1718 = vmul.f32 %v1715, 1.442695
  %v1719 = vpow.pop %v1718
  %v1720 = vadd.f32 %v1717, 1.0
  %v1721 = vadd.f32 %v1719, 1.0
  %v1722 = vrcp.pop %v1720
  %v1723 = vmul.f32 1.0, %v1722
  %v1724 = vrcp.pop %v1721
  %v1725 = vmul.f32 1.0, %v1724
  %v1726 = vtanh.pop %v1712
  %v1727 = vtanh.pop %v1713
  %v1728 = vmul.f32 %v1723, %v1508
  %v1729 = vmul.f32 %v1725, %v1509
  %1732 = vrot.lane.b32.xlu0 %v1726, 64
  %v1733 = vpop.permute.xlu0 %1732
  %1734 = vrot.lane.b32.xlu0 %v1727, 64
  %v1735 = vpop.permute.xlu0 %1734
  %v1738 = vmul.f32 %v1723, %v1733
  %v1739 = vmul.f32 %v1725, %v1735
  %1742 = vrot.lane.b32.xlu0 %v1738, 32
  %v1743 = vpop.permute.xlu0 %1742
  %1744 = vrot.lane.b32.xlu0 %v1739, 32
  %v1745 = vpop.permute.xlu0 %1744
  %v1748 = vadd.f32 %v1728, %v1743
  %v1749 = vadd.f32 %v1729, %v1745
  %v1750 = vtanh.pop %v1748
  %v1751 = vtanh.pop %v1749
  %1754 = vrot.lane.b32.xlu0 %v1750, 64
  %v1755 = vpop.permute.xlu0 %1754
  %1756 = vrot.lane.b32.xlu0 %v1751, 64
  %v1757 = vpop.permute.xlu0 %1756
  %v1760 = vmul.f32 %v1723, %v1755
  %v1761 = vmul.f32 %v1725, %v1757
  %1764 = vrot.lane.b32.xlu0 %v1760, 32
  %v1765 = vpop.permute.xlu0 %1764
  %1766 = vrot.lane.b32.xlu0 %v1761, 32
  %v1767 = vpop.permute.xlu0 %1766
  %1770 = vst.msk [vmem:[%s45 + $0x1] sm:$0x1] %vm198, %v1765
  %1771 = vst.msk [vmem:[%s45 + $0x9] sm:$0x1] %vm198, %v1767
  %v1772 = vld [vmem:[%s0 + $0x7] sm:$0x1]
  %v1773 = vld [vmem:[%s0 + $0xf] sm:$0x1]
  %v1774 = vpack.c.bf16 %v1640, %v1640
  %v1775 = vpack.c.bf16 %v1641, %v1641
  %v1778 = vunpack.c.l.b16 %v1774
  %v1779 = vunpack.c.l.b16 %v1775
  %v1780 = vrot.slane %v1779, 7
  %v1781 = vsel %vm340, %v1780, %v1778
  %v1782 = vpack.c.b16 %v1781, %v1781
  %1783 = vrot.lane.b32.xlu0 %v1782, 32
  %v1784 = vpop.permute.xlu0 %1783
  %v1786 = vsel %vm84, %v1784, 0
  %1788 = vmatprep.subr.bf16.mxu0 0
  %1789 = vmatpush1.bf16.msra.mxu0 %v80
  %1790 = vmatprep.subr.bf16.mxu0 0
  %1791 = vmatpush1.bf16.msra.mxu0 %v81
  %1792 = vmatprep.subr.bf16.mxu0 0
  %1793 = vmatpush1.bf16.msra.mxu0 0
  %1794 = vmatprep.subr.bf16.mxu0 0
  %1795 = vmatpush1.bf16.msra.mxu0 0
  %1796 = vmatprep.subr.bf16.mxu0 0
  %1797 = vmatpush1.bf16.msra.mxu0 0
  %1798 = vmatprep.subr.bf16.mxu0 0
  %1799 = vmatpush1.bf16.msra.mxu0 0
  %1800 = vmatprep.subr.bf16.mxu0 0
  %1801 = vmatpush1.bf16.msra.mxu0 0
  %1802 = vmatprep.subr.bf16.mxu0 0
  %1803 = vmatpush1.bf16.msra.mxu0 0
  %1804 = vmatprep.subr.bf16.mxu0 0
  %1805 = vmatpush1.bf16.msra.mxu0 0
  %1806 = vmatprep.subr.bf16.mxu0 0
  %1807 = vmatpush1.bf16.msra.mxu0 0
  %1808 = vmatprep.subr.bf16.mxu0 0
  %1809 = vmatpush1.bf16.msra.mxu0 0
  %1810 = vmatprep.subr.bf16.mxu0 0
  %1811 = vmatpush1.bf16.msra.mxu0 0
  %1812 = vmatprep.subr.bf16.mxu0 0
  %1813 = vmatpush1.bf16.msra.mxu0 0
  %1814 = vmatprep.subr.bf16.mxu0 0
  %1815 = vmatpush1.bf16.msra.mxu0 0
  %1816 = vmatprep.subr.bf16.mxu0 0
  %1817 = vmatpush1.bf16.msra.mxu0 0
  %1818 = vmatprep.subr.bf16.mxu0 0
  %1819 = vmatpush1.bf16.msra.mxu0 0
  %1820 = vmatprep.mubr.bf16.mxu0 0
  %1821 = vmatmul.mubr.bf16.gmra.mrb[0].mxu0 %v1786
  %v1822 = vpop.f32.mrb[0].mxu0
  %v1823 = vadd.f32 0.0, %v1822
  %v1824 = vpop.f32.mrb[0].mxu0
  %v1825 = vpop.f32.mrb[0].mxu0
  %v1826 = vpop.f32.mrb[0].mxu0
  %1827 = vdwg.mxu0
  %v1829 = vrot.slane %v1823, 1
  %v1832 = vadd.f32 %v1772, %v1823
  %v1833 = vadd.f32 %v1773, %v1829
  %v1834 = vxor.u32 %v1832, 2147483648
  %v1835 = vxor.u32 %v1833, 2147483648
  %v1836 = vmul.f32 %v1834, 1.442695
  %v1837 = vpow.pop %v1836
  %v1838 = vmul.f32 %v1835, 1.442695
  %v1839 = vpow.pop %v1838
  %v1840 = vadd.f32 %v1837, 1.0
  %v1841 = vadd.f32 %v1839, 1.0
  %v1842 = vrcp.pop %v1840
  %v1843 = vmul.f32 1.0, %v1842
  %v1844 = vrcp.pop %v1841
  %v1845 = vmul.f32 1.0, %v1844
  %v1846 = vtanh.pop %v1832
  %v1847 = vtanh.pop %v1833
  %v1848 = vmul.f32 %v1843, %v1628
  %v1849 = vmul.f32 %v1845, %v1629
  %1852 = vrot.lane.b32.xlu0 %v1846, 64
  %v1853 = vpop.permute.xlu0 %1852
  %1854 = vrot.lane.b32.xlu0 %v1847, 64
  %v1855 = vpop.permute.xlu0 %1854
  %v1858 = vmul.f32 %v1843, %v1853
  %v1859 = vmul.f32 %v1845, %v1855
  %1862 = vrot.lane.b32.xlu0 %v1858, 32
  %v1863 = vpop.permute.xlu0 %1862
  %1864 = vrot.lane.b32.xlu0 %v1859, 32
  %v1865 = vpop.permute.xlu0 %1864
  %v1868 = vadd.f32 %v1848, %v1863
  %v1869 = vadd.f32 %v1849, %v1865
  %v1870 = vtanh.pop %v1868
  %v1871 = vtanh.pop %v1869
  %1874 = vrot.lane.b32.xlu0 %v1870, 64
  %v1875 = vpop.permute.xlu0 %1874
  %1876 = vrot.lane.b32.xlu0 %v1871, 64
  %v1877 = vpop.permute.xlu0 %1876
  %v1880 = vmul.f32 %v1843, %v1875
  %v1881 = vmul.f32 %v1845, %v1877
  %1884 = vrot.lane.b32.xlu0 %v1880, 32
  %v1885 = vpop.permute.xlu0 %1884
  %1886 = vrot.lane.b32.xlu0 %v1881, 32
  %v1887 = vpop.permute.xlu0 %1886
  %1890 = vst.msk [vmem:[%s4 + $0x7] sm:$0x1] %vm198, %v1885
  %1891 = vst.msk [vmem:[%s4 + $0xf] sm:$0x1] %vm198, %v1887
  %v1892 = vld [vmem:[%s39] sm:$0x1]
  %v1893 = vld [vmem:[%s39 + $0x8] sm:$0x1]
  %v1894 = vpack.c.bf16 %v1760, %v1760
  %v1895 = vpack.c.bf16 %v1761, %v1761
  %v1898 = vunpack.c.l.b16 %v1894
  %v1899 = vunpack.c.l.b16 %v1895
  %v1900 = vrot.slane %v1899, 7
  %v1901 = vsel %vm340, %v1900, %v1898
  %v1902 = vpack.c.b16 %v1901, %v1901
  %1903 = vrot.lane.b32.xlu0 %v1902, 32
  %v1904 = vpop.permute.xlu0 %1903
  %v1906 = vsel %vm84, %v1904, 0
  %1908 = vmatprep.subr.bf16.mxu0 0
  %1909 = vmatpush1.bf16.msra.mxu0 %v212
  %1910 = vmatprep.subr.bf16.mxu0 0
  %1911 = vmatpush1.bf16.msra.mxu0 %v213
  %1912 = vmatprep.subr.bf16.mxu0 0
  %1913 = vmatpush1.bf16.msra.mxu0 0
  %1914 = vmatprep.subr.bf16.mxu0 0
  %1915 = vmatpush1.bf16.msra.mxu0 0
  %1916 = vmatprep.subr.bf16.mxu0 0
  %1917 = vmatpush1.bf16.msra.mxu0 0
  %1918 = vmatprep.subr.bf16.mxu0 0
  %1919 = vmatpush1.bf16.msra.mxu0 0
  %1920 = vmatprep.subr.bf16.mxu0 0
  %1921 = vmatpush1.bf16.msra.mxu0 0
  %1922 = vmatprep.subr.bf16.mxu0 0
  %1923 = vmatpush1.bf16.msra.mxu0 0
  %1924 = vmatprep.subr.bf16.mxu0 0
  %1925 = vmatpush1.bf16.msra.mxu0 0
  %1926 = vmatprep.subr.bf16.mxu0 0
  %1927 = vmatpush1.bf16.msra.mxu0 0
  %1928 = vmatprep.subr.bf16.mxu0 0
  %1929 = vmatpush1.bf16.msra.mxu0 0
  %1930 = vmatprep.subr.bf16.mxu0 0
  %1931 = vmatpush1.bf16.msra.mxu0 0
  %1932 = vmatprep.subr.bf16.mxu0 0
  %1933 = vmatpush1.bf16.msra.mxu0 0
  %1934 = vmatprep.subr.bf16.mxu0 0
  %1935 = vmatpush1.bf16.msra.mxu0 0
  %1936 = vmatprep.subr.bf16.mxu0 0
  %1937 = vmatpush1.bf16.msra.mxu0 0
  %1938 = vmatprep.subr.bf16.mxu0 0
  %1939 = vmatpush1.bf16.msra.mxu0 0
  %1940 = vmatprep.mubr.bf16.mxu0 0
  %1941 = vmatmul.mubr.bf16.gmra.mrb[0].mxu0 %v1906
  %v1942 = vpop.f32.mrb[0].mxu0
  %v1943 = vadd.f32 0.0, %v1942
  %v1944 = vpop.f32.mrb[0].mxu0
  %v1945 = vpop.f32.mrb[0].mxu0
  %v1946 = vpop.f32.mrb[0].mxu0
  %1947 = vdwg.mxu0
  %v1949 = vrot.slane %v1943, 1
  %v1952 = vadd.f32 %v1892, %v1943
  %v1953 = vadd.f32 %v1893, %v1949
  %v1954 = vxor.u32 %v1952, 2147483648
  %v1955 = vxor.u32 %v1953, 2147483648
  %v1956 = vmul.f32 %v1954, 1.442695
  %v1957 = vpow.pop %v1956
  %v1958 = vmul.f32 %v1955, 1.442695
  %v1959 = vpow.pop %v1958
  %v1960 = vadd.f32 %v1957, 1.0
  %v1961 = vadd.f32 %v1959, 1.0
  %v1962 = vrcp.pop %v1960
  %v1963 = vmul.f32 1.0, %v1962
  %v1964 = vrcp.pop %v1961
  %v1965 = vmul.f32 1.0, %v1964
  %v1966 = vtanh.pop %v1952
  %v1967 = vtanh.pop %v1953
  %v1968 = vmul.f32 %v1963, %v1748
  %v1969 = vmul.f32 %v1965, %v1749
  %1972 = vrot.lane.b32.xlu0 %v1966, 64
  %v1973 = vpop.permute.xlu0 %1972
  %1974 = vrot.lane.b32.xlu0 %v1967, 64
  %v1975 = vpop.permute.xlu0 %1974
  %v1978 = vmul.f32 %v1963, %v1973
  %v1979 = vmul.f32 %v1965, %v1975
  %1982 = vrot.lane.b32.xlu0 %v1978, 32
  %v1983 = vpop.permute.xlu0 %1982
  %1984 = vrot.lane.b32.xlu0 %v1979, 32
  %v1985 = vpop.permute.xlu0 %1984
  %v1988 = vadd.f32 %v1968, %v1983
  %v1989 = vadd.f32 %v1969, %v1985
  %v1990 = vtanh.pop %v1988
  %v1991 = vtanh.pop %v1989
  %1994 = vrot.lane.b32.xlu0 %v1990, 64
  %v1995 = vpop.permute.xlu0 %1994
  %1996 = vrot.lane.b32.xlu0 %v1991, 64
  %v1997 = vpop.permute.xlu0 %1996
  %v2000 = vmul.f32 %v1963, %v1995
  %v2001 = vmul.f32 %v1965, %v1997
  %2004 = vrot.lane.b32.xlu0 %v2000, 32
  %v2005 = vpop.permute.xlu0 %2004
  %2006 = vrot.lane.b32.xlu0 %v2001, 32
  %v2007 = vpop.permute.xlu0 %2006
  %2010 = vst.msk [vmem:[%s45] sm:$0x1] %vm198, %v2005
  %2011 = vst.msk [vmem:[%s45 + $0x8] sm:$0x1] %vm198, %v2007
  %v2012 = vrot.slane %v1881, 7
  %v2013 = vsel %vm340, %v2012, %v1880
  %2014 = vrot.lane.b32.xlu0 %v2013, 32
  %v2015 = vpop.permute.xlu0 %2014
  %vm2017 = vcmask 254976
  %2018 = vst.msk [vmem:[#allocation2] sm:$0x3] %vm2017, %v2015
  %v2021 = vrot.slane %v1869, 7
  %v2022 = vsel %vm340, %v2021, %v1868
  %2023 = vrot.lane.b32.xlu0 %v2022, 96
  %v2024 = vpop.permute.xlu0 %2023
  %2026 = vst.msk [vmem:[#allocation3] sm:$0x3] %vm2017, %v2024
  %v2027 = vrot.slane %v2001, 7
  %v2028 = vsel %vm340, %v2027, %v2000
  %2029 = vrot.lane.b32.xlu0 %v2028, 32
  %v2030 = vpop.permute.xlu0 %2029
  %2032 = vst.msk [vmem:[#allocation4] sm:$0x3] %vm2017, %v2030
  %v2035 = vrot.slane %v1989, 7
  %v2036 = vsel %vm340, %v2035, %v1988
  %2037 = vrot.lane.b32.xlu0 %v2036, 96
  %v2038 = vpop.permute.xlu0 %2037
  %2040 = vst.msk [vmem:[#allocation5] sm:$0x3] %vm2017, %v2038
  %s2041 = ssub.s32 0, 0
  %p2042 = scmp.lt.s32.totalorder %s2041, 0
  %s2043 = scalar_select %p2042, %s2041, 0
  %s2044 = smul.addr %s2043, 8
  %s2045 = scalar_lea.vmem %s5, %s2044
  // Predicated region
  $region22: #{forward.3} parent=0 // pred_check
    _
  $region23: #{forward.3} parent=0 // pred_check_branch
    %2047 = sbr.rel (0) target = $region25
  $region24: #{forward.3} parent=0 // pred_region
    _
  $region25: #{forward.3} parent=0 // pred_fallthru
    _
  // Predicated region
  $region26: #{forward.3} parent=0 // pred_check
    _
  $region27: #{forward.3} parent=0 // pred_check_branch
    %2049 = sbr.rel (0) target = $region29
  $region28: #{forward.3} parent=0 // pred_region
    %s2050 = ssub.s32 0, 0
  $region29: #{forward.3} parent=0 // pred_fallthru
    _
  // Predicated region
  $region30: #{forward.3} parent=0 // pred_check
    _
  $region31: #{forward.3} parent=0 // pred_check_branch
    %2052 = sbr.rel (0) target = $region33
  $region32: #{forward.3} parent=0 // pred_region
    _
  $region33: #{forward.3} parent=0 // pred_fallthru
    _
  // Predicated region
  $region34: #{forward.3} parent=0 // pred_check
    _
  $region35: #{forward.3} parent=0 // pred_check_branch
    %2054 = sbr.rel (0) target = $region37
  $region36: #{forward.3} parent=0 // pred_region
    %s2055 = ssub.s32 0, 0
    %p2056 = scmp.lt.s32.totalorder %s2055, 0
    %s2057 = scalar_select %p2056, %s2055, 0
    %s2058 = smul.addr %s2057, 8
    %s2059 = scalar_lea.vmem %s5, %s2058
  $region37: #{forward.3} parent=0 // pred_fallthru
    _

</llo_original>
